<compile_context>
chip_gen: v7x
topology: tpu7x:2x2x1
jax: 0.10.0
libtpu: 0.0.40
codegen_flags: <defaults>
</compile_context>

<pallas_src>
import functools

import jax
import jax.numpy as jnp
from jax.experimental import pallas as pl
from jax.experimental.pallas import tpu as pltpu


COMPUTE_DTYPE = jnp.bfloat16   # storage / MXU-operand dtype for activations & weights


# ----------------------------------------------------------------------------
# In-kernel helpers
# ----------------------------------------------------------------------------
def _erf(x):
    # Abramowitz & Stegun 7.1.26 polynomial (max abs error ~1.5e-7).
    a = jnp.abs(x)
    t = 1.0 / (1.0 + 0.3275911 * a)
    poly = ((((1.061405429 * t - 1.453152027) * t + 1.421413741) * t
             - 0.284496736) * t + 0.254829592) * t
    y = 1.0 - poly * jnp.exp(-a * a)
    return jnp.where(x < 0, -y, y)


def _gelu_exact(x):
    # matches torch.nn.GELU() (erf-based)
    return 0.5 * x * (1.0 + _erf(x * 0.7071067811865476))


def _pick_tb(T, V, maxpad):
    """Smallest divisor Tb of T with Tb >= maxpad and Tb*V a multiple of 128
    (keeps tiled lane blocks 128-aligned and maximizes grid steps)."""
    for tb in range(1, T + 1):
        if T % tb == 0 and tb >= maxpad and (tb * V) % 128 == 0:
            return tb
    # TODO(synk): for V where Tb*V cannot hit a multiple of 128, fall back to a
    # full-T block (grid (N,1)); a 4-D (N,C,Tb,V) block layout would restore tiling.
    return T


# ----------------------------------------------------------------------------
# Kernel 1: unit_gmlp + all four MultiScale branch 1x1 convs (channel-major)
# ----------------------------------------------------------------------------
def gmlp_branch_kernel(x_ref, w1t_ref, fc_ref, topo_ref, sw_ref,
                       w2t_ref, wbt_ref, brc_ref, p_ref, *, C, heads):
    f32 = jnp.float32
    cdt = p_ref.dtype
    d = C // heads

    x = x_ref[...]                                        # (C, L) f32
    xb = x.astype(cdt)

    # conv1 (leading BN folded into w1t / fc[:,0]) -> GELU -> BN1/BN2
    h = jnp.dot(w1t_ref[...], xb, preferred_element_type=f32)       # (2C, L)
    h = _gelu_exact(h + fc_ref[:, 0:1])
    z = h * fc_ref[:, 1:2] + fc_ref[:, 2:3]
    zb = z.astype(cdt)

    # spatial gating: per head, block-diagonal (over the Tb time slots packed
    # into the lane axis) topology / spatial-weight matmuls.
    ys = []
    for hh in range(heads):
        r = hh * d
        y1 = jnp.dot(zb[r:r + d, :], topo_ref[hh], preferred_element_type=f32)
        at = jnp.dot(zb[C + r:C + r + d, :], sw_ref[hh],
                     preferred_element_type=f32)
        ys.append(y1 + z[r:r + d, :] * at)
    y = jnp.concatenate(ys, axis=0).astype(cdt)           # (C, L)

    # conv2 + gmlp residual (original f32 x) + ReLU
    g = jnp.dot(w2t_ref[...], y, preferred_element_type=f32)
    g = jnp.maximum(g + fc_ref[0:C, 3:4] + x, 0.0)

    # all four branch 1x1 convs + bias + folded BN + ReLU on masked channels
    p = jnp.dot(wbt_ref[...], g.astype(cdt), preferred_element_type=f32)
    p = (p + brc_ref[:, 0:1]) * brc_ref[:, 1:2] + brc_ref[:, 2:3]
    m = brc_ref[:, 3:4]
    p_ref[...] = (m * jnp.maximum(p, 0.0) + (1.0 - m) * p).astype(cdt)


# ----------------------------------------------------------------------------
# Kernel 2: dilated temporal convs + max-pool + plain branch + residual
# unit_tcn + final ReLU (channel-major, halo from masked neighbour T-blocks)
# ----------------------------------------------------------------------------
def msc_tcn_kernel(pm_ref, pc_ref, pn_ref, x_ref, wstk_ref, rwt_ref, c2_ref,
                   o_ref, *, Tb, V, nd, ks, dilations, bc):
    f32 = jnp.float32
    cdt = pc_ref.dtype
    L = Tb * V
    tb = pl.program_id(1)
    last = pl.num_programs(1) - 1

    # neighbour blocks: real data in the interior, zero at the global edges
    # (zero padding is exactly what the reference convs use; the max-pool input
    # is post-ReLU >= 0 so zero is equivalent to -inf padding there).
    prev = pm_ref[...] * (tb > 0).astype(cdt)
    nxt = pn_ref[...] * (tb < last).astype(cdt)
    cat = jnp.concatenate([prev, pc_ref[...], nxt], axis=1)        # (Cout, 3L)

    def win(a, s):                    # length-L lane window at time shift s
        off = (Tb + s) * V
        return a[:, off:off + L]

    pieces = []
    # dilated temporal-conv branches: ONE matmul per branch with K = ks*bc
    for bi, dil in enumerate(dilations):
        pad = (ks + (ks - 1) * (dil - 1) - 1) // 2
        rows = cat[bi * bc:(bi + 1) * bc, :]
        stk = jnp.concatenate([win(rows, k * dil - pad) for k in range(ks)],
                              axis=0)                              # (ks*bc, L)
        pieces.append(jnp.dot(wstk_ref[bi], stk, preferred_element_type=f32))
    # max-pool branch (window t-1, t, t+1)
    mrows = cat[nd * bc:(nd + 1) * bc, :].astype(f32)
    pieces.append(jnp.maximum(jnp.maximum(win(mrows, -1), win(mrows, 0)),
                              win(mrows, 1)))
    # plain 1x1 branch: already final in p
    pieces.append(win(cat[(nd + 1) * bc:, :], 0).astype(f32))

    raw = jnp.concatenate(pieces, axis=0)                          # (Cout, L)
    tcn = (raw + c2_ref[:, 0:1]) * c2_ref[:, 1:2] + c2_ref[:, 2:3]

    # residual unit_tcn (1x1 conv + BN on the original input)
    res = jnp.dot(rwt_ref[...], x_ref[...].astype(cdt),
                  preferred_element_type=f32)
    res = (res + c2_ref[:, 3:4]) * c2_ref[:, 4:5] + c2_ref[:, 5:6]

    o_ref[...] = jnp.maximum(tcn + res, 0.0)


# ----------------------------------------------------------------------------
# Wrapper: full MLP_TCN_unit forward
# ----------------------------------------------------------------------------
def mlp_tcn_unit_pallas(x, P, *, heads=4, ks=5, dilations=(1, 2)):
    # NOTE: implements stride == 1 (the module's default).
    N, C, T, V = x.shape
    Cout = P['r_w'].shape[1]
    nd = len(dilations)
    nb = nd + 2
    bc = Cout // nb
    f32 = jnp.float32
    cdt = COMPUTE_DTYPE

    pads = [(ks + (ks - 1) * (dil - 1) - 1) // 2 for dil in dilations]
    maxpad = max(max(pads), 1)
    Tb = _pick_tb(T, V, maxpad)
    assert T % Tb == 0 and maxpad <= Tb, (T, Tb, maxpad)
    nTb = T // Tb
    L = Tb * V
    grid = (N, nTb)

    # channel-major view (free reshape of NCHW): no transposes anywhere.
    xr = x.reshape(N, C, T * V)

    # ------------------ host-side parameter prep (tiny arrays) ---------------
    # fold the leading BatchNorm into conv1
    w1t = (P['g_w1'] * P['g_bn_sc'][:, None]).T.astype(cdt)         # (2C, C)
    b1f = P['g_b1'] + P['g_bn_sh'] @ P['g_w1']                      # (2C,)
    sc12 = jnp.concatenate([P['g_bn1_sc'], P['g_bn2_sc']])
    sh12 = jnp.concatenate([P['g_bn1_sh'], P['g_bn2_sh']])
    b2p = jnp.concatenate([P['g_b2'], jnp.zeros((C,), f32)])
    fc = jnp.stack([b1f, sc12, sh12, b2p], axis=1).astype(f32)      # (2C, 4)

    # per-head block-diagonal spatial matrices over the (Tb, V) lane axis
    eyeT = jnp.eye(Tb, dtype=f32)

    def block_diag_t(m):   # (heads, V, V) -> (heads, Tb*V, Tb*V) with m^T blocks
        mt = jnp.swapaxes(m, 1, 2)
        return jnp.einsum('ab,hvu->havbu', eyeT, mt).reshape(heads, L, L)

    topo_bd = block_diag_t(P['g_topo']).astype(cdt)
    sw_bd = block_diag_t(P['g_sw']).astype(cdt)

    w2t = P['g_w2'].T.astype(cdt)                                   # (C, C)
    wbt = jnp.concatenate([P[f'b{bi}_w'] for bi in range(nb)],
                          axis=1).T.astype(cdt)                     # (Cout, C)
    bb = jnp.concatenate([P[f'b{bi}_b'] for bi in range(nb)])
    scb = jnp.concatenate([P[f'b{bi}_bn_sc'] for bi in range(nb)])
    shb = jnp.concatenate([P[f'b{bi}_bn_sh'] for bi in range(nb)])
    rmask = jnp.concatenate([jnp.ones(((nd + 1) * bc,), f32),
                             jnp.zeros((bc,), f32)])
    brc = jnp.stack([bb, scb, shb, rmask], axis=1).astype(f32)      # (Cout, 4)

    cparams = pltpu.CompilerParams(
        dimension_semantics=("parallel", "parallel"),
        vmem_limit_bytes=48 * 1024 * 1024)
    cmap2 = lambda n, t: (0, 0)
    cmap3 = lambda n, t: (0, 0, 0)
    bmap = lambda n, t: (n, 0, t)

    # -------- kernel 1: unit_gmlp + all branch 1x1 convs (lane-dense) --------
    p = pl.pallas_call(
        functools.partial(gmlp_branch_kernel, C=C, heads=heads),
        grid=grid,
        in_specs=[pl.BlockSpec((None, C, L), bmap),          # x block
                  pl.BlockSpec((2 * C, C), cmap2),           # folded conv1 W^T
                  pl.BlockSpec((2 * C, 4), cmap2),           # [b1f, sc12, sh12, b2]
                  pl.BlockSpec((heads, L, L), cmap3),        # block-diag topo^T
                  pl.BlockSpec((heads, L, L), cmap3),        # block-diag sw^T
                  pl.BlockSpec((C, C), cmap2),               # conv2 W^T
                  pl.BlockSpec((Cout, C), cmap2),            # all-branch 1x1 W^T
                  pl.BlockSpec((Cout, 4), cmap2)],           # [bb, scb, shb, relu_mask]
        out_specs=pl.BlockSpec((None, Cout, L), bmap),
        out_shape=jax.ShapeDtypeStruct((N, Cout, T * V), cdt),
        compiler_params=cparams,
    )(xr, w1t, fc, topo_bd, sw_bd, w2t, wbt, brc)

    # ---- kernel 2: temporal convs + maxpool + residual unit_tcn + ReLU ------
    wstk = jnp.stack([jnp.concatenate([P[f'b{bi}_tw'][k].T for k in range(ks)],
                                      axis=1)
                      for bi in range(nd)]).astype(cdt)             # (nd, bc, ks*bc)
    zbc = jnp.zeros((bc,), f32)
    onebc = jnp.ones((bc,), f32)
    tbias = jnp.concatenate([P[f'b{bi}_tb'] for bi in range(nd)] + [zbc, zbc])
    tsc = jnp.concatenate([P[f'b{bi}_tbn_sc'] for bi in range(nd)]
                          + [P['b2_bn2_sc'], onebc])
    tsh = jnp.concatenate([P[f'b{bi}_tbn_sh'] for bi in range(nd)]
                          + [P['b2_bn2_sh'], zbc])
    c2 = jnp.stack([tbias, tsc, tsh, P['r_b'], P['r_bn_sc'], P['r_bn_sh']],
                   axis=1).astype(f32)                              # (Cout, 6)
    rwt = P['r_w'].T.astype(cdt)

    last_tb = nTb - 1
    out = pl.pallas_call(
        functools.partial(msc_tcn_kernel, Tb=Tb, V=V, nd=nd, ks=ks,
                          dilations=tuple(dilations), bc=bc),
        grid=grid,
        in_specs=[pl.BlockSpec((None, Cout, L),
                               lambda n, t: (n, 0, jnp.maximum(t - 1, 0))),
                  pl.BlockSpec((None, Cout, L), bmap),
                  pl.BlockSpec((None, Cout, L),
                               lambda n, t: (n, 0, jnp.minimum(t + 1, last_tb))),
                  pl.BlockSpec((None, C, L), bmap),          # x block (residual)
                  pl.BlockSpec((nd, bc, ks * bc), cmap3),    # stacked tap weights
                  pl.BlockSpec((Cout, C), cmap2),            # residual conv W^T
                  pl.BlockSpec((Cout, 6), cmap2)],           # packed epilogue consts
        out_specs=pl.BlockSpec((None, Cout, L), bmap),
        out_shape=jax.ShapeDtypeStruct((N, Cout, T * V), f32),
        compiler_params=cparams,
    )(p, p, p, xr, wstk, rwt, c2)

    return out.reshape(N, Cout, T, V)


# ----------------------------------------------------------------------------
# Deterministic parameter construction (shapes follow the module's __init__)
# ----------------------------------------------------------------------------
def init_params(key, Cin, Cout, V, heads, ks, dilations):
    C = Cin
    bc = Cout // (len(dilations) + 2)
    keys = iter(jax.random.split(key, 128))

    def nk():
        return next(keys)

    def conv_w(cin, cout, k=1):          # stored (cin, cout)
        std = (2.0 / (cout * k)) ** 0.5
        return std * jax.random.normal(nk(), (cin, cout), jnp.float32)

    def conv_b(cout):
        return 0.05 * jax.random.normal(nk(), (cout,), jnp.float32)

    def bn_fold(c):                      # inference-mode BatchNorm folded
        gamma = 1.0 + 0.1 * jax.random.normal(nk(), (c,), jnp.float32)
        beta = 0.1 * jax.random.normal(nk(), (c,), jnp.float32)
        mean = 0.1 * jax.random.normal(nk(), (c,), jnp.float32)
        var = jax.random.uniform(nk(), (c,), jnp.float32, 0.5, 1.5)
        scale = gamma * jax.lax.rsqrt(var + 1e-5)
        return scale, beta - mean * scale

    P = {}
    # unit_gmlp(Cin, Cin, V, heads=4)
    P['g_bn_sc'], P['g_bn_sh'] = bn_fold(C)
    P['g_w1'] = conv_w(C, 2 * C)
    P['g_b1'] = conv_b(2 * C)
    P['g_bn1_sc'], P['g_bn1_sh'] = bn_fold(C)
    P['g_bn2_sc'], P['g_bn2_sh'] = bn_fold(C)
    P['g_topo'] = (jnp.stack([jnp.eye(V, dtype=jnp.float32)] * heads)
                   + 0.05 * jax.random.normal(nk(), (heads, V, V), jnp.float32))
    P['g_sw'] = 0.05 * jax.random.normal(nk(), (heads, V, V), jnp.float32)
    P['g_w2'] = conv_w(C, C)
    P['g_b2'] = conv_b(C)
    # MultiScale_TemporalConv branches
    for bi, _ in enumerate(dilations):
        P[f'b{bi}_w'] = conv_w(C, bc)
        P[f'b{bi}_b'] = conv_b(bc)
        P[f'b{bi}_bn_sc'], P[f'b{bi}_bn_sh'] = bn_fold(bc)
        std = (2.0 / (bc * ks)) ** 0.5
        P[f'b{bi}_tw'] = std * jax.random.normal(nk(), (ks, bc, bc), jnp.float32)
        P[f'b{bi}_tb'] = conv_b(bc)
        P[f'b{bi}_tbn_sc'], P[f'b{bi}_tbn_sh'] = bn_fold(bc)
    P['b2_w'] = conv_w(C, bc)
    P['b2_b'] = conv_b(bc)
    P['b2_bn_sc'], P['b2_bn_sh'] = bn_fold(bc)
    P['b2_bn2_sc'], P['b2_bn2_sh'] = bn_fold(bc)
    P['b3_w'] = conv_w(C, bc)
    P['b3_b'] = conv_b(bc)
    P['b3_bn_sc'], P['b3_bn_sh'] = bn_fold(bc)
    # residual unit_tcn(Cin, Cout, ks=1)
    P['r_w'] = conv_w(C, Cout)
    P['r_b'] = conv_b(Cout)
    P['r_bn_sc'], P['r_bn_sh'] = bn_fold(Cout)
    return P


# ----------------------------------------------------------------------------
# Pure-JAX reference (same params, NCHW, f32) for a sanity check
# ----------------------------------------------------------------------------
def reference_forward(x, P, *, heads, Cout, ks, dilations):
    N, Cin, T, V = x.shape
    C = Cin
    d = C // heads
    bc = Cout // (len(dilations) + 2)

    def bn(a, sc, sh):
        return a * sc[None, :, None, None] + sh[None, :, None, None]

    def pw(a, w, b):
        return jnp.einsum('nctv,co->notv', a, w) + b[None, :, None, None]

    # unit_gmlp
    h = pw(bn(x, P['g_bn_sc'], P['g_bn_sh']), P['g_w1'], P['g_b1'])
    h = jax.nn.gelu(h, approximate=False)
    z1, z2 = h[:, :C], h[:, C:]
    z1 = bn(z1, P['g_bn1_sc'], P['g_bn1_sh']).reshape(N, heads, d, T, V)
    z2 = bn(z2, P['g_bn2_sc'], P['g_bn2_sh']).reshape(N, heads, d, T, V)
    y1 = jnp.einsum('huv,bhdtv->bhdtu', P['g_topo'], z1)
    attn = jnp.einsum('huv,bhdtv->bhdtu', P['g_sw'], z2)
    y = (y1 + z1 * attn).reshape(N, C, T, V)
    g = jnp.maximum(pw(y, P['g_w2'], P['g_b2']) + x, 0.0)

    outs = []
    for bi, dil in enumerate(dilations):
        p = jnp.maximum(bn(pw(g, P[f'b{bi}_w'], P[f'b{bi}_b']),
                           P[f'b{bi}_bn_sc'], P[f'b{bi}_bn_sh']), 0.0)
        pad = (ks + (ks - 1) * (dil - 1) - 1) // 2
        pp = jnp.pad(p, ((0, 0), (0, 0), (pad, pad), (0, 0)))
        tc = sum(jnp.einsum('nctv,co->notv', pp[:, :, k * dil:k * dil + T, :],
                            P[f'b{bi}_tw'][k]) for k in range(ks))
        tc = tc + P[f'b{bi}_tb'][None, :, None, None]
        outs.append(bn(tc, P[f'b{bi}_tbn_sc'], P[f'b{bi}_tbn_sh']))
    p = jnp.maximum(bn(pw(g, P['b2_w'], P['b2_b']),
                       P['b2_bn_sc'], P['b2_bn_sh']), 0.0)
    pp = jnp.pad(p, ((0, 0), (0, 0), (1, 1), (0, 0)),
                 constant_values=-jnp.inf)
    mp = jnp.maximum(jnp.maximum(pp[:, :, 0:T], pp[:, :, 1:T + 1]),
                     pp[:, :, 2:T + 2])
    outs.append(bn(mp, P['b2_bn2_sc'], P['b2_bn2_sh']))
    outs.append(bn(pw(g, P['b3_w'], P['b3_b']), P['b3_bn_sc'], P['b3_bn_sh']))
    tcn = jnp.concatenate(outs, axis=1)

    res = bn(pw(x, P['r_w'], P['r_b']), P['r_bn_sc'], P['r_bn_sh'])
    return jnp.maximum(tcn + res, 0.0)


# ----------------------------------------------------------------------------
if __name__ == "__main__":
    key = jax.random.PRNGKey(0)
    kx, kp = jax.random.split(key)

    N, Cin, Cout, T, V = 2, 8, 16, 16, 16
    heads, ks, dilations = 4, 5, (1, 2)

    x = jax.random.normal(kx, (N, Cin, T, V), jnp.float32)
    P = init_params(kp, Cin, Cout, V, heads, ks, list(dilations))

    fwd = jax.jit(functools.partial(mlp_tcn_unit_pallas, heads=heads, ks=ks,
                                    dilations=dilations))
    out = jax.block_until_ready(fwd(x, P))
    assert out.shape == (N, Cout, T, V)

    ref = jax.block_until_ready(
        reference_forward(x, P, heads=heads, Cout=Cout, ks=ks,
                          dilations=list(dilations)))
    max_err = float(jnp.max(jnp.abs(out - ref)))
    # bf16 activations / MXU operands -> looser tolerance than the f32 reference
    assert jnp.allclose(out, ref, atol=1.5e-1, rtol=5e-2), \
        f"mismatch vs reference, max|diff|={max_err}"

    print("KERNEL_OK")
</pallas_src>

<mosaic_0001>
module attributes {stable_mosaic.version = 11 : i64} {
  func.func @gmlp_branch_kernel(%arg0: i32, %arg1: i32, %arg2: memref<1x8x128xf32, #tpu.memory_space<vmem>>, %arg3: memref<16x8xbf16, #tpu.memory_space<vmem>>, %arg4: memref<16x4xf32, #tpu.memory_space<vmem>>, %arg5: memref<4x128x128xbf16, #tpu.memory_space<vmem>>, %arg6: memref<4x128x128xbf16, #tpu.memory_space<vmem>>, %arg7: memref<8x8xbf16, #tpu.memory_space<vmem>>, %arg8: memref<16x8xbf16, #tpu.memory_space<vmem>>, %arg9: memref<16x4xf32, #tpu.memory_space<vmem>>, %arg10: memref<1x16x128xbf16, #tpu.memory_space<vmem>>) attributes {dimension_semantics = [#tpu.dimension_semantics<parallel>, #tpu.dimension_semantics<parallel>], iteration_bounds = array<i64: 2, 2>, scalar_prefetch = 0 : i64, scratch_operands = 0 : i64, tpu.core_type = #tpu.core_type<tc>, window_params = [{transform_indices = @transform_0, window_bounds = array<i64: 1, 8, 128>}, {pipeline_mode = #tpu.pipeline_mode<synchronous>, transform_indices = @transform_1, window_bounds = array<i64: 16, 8>}, {pipeline_mode = #tpu.pipeline_mode<synchronous>, transform_indices = @transform_2, window_bounds = array<i64: 16, 4>}, {pipeline_mode = #tpu.pipeline_mode<synchronous>, transform_indices = @transform_3, window_bounds = array<i64: 4, 128, 128>}, {pipeline_mode = #tpu.pipeline_mode<synchronous>, transform_indices = @transform_4, window_bounds = array<i64: 4, 128, 128>}, {pipeline_mode = #tpu.pipeline_mode<synchronous>, transform_indices = @transform_5, window_bounds = array<i64: 8, 8>}, {pipeline_mode = #tpu.pipeline_mode<synchronous>, transform_indices = @transform_6, window_bounds = array<i64: 16, 8>}, {pipeline_mode = #tpu.pipeline_mode<synchronous>, transform_indices = @transform_7, window_bounds = array<i64: 16, 4>}, {transform_indices = @transform_8, window_bounds = array<i64: 1, 16, 128>}]} {
    %c0 = arith.constant 0 : index
    %c0_0 = arith.constant 0 : index
    %c0_1 = arith.constant 0 : index
    %0 = vector.load %arg2[%c0, %c0_0, %c0_1] : memref<1x8x128xf32, #tpu.memory_space<vmem>>, vector<1x8x128xf32>
    %1 = vector.shape_cast %0 : vector<1x8x128xf32> to vector<8x128xf32>
    %2 = arith.truncf %1 : vector<8x128xf32> to vector<8x128xbf16>
    %c0_2 = arith.constant 0 : index
    %c0_3 = arith.constant 0 : index
    %3 = vector.load %arg3[%c0_2, %c0_3] : memref<16x8xbf16, #tpu.memory_space<vmem>>, vector<16x8xbf16>
    %cst = arith.constant dense<0.000000e+00> : vector<16x128xf32>
    %4 = tpu.matmul %3, %2, %cst {dimension_numbers = #tpu.dot_dimension_numbers<[1], [0], [0], [1], [0, 0, 1, 1], [], []>} : vector<16x8xbf16>, vector<8x128xbf16>, vector<16x128xf32> -> vector<16x128xf32>
    %c0_4 = arith.constant 0 : index
    %c0_5 = arith.constant 0 : index
    %5 = vector.load %arg4[%c0_4, %c0_5] : memref<16x4xf32, #tpu.memory_space<vmem>>, vector<16x1xf32>
    %6 = vector.broadcast %5 : vector<16x1xf32> to vector<16x128xf32>
    %7 = arith.addf %4, %6 : vector<16x128xf32>
    %cst_6 = arith.constant 5.000000e-01 : f32
    %8 = vector.broadcast %cst_6 : f32 to vector<16x128xf32>
    %9 = arith.mulf %8, %7 : vector<16x128xf32>
    %cst_7 = arith.constant 0.707106769 : f32
    %10 = vector.broadcast %cst_7 : f32 to vector<16x128xf32>
    %11 = arith.mulf %7, %10 : vector<16x128xf32>
    %12 = math.absf %11 : vector<16x128xf32>
    %cst_8 = arith.constant 0.327591091 : f32
    %13 = vector.broadcast %cst_8 : f32 to vector<16x128xf32>
    %14 = arith.mulf %13, %12 : vector<16x128xf32>
    %cst_9 = arith.constant 1.000000e+00 : f32
    %15 = vector.broadcast %cst_9 : f32 to vector<16x128xf32>
    %16 = arith.addf %15, %14 : vector<16x128xf32>
    %cst_10 = arith.constant 1.000000e+00 : f32
    %17 = vector.broadcast %cst_10 : f32 to vector<16x128xf32>
    %18 = arith.divf %17, %16 : vector<16x128xf32>
    %cst_11 = arith.constant 1.06140542 : f32
    %19 = vector.broadcast %cst_11 : f32 to vector<16x128xf32>
    %20 = arith.mulf %19, %18 : vector<16x128xf32>
    %cst_12 = arith.constant 1.45315206 : f32
    %21 = vector.broadcast %cst_12 : f32 to vector<16x128xf32>
    %22 = arith.subf %20, %21 : vector<16x128xf32>
    %23 = arith.mulf %22, %18 : vector<16x128xf32>
    %cst_13 = arith.constant 1.42141378 : f32
    %24 = vector.broadcast %cst_13 : f32 to vector<16x128xf32>
    %25 = arith.addf %23, %24 : vector<16x128xf32>
    %26 = arith.mulf %25, %18 : vector<16x128xf32>
    %cst_14 = arith.constant 0.284496725 : f32
    %27 = vector.broadcast %cst_14 : f32 to vector<16x128xf32>
    %28 = arith.subf %26, %27 : vector<16x128xf32>
    %29 = arith.mulf %28, %18 : vector<16x128xf32>
    %cst_15 = arith.constant 0.254829586 : f32
    %30 = vector.broadcast %cst_15 : f32 to vector<16x128xf32>
    %31 = arith.addf %29, %30 : vector<16x128xf32>
    %32 = arith.mulf %31, %18 : vector<16x128xf32>
    %cst_16 = arith.constant 0.000000e+00 : f32
    %33 = vector.broadcast %cst_16 : f32 to vector<16x128xf32>
    %34 = arith.subf %33, %12 : vector<16x128xf32>
    %35 = arith.mulf %34, %12 : vector<16x128xf32>
    %36 = math.exp %35 : vector<16x128xf32>
    %37 = arith.mulf %32, %36 : vector<16x128xf32>
    %cst_17 = arith.constant 1.000000e+00 : f32
    %38 = vector.broadcast %cst_17 : f32 to vector<16x128xf32>
    %39 = arith.subf %38, %37 : vector<16x128xf32>
    %cst_18 = arith.constant 0.000000e+00 : f32
    %40 = vector.broadcast %cst_18 : f32 to vector<16x128xf32>
    %41 = arith.cmpf olt, %11, %40 : vector<16x128xf32>
    %cst_19 = arith.constant 0.000000e+00 : f32
    %42 = vector.broadcast %cst_19 : f32 to vector<16x128xf32>
    %43 = arith.subf %42, %39 : vector<16x128xf32>
    %44 = arith.select %41, %43, %39 : vector<16x128xi1>, vector<16x128xf32>
    %cst_20 = arith.constant 1.000000e+00 : f32
    %45 = vector.broadcast %cst_20 : f32 to vector<16x128xf32>
    %46 = arith.addf %45, %44 : vector<16x128xf32>
    %47 = arith.mulf %9, %46 : vector<16x128xf32>
    %c0_21 = arith.constant 0 : index
    %c1 = arith.constant 1 : index
    %48 = vector.load %arg4[%c0_21, %c1] : memref<16x4xf32, #tpu.memory_space<vmem>>, vector<16x1xf32>
    %49 = vector.broadcast %48 : vector<16x1xf32> to vector<16x128xf32>
    %50 = arith.mulf %47, %49 : vector<16x128xf32>
    %c0_22 = arith.constant 0 : index
    %c2 = arith.constant 2 : index
    %51 = vector.load %arg4[%c0_22, %c2] : memref<16x4xf32, #tpu.memory_space<vmem>>, vector<16x1xf32>
    %52 = vector.broadcast %51 : vector<16x1xf32> to vector<16x128xf32>
    %53 = arith.addf %50, %52 : vector<16x128xf32>
    %54 = arith.truncf %53 : vector<16x128xf32> to vector<16x128xbf16>
    %55 = vector.extract_strided_slice %54 {offsets = [0, 0], sizes = [2, 128], strides = [1, 1]} : vector<16x128xbf16> to vector<2x128xbf16>
    %c0_23 = arith.constant 0 : index
    %c0_24 = arith.constant 0 : index
    %c0_25 = arith.constant 0 : index
    %56 = vector.load %arg5[%c0_23, %c0_24, %c0_25] : memref<4x128x128xbf16, #tpu.memory_space<vmem>>, vector<1x128x128xbf16>
    %57 = vector.shape_cast %56 : vector<1x128x128xbf16> to vector<128x128xbf16>
    %cst_26 = arith.constant dense<0.000000e+00> : vector<2x128xf32>
    %58 = tpu.matmul %55, %57, %cst_26 {dimension_numbers = #tpu.dot_dimension_numbers<[1], [0], [0], [1], [0, 0, 1, 1], [], []>} : vector<2x128xbf16>, vector<128x128xbf16>, vector<2x128xf32> -> vector<2x128xf32>
    %59 = vector.extract_strided_slice %54 {offsets = [8, 0], sizes = [2, 128], strides = [1, 1]} : vector<16x128xbf16> to vector<2x128xbf16>
    %c0_27 = arith.constant 0 : index
    %c0_28 = arith.constant 0 : index
    %c0_29 = arith.constant 0 : index
    %60 = vector.load %arg6[%c0_27, %c0_28, %c0_29] : memref<4x128x128xbf16, #tpu.memory_space<vmem>>, vector<1x128x128xbf16>
    %61 = vector.shape_cast %60 : vector<1x128x128xbf16> to vector<128x128xbf16>
    %cst_30 = arith.constant dense<0.000000e+00> : vector<2x128xf32>
    %62 = tpu.matmul %59, %61, %cst_30 {dimension_numbers = #tpu.dot_dimension_numbers<[1], [0], [0], [1], [0, 0, 1, 1], [], []>} : vector<2x128xbf16>, vector<128x128xbf16>, vector<2x128xf32> -> vector<2x128xf32>
    %63 = vector.extract_strided_slice %53 {offsets = [0, 0], sizes = [2, 128], strides = [1, 1]} : vector<16x128xf32> to vector<2x128xf32>
    %64 = arith.mulf %63, %62 : vector<2x128xf32>
    %65 = arith.addf %58, %64 : vector<2x128xf32>
    %66 = vector.extract_strided_slice %54 {offsets = [2, 0], sizes = [2, 128], strides = [1, 1]} : vector<16x128xbf16> to vector<2x128xbf16>
    %c1_31 = arith.constant 1 : index
    %c0_32 = arith.constant 0 : index
    %c0_33 = arith.constant 0 : index
    %67 = vector.load %arg5[%c1_31, %c0_32, %c0_33] : memref<4x128x128xbf16, #tpu.memory_space<vmem>>, vector<1x128x128xbf16>
    %68 = vector.shape_cast %67 : vector<1x128x128xbf16> to vector<128x128xbf16>
    %cst_34 = arith.constant dense<0.000000e+00> : vector<2x128xf32>
    %69 = tpu.matmul %66, %68, %cst_34 {dimension_numbers = #tpu.dot_dimension_numbers<[1], [0], [0], [1], [0, 0, 1, 1], [], []>} : vector<2x128xbf16>, vector<128x128xbf16>, vector<2x128xf32> -> vector<2x128xf32>
    %70 = vector.extract_strided_slice %54 {offsets = [10, 0], sizes = [2, 128], strides = [1, 1]} : vector<16x128xbf16> to vector<2x128xbf16>
    %c1_35 = arith.constant 1 : index
    %c0_36 = arith.constant 0 : index
    %c0_37 = arith.constant 0 : index
    %71 = vector.load %arg6[%c1_35, %c0_36, %c0_37] : memref<4x128x128xbf16, #tpu.memory_space<vmem>>, vector<1x128x128xbf16>
    %72 = vector.shape_cast %71 : vector<1x128x128xbf16> to vector<128x128xbf16>
    %cst_38 = arith.constant dense<0.000000e+00> : vector<2x128xf32>
    %73 = tpu.matmul %70, %72, %cst_38 {dimension_numbers = #tpu.dot_dimension_numbers<[1], [0], [0], [1], [0, 0, 1, 1], [], []>} : vector<2x128xbf16>, vector<128x128xbf16>, vector<2x128xf32> -> vector<2x128xf32>
    %74 = vector.extract_strided_slice %53 {offsets = [2, 0], sizes = [2, 128], strides = [1, 1]} : vector<16x128xf32> to vector<2x128xf32>
    %75 = arith.mulf %74, %73 : vector<2x128xf32>
    %76 = arith.addf %69, %75 : vector<2x128xf32>
    %77 = vector.extract_strided_slice %54 {offsets = [4, 0], sizes = [2, 128], strides = [1, 1]} : vector<16x128xbf16> to vector<2x128xbf16>
    %c2_39 = arith.constant 2 : index
    %c0_40 = arith.constant 0 : index
    %c0_41 = arith.constant 0 : index
    %78 = vector.load %arg5[%c2_39, %c0_40, %c0_41] : memref<4x128x128xbf16, #tpu.memory_space<vmem>>, vector<1x128x128xbf16>
    %79 = vector.shape_cast %78 : vector<1x128x128xbf16> to vector<128x128xbf16>
    %cst_42 = arith.constant dense<0.000000e+00> : vector<2x128xf32>
    %80 = tpu.matmul %77, %79, %cst_42 {dimension_numbers = #tpu.dot_dimension_numbers<[1], [0], [0], [1], [0, 0, 1, 1], [], []>} : vector<2x128xbf16>, vector<128x128xbf16>, vector<2x128xf32> -> vector<2x128xf32>
    %81 = vector.extract_strided_slice %54 {offsets = [12, 0], sizes = [2, 128], strides = [1, 1]} : vector<16x128xbf16> to vector<2x128xbf16>
    %c2_43 = arith.constant 2 : index
    %c0_44 = arith.constant 0 : index
    %c0_45 = arith.constant 0 : index
    %82 = vector.load %arg6[%c2_43, %c0_44, %c0_45] : memref<4x128x128xbf16, #tpu.memory_space<vmem>>, vector<1x128x128xbf16>
    %83 = vector.shape_cast %82 : vector<1x128x128xbf16> to vector<128x128xbf16>
    %cst_46 = arith.constant dense<0.000000e+00> : vector<2x128xf32>
    %84 = tpu.matmul %81, %83, %cst_46 {dimension_numbers = #tpu.dot_dimension_numbers<[1], [0], [0], [1], [0, 0, 1, 1], [], []>} : vector<2x128xbf16>, vector<128x128xbf16>, vector<2x128xf32> -> vector<2x128xf32>
    %85 = vector.extract_strided_slice %53 {offsets = [4, 0], sizes = [2, 128], strides = [1, 1]} : vector<16x128xf32> to vector<2x128xf32>
    %86 = arith.mulf %85, %84 : vector<2x128xf32>
    %87 = arith.addf %80, %86 : vector<2x128xf32>
    %88 = vector.extract_strided_slice %54 {offsets = [6, 0], sizes = [2, 128], strides = [1, 1]} : vector<16x128xbf16> to vector<2x128xbf16>
    %c3 = arith.constant 3 : index
    %c0_47 = arith.constant 0 : index
    %c0_48 = arith.constant 0 : index
    %89 = vector.load %arg5[%c3, %c0_47, %c0_48] : memref<4x128x128xbf16, #tpu.memory_space<vmem>>, vector<1x128x128xbf16>
    %90 = vector.shape_cast %89 : vector<1x128x128xbf16> to vector<128x128xbf16>
    %cst_49 = arith.constant dense<0.000000e+00> : vector<2x128xf32>
    %91 = tpu.matmul %88, %90, %cst_49 {dimension_numbers = #tpu.dot_dimension_numbers<[1], [0], [0], [1], [0, 0, 1, 1], [], []>} : vector<2x128xbf16>, vector<128x128xbf16>, vector<2x128xf32> -> vector<2x128xf32>
    %92 = vector.extract_strided_slice %54 {offsets = [14, 0], sizes = [2, 128], strides = [1, 1]} : vector<16x128xbf16> to vector<2x128xbf16>
    %c3_50 = arith.constant 3 : index
    %c0_51 = arith.constant 0 : index
    %c0_52 = arith.constant 0 : index
    %93 = vector.load %arg6[%c3_50, %c0_51, %c0_52] : memref<4x128x128xbf16, #tpu.memory_space<vmem>>, vector<1x128x128xbf16>
    %94 = vector.shape_cast %93 : vector<1x128x128xbf16> to vector<128x128xbf16>
    %cst_53 = arith.constant dense<0.000000e+00> : vector<2x128xf32>
    %95 = tpu.matmul %92, %94, %cst_53 {dimension_numbers = #tpu.dot_dimension_numbers<[1], [0], [0], [1], [0, 0, 1, 1], [], []>} : vector<2x128xbf16>, vector<128x128xbf16>, vector<2x128xf32> -> vector<2x128xf32>
    %96 = vector.extract_strided_slice %53 {offsets = [6, 0], sizes = [2, 128], strides = [1, 1]} : vector<16x128xf32> to vector<2x128xf32>
    %97 = arith.mulf %96, %95 : vector<2x128xf32>
    %98 = arith.addf %91, %97 : vector<2x128xf32>
    %99 = tpu.concatenate %65, %76, %87, %98 in 0 : vector<2x128xf32>, vector<2x128xf32>, vector<2x128xf32>, vector<2x128xf32> -> vector<8x128xf32>
    %100 = arith.truncf %99 : vector<8x128xf32> to vector<8x128xbf16>
    %c0_54 = arith.constant 0 : index
    %c0_55 = arith.constant 0 : index
    %101 = vector.load %arg7[%c0_54, %c0_55] : memref<8x8xbf16, #tpu.memory_space<vmem>>, vector<8x8xbf16>
    %cst_56 = arith.constant dense<0.000000e+00> : vector<8x128xf32>
    %102 = tpu.matmul %101, %100, %cst_56 {dimension_numbers = #tpu.dot_dimension_numbers<[1], [0], [0], [1], [0, 0, 1, 1], [], []>} : vector<8x8xbf16>, vector<8x128xbf16>, vector<8x128xf32> -> vector<8x128xf32>
    %c0_57 = arith.constant 0 : index
    %c3_58 = arith.constant 3 : index
    %103 = vector.load %arg4[%c0_57, %c3_58] : memref<16x4xf32, #tpu.memory_space<vmem>>, vector<8x1xf32>
    %104 = vector.broadcast %103 : vector<8x1xf32> to vector<8x128xf32>
    %105 = arith.addf %102, %104 : vector<8x128xf32>
    %106 = arith.addf %105, %1 : vector<8x128xf32>
    %cst_59 = arith.constant 0.000000e+00 : f32
    %107 = vector.broadcast %cst_59 : f32 to vector<8x128xf32>
    %108 = arith.maximumf %106, %107 : vector<8x128xf32>
    %c0_60 = arith.constant 0 : index
    %c0_61 = arith.constant 0 : index
    %109 = vector.load %arg8[%c0_60, %c0_61] : memref<16x8xbf16, #tpu.memory_space<vmem>>, vector<16x8xbf16>
    %110 = arith.truncf %108 : vector<8x128xf32> to vector<8x128xbf16>
    %cst_62 = arith.constant dense<0.000000e+00> : vector<16x128xf32>
    %111 = tpu.matmul %109, %110, %cst_62 {dimension_numbers = #tpu.dot_dimension_numbers<[1], [0], [0], [1], [0, 0, 1, 1], [], []>} : vector<16x8xbf16>, vector<8x128xbf16>, vector<16x128xf32> -> vector<16x128xf32>
    %c0_63 = arith.constant 0 : index
    %c0_64 = arith.constant 0 : index
    %112 = vector.load %arg9[%c0_63, %c0_64] : memref<16x4xf32, #tpu.memory_space<vmem>>, vector<16x1xf32>
    %113 = vector.broadcast %112 : vector<16x1xf32> to vector<16x128xf32>
    %114 = arith.addf %111, %113 : vector<16x128xf32>
    %c0_65 = arith.constant 0 : index
    %c1_66 = arith.constant 1 : index
    %115 = vector.load %arg9[%c0_65, %c1_66] : memref<16x4xf32, #tpu.memory_space<vmem>>, vector<16x1xf32>
    %116 = vector.broadcast %115 : vector<16x1xf32> to vector<16x128xf32>
    %117 = arith.mulf %114, %116 : vector<16x128xf32>
    %c0_67 = arith.constant 0 : index
    %c2_68 = arith.constant 2 : index
    %118 = vector.load %arg9[%c0_67, %c2_68] : memref<16x4xf32, #tpu.memory_space<vmem>>, vector<16x1xf32>
    %119 = vector.broadcast %118 : vector<16x1xf32> to vector<16x128xf32>
    %120 = arith.addf %117, %119 : vector<16x128xf32>
    %c0_69 = arith.constant 0 : index
    %c3_70 = arith.constant 3 : index
    %121 = vector.load %arg9[%c0_69, %c3_70] : memref<16x4xf32, #tpu.memory_space<vmem>>, vector<16x1xf32>
    %cst_71 = arith.constant 0.000000e+00 : f32
    %122 = vector.broadcast %cst_71 : f32 to vector<16x128xf32>
    %123 = arith.maximumf %120, %122 : vector<16x128xf32>
    %124 = vector.broadcast %121 : vector<16x1xf32> to vector<16x128xf32>
    %125 = arith.mulf %124, %123 : vector<16x128xf32>
    %cst_72 = arith.constant 1.000000e+00 : f32
    %126 = vector.broadcast %cst_72 : f32 to vector<16x1xf32>
    %127 = arith.subf %126, %121 : vector<16x1xf32>
    %128 = vector.broadcast %127 : vector<16x1xf32> to vector<16x128xf32>
    %129 = arith.mulf %128, %120 : vector<16x128xf32>
    %130 = arith.addf %125, %129 : vector<16x128xf32>
    %131 = arith.truncf %130 : vector<16x128xf32> to vector<16x128xbf16>
    %c0_73 = arith.constant 0 : index
    %c0_74 = arith.constant 0 : index
    %c0_75 = arith.constant 0 : index
    %132 = vector.load %arg10[%c0_73, %c0_74, %c0_75] : memref<1x16x128xbf16, #tpu.memory_space<vmem>>, vector<1x16x128xbf16>
    %133 = vector.shape_cast %132 : vector<1x16x128xbf16> to vector<16x128xbf16>
    %134 = vector.shape_cast %131 : vector<16x128xbf16> to vector<1x16x128xbf16>
    tpu.vector_store %arg10[%c0_73, %c0_74, %c0_75], %134 {strides = array<i32>} : memref<1x16x128xbf16, #tpu.memory_space<vmem>>, vector<1x16x128xbf16>,
    return
  }
  func.func @transform_0(%arg0: i32, %arg1: i32) -> (i32, i32, i32) {
    %c0_i32 = arith.constant 0 : i32
    %c0_i32_0 = arith.constant 0 : i32
    return %arg0, %c0_i32, %arg1 : i32, i32, i32
  }
  func.func @transform_1(%arg0: i32, %arg1: i32) -> (i32, i32) {
    %c0_i32 = arith.constant 0 : i32
    %c0_i32_0 = arith.constant 0 : i32
    %c0_i32_1 = arith.constant 0 : i32
    return %c0_i32, %c0_i32_0 : i32, i32
  }
  func.func @transform_2(%arg0: i32, %arg1: i32) -> (i32, i32) {
    %c0_i32 = arith.constant 0 : i32
    %c0_i32_0 = arith.constant 0 : i32
    %c0_i32_1 = arith.constant 0 : i32
    return %c0_i32, %c0_i32_0 : i32, i32
  }
  func.func @transform_3(%arg0: i32, %arg1: i32) -> (i32, i32, i32) {
    %c0_i32 = arith.constant 0 : i32
    %c0_i32_0 = arith.constant 0 : i32
    %c0_i32_1 = arith.constant 0 : i32
    %c0_i32_2 = arith.constant 0 : i32
    return %c0_i32, %c0_i32_0, %c0_i32_1 : i32, i32, i32
  }
  func.func @transform_4(%arg0: i32, %arg1: i32) -> (i32, i32, i32) {
    %c0_i32 = arith.constant 0 : i32
    %c0_i32_0 = arith.constant 0 : i32
    %c0_i32_1 = arith.constant 0 : i32
    %c0_i32_2 = arith.constant 0 : i32
    return %c0_i32, %c0_i32_0, %c0_i32_1 : i32, i32, i32
  }
  func.func @transform_5(%arg0: i32, %arg1: i32) -> (i32, i32) {
    %c0_i32 = arith.constant 0 : i32
    %c0_i32_0 = arith.constant 0 : i32
    %c0_i32_1 = arith.constant 0 : i32
    return %c0_i32, %c0_i32_0 : i32, i32
  }
  func.func @transform_6(%arg0: i32, %arg1: i32) -> (i32, i32) {
    %c0_i32 = arith.constant 0 : i32
    %c0_i32_0 = arith.constant 0 : i32
    %c0_i32_1 = arith.constant 0 : i32
    return %c0_i32, %c0_i32_0 : i32, i32
  }
  func.func @transform_7(%arg0: i32, %arg1: i32) -> (i32, i32) {
    %c0_i32 = arith.constant 0 : i32
    %c0_i32_0 = arith.constant 0 : i32
    %c0_i32_1 = arith.constant 0 : i32
    return %c0_i32, %c0_i32_0 : i32, i32
  }
  func.func @transform_8(%arg0: i32, %arg1: i32) -> (i32, i32, i32) {
    %c0_i32 = arith.constant 0 : i32
    %c0_i32_0 = arith.constant 0 : i32
    return %arg0, %c0_i32, %arg1 : i32, i32, i32
  }
}

module attributes {stable_mosaic.version = 11 : i64} {
  func.func @msc_tcn_kernel(%arg0: i32, %arg1: i32, %arg2: memref<1x16x128xbf16, #tpu.memory_space<vmem>>, %arg3: memref<1x16x128xbf16, #tpu.memory_space<vmem>>, %arg4: memref<1x16x128xbf16, #tpu.memory_space<vmem>>, %arg5: memref<1x8x128xf32, #tpu.memory_space<vmem>>, %arg6: memref<2x4x20xbf16, #tpu.memory_space<vmem>>, %arg7: memref<16x8xbf16, #tpu.memory_space<vmem>>, %arg8: memref<16x6xf32, #tpu.memory_space<vmem>>, %arg9: memref<1x16x128xf32, #tpu.memory_space<vmem>>) attributes {dimension_semantics = [#tpu.dimension_semantics<parallel>, #tpu.dimension_semantics<parallel>], iteration_bounds = array<i64: 2, 2>, scalar_prefetch = 0 : i64, scratch_operands = 0 : i64, tpu.core_type = #tpu.core_type<tc>, window_params = [{transform_indices = @transform_0, window_bounds = array<i64: 1, 16, 128>}, {transform_indices = @transform_1, window_bounds = array<i64: 1, 16, 128>}, {transform_indices = @transform_2, window_bounds = array<i64: 1, 16, 128>}, {transform_indices = @transform_3, window_bounds = array<i64: 1, 8, 128>}, {pipeline_mode = #tpu.pipeline_mode<synchronous>, transform_indices = @transform_4, window_bounds = array<i64: 2, 4, 20>}, {pipeline_mode = #tpu.pipeline_mode<synchronous>, transform_indices = @transform_5, window_bounds = array<i64: 16, 8>}, {pipeline_mode = #tpu.pipeline_mode<synchronous>, transform_indices = @transform_6, window_bounds = array<i64: 16, 6>}, {transform_indices = @transform_7, window_bounds = array<i64: 1, 16, 128>}]} {
    %c0 = arith.constant 0 : index
    %c0_0 = arith.constant 0 : index
    %c0_1 = arith.constant 0 : index
    %0 = vector.load %arg2[%c0, %c0_0, %c0_1] : memref<1x16x128xbf16, #tpu.memory_space<vmem>>, vector<1x16x128xbf16>
    %1 = vector.shape_cast %0 : vector<1x16x128xbf16> to vector<16x128xbf16>
    %c0_i32 = arith.constant 0 : i32
    %2 = arith.cmpi sgt, %arg1, %c0_i32 : i32
    %3 = arith.extui %2 : i1 to i32
    %4 = arith.sitofp %3 : i32 to f32
    %5 = arith.truncf %4 : f32 to bf16
    %6 = vector.broadcast %5 : bf16 to vector<16x128xbf16>
    %7 = arith.mulf %1, %6 : vector<16x128xbf16>
    %c0_2 = arith.constant 0 : index
    %c0_3 = arith.constant 0 : index
    %c0_4 = arith.constant 0 : index
    %8 = vector.load %arg4[%c0_2, %c0_3, %c0_4] : memref<1x16x128xbf16, #tpu.memory_space<vmem>>, vector<1x16x128xbf16>
    %9 = vector.shape_cast %8 : vector<1x16x128xbf16> to vector<16x128xbf16>
    %c1_i32 = arith.constant 1 : i32
    %10 = arith.cmpi slt, %arg1, %c1_i32 : i32
    %11 = arith.extui %10 : i1 to i32
    %12 = arith.sitofp %11 : i32 to f32
    %13 = arith.truncf %12 : f32 to bf16
    %14 = vector.broadcast %13 : bf16 to vector<16x128xbf16>
    %15 = arith.mulf %9, %14 : vector<16x128xbf16>
    %c0_5 = arith.constant 0 : index
    %c0_6 = arith.constant 0 : index
    %c0_7 = arith.constant 0 : index
    %16 = vector.load %arg3[%c0_5, %c0_6, %c0_7] : memref<1x16x128xbf16, #tpu.memory_space<vmem>>, vector<1x16x128xbf16>
    %17 = vector.shape_cast %16 : vector<1x16x128xbf16> to vector<16x128xbf16>
    %18 = tpu.concatenate %7, %17, %15 in 1 : vector<16x128xbf16>, vector<16x128xbf16>, vector<16x128xbf16> -> vector<16x384xbf16>
    %19 = vector.extract_strided_slice %18 {offsets = [0, 0], sizes = [4, 384], strides = [1, 1]} : vector<16x384xbf16> to vector<4x384xbf16>
    %20 = vector.extract_strided_slice %19 {offsets = [0, 96], sizes = [4, 128], strides = [1, 1]} : vector<4x384xbf16> to vector<4x128xbf16>
    %21 = vector.extract_strided_slice %19 {offsets = [0, 112], sizes = [4, 128], strides = [1, 1]} : vector<4x384xbf16> to vector<4x128xbf16>
    %22 = vector.extract_strided_slice %19 {offsets = [0, 128], sizes = [4, 128], strides = [1, 1]} : vector<4x384xbf16> to vector<4x128xbf16>
    %23 = vector.extract_strided_slice %19 {offsets = [0, 144], sizes = [4, 128], strides = [1, 1]} : vector<4x384xbf16> to vector<4x128xbf16>
    %24 = vector.extract_strided_slice %19 {offsets = [0, 160], sizes = [4, 128], strides = [1, 1]} : vector<4x384xbf16> to vector<4x128xbf16>
    %25 = tpu.concatenate %20, %21, %22, %23, %24 in 0 : vector<4x128xbf16>, vector<4x128xbf16>, vector<4x128xbf16>, vector<4x128xbf16>, vector<4x128xbf16> -> vector<20x128xbf16>
    %c0_8 = arith.constant 0 : index
    %c0_9 = arith.constant 0 : index
    %c0_10 = arith.constant 0 : index
    %26 = vector.load %arg6[%c0_8, %c0_9, %c0_10] : memref<2x4x20xbf16, #tpu.memory_space<vmem>>, vector<1x4x20xbf16>
    %27 = vector.shape_cast %26 : vector<1x4x20xbf16> to vector<4x20xbf16>
    %cst = arith.constant dense<0.000000e+00> : vector<4x128xf32>
    %28 = tpu.matmul %27, %25, %cst {dimension_numbers = #tpu.dot_dimension_numbers<[1], [0], [0], [1], [0, 0, 1, 1], [], []>} : vector<4x20xbf16>, vector<20x128xbf16>, vector<4x128xf32> -> vector<4x128xf32>
    %29 = vector.extract_strided_slice %18 {offsets = [4, 0], sizes = [4, 384], strides = [1, 1]} : vector<16x384xbf16> to vector<4x384xbf16>
    %30 = vector.extract_strided_slice %29 {offsets = [0, 64], sizes = [4, 128], strides = [1, 1]} : vector<4x384xbf16> to vector<4x128xbf16>
    %31 = vector.extract_strided_slice %29 {offsets = [0, 96], sizes = [4, 128], strides = [1, 1]} : vector<4x384xbf16> to vector<4x128xbf16>
    %32 = vector.extract_strided_slice %29 {offsets = [0, 128], sizes = [4, 128], strides = [1, 1]} : vector<4x384xbf16> to vector<4x128xbf16>
    %33 = vector.extract_strided_slice %29 {offsets = [0, 160], sizes = [4, 128], strides = [1, 1]} : vector<4x384xbf16> to vector<4x128xbf16>
    %34 = vector.extract_strided_slice %29 {offsets = [0, 192], sizes = [4, 128], strides = [1, 1]} : vector<4x384xbf16> to vector<4x128xbf16>
    %35 = tpu.concatenate %30, %31, %32, %33, %34 in 0 : vector<4x128xbf16>, vector<4x128xbf16>, vector<4x128xbf16>, vector<4x128xbf16>, vector<4x128xbf16> -> vector<20x128xbf16>
    %c1 = arith.constant 1 : index
    %c0_11 = arith.constant 0 : index
    %c0_12 = arith.constant 0 : index
    %36 = vector.load %arg6[%c1, %c0_11, %c0_12] : memref<2x4x20xbf16, #tpu.memory_space<vmem>>, vector<1x4x20xbf16>
    %37 = vector.shape_cast %36 : vector<1x4x20xbf16> to vector<4x20xbf16>
    %cst_13 = arith.constant dense<0.000000e+00> : vector<4x128xf32>
    %38 = tpu.matmul %37, %35, %cst_13 {dimension_numbers = #tpu.dot_dimension_numbers<[1], [0], [0], [1], [0, 0, 1, 1], [], []>} : vector<4x20xbf16>, vector<20x128xbf16>, vector<4x128xf32> -> vector<4x128xf32>
    %39 = vector.extract_strided_slice %18 {offsets = [8, 0], sizes = [4, 384], strides = [1, 1]} : vector<16x384xbf16> to vector<4x384xbf16>
    %40 = arith.extf %39 : vector<4x384xbf16> to vector<4x384xf32>
    %41 = vector.extract_strided_slice %40 {offsets = [0, 112], sizes = [4, 128], strides = [1, 1]} : vector<4x384xf32> to vector<4x128xf32>
    %42 = vector.extract_strided_slice %40 {offsets = [0, 128], sizes = [4, 128], strides = [1, 1]} : vector<4x384xf32> to vector<4x128xf32>
    %43 = arith.maximumf %41, %42 : vector<4x128xf32>
    %44 = vector.extract_strided_slice %40 {offsets = [0, 144], sizes = [4, 128], strides = [1, 1]} : vector<4x384xf32> to vector<4x128xf32>
    %45 = arith.maximumf %43, %44 : vector<4x128xf32>
    %46 = vector.extract_strided_slice %18 {offsets = [12, 0], sizes = [4, 384], strides = [1, 1]} : vector<16x384xbf16> to vector<4x384xbf16>
    %47 = vector.extract_strided_slice %46 {offsets = [0, 128], sizes = [4, 128], strides = [1, 1]} : vector<4x384xbf16> to vector<4x128xbf16>
    %48 = arith.extf %47 : vector<4x128xbf16> to vector<4x128xf32>
    %49 = tpu.concatenate %28, %38, %45, %48 in 0 : vector<4x128xf32>, vector<4x128xf32>, vector<4x128xf32>, vector<4x128xf32> -> vector<16x128xf32>
    %c0_14 = arith.constant 0 : index
    %c0_15 = arith.constant 0 : index
    %50 = vector.load %arg8[%c0_14, %c0_15] : memref<16x6xf32, #tpu.memory_space<vmem>>, vector<16x1xf32>
    %51 = vector.broadcast %50 : vector<16x1xf32> to vector<16x128xf32>
    %52 = arith.addf %49, %51 : vector<16x128xf32>
    %c0_16 = arith.constant 0 : index
    %c1_17 = arith.constant 1 : index
    %53 = vector.load %arg8[%c0_16, %c1_17] : memref<16x6xf32, #tpu.memory_space<vmem>>, vector<16x1xf32>
    %54 = vector.broadcast %53 : vector<16x1xf32> to vector<16x128xf32>
    %55 = arith.mulf %52, %54 : vector<16x128xf32>
    %c0_18 = arith.constant 0 : index
    %c2 = arith.constant 2 : index
    %56 = vector.load %arg8[%c0_18, %c2] : memref<16x6xf32, #tpu.memory_space<vmem>>, vector<16x1xf32>
    %57 = vector.broadcast %56 : vector<16x1xf32> to vector<16x128xf32>
    %58 = arith.addf %55, %57 : vector<16x128xf32>
    %c0_19 = arith.constant 0 : index
    %c0_20 = arith.constant 0 : index
    %59 = vector.load %arg7[%c0_19, %c0_20] : memref<16x8xbf16, #tpu.memory_space<vmem>>, vector<16x8xbf16>
    %c0_21 = arith.constant 0 : index
    %c0_22 = arith.constant 0 : index
    %c0_23 = arith.constant 0 : index
    %60 = vector.load %arg5[%c0_21, %c0_22, %c0_23] : memref<1x8x128xf32, #tpu.memory_space<vmem>>, vector<1x8x128xf32>
    %61 = vector.shape_cast %60 : vector<1x8x128xf32> to vector<8x128xf32>
    %62 = arith.truncf %61 : vector<8x128xf32> to vector<8x128xbf16>
    %cst_24 = arith.constant dense<0.000000e+00> : vector<16x128xf32>
    %63 = tpu.matmul %59, %62, %cst_24 {dimension_numbers = #tpu.dot_dimension_numbers<[1], [0], [0], [1], [0, 0, 1, 1], [], []>} : vector<16x8xbf16>, vector<8x128xbf16>, vector<16x128xf32> -> vector<16x128xf32>
    %c0_25 = arith.constant 0 : index
    %c3 = arith.constant 3 : index
    %64 = vector.load %arg8[%c0_25, %c3] : memref<16x6xf32, #tpu.memory_space<vmem>>, vector<16x1xf32>
    %65 = vector.broadcast %64 : vector<16x1xf32> to vector<16x128xf32>
    %66 = arith.addf %63, %65 : vector<16x128xf32>
    %c0_26 = arith.constant 0 : index
    %c4 = arith.constant 4 : index
    %67 = vector.load %arg8[%c0_26, %c4] : memref<16x6xf32, #tpu.memory_space<vmem>>, vector<16x1xf32>
    %68 = vector.broadcast %67 : vector<16x1xf32> to vector<16x128xf32>
    %69 = arith.mulf %66, %68 : vector<16x128xf32>
    %c0_27 = arith.constant 0 : index
    %c5 = arith.constant 5 : index
    %70 = vector.load %arg8[%c0_27, %c5] : memref<16x6xf32, #tpu.memory_space<vmem>>, vector<16x1xf32>
    %71 = vector.broadcast %70 : vector<16x1xf32> to vector<16x128xf32>
    %72 = arith.addf %69, %71 : vector<16x128xf32>
    %73 = arith.addf %58, %72 : vector<16x128xf32>
    %cst_28 = arith.constant 0.000000e+00 : f32
    %74 = vector.broadcast %cst_28 : f32 to vector<16x128xf32>
    %75 = arith.maximumf %73, %74 : vector<16x128xf32>
    %c0_29 = arith.constant 0 : index
    %c0_30 = arith.constant 0 : index
    %c0_31 = arith.constant 0 : index
    %76 = vector.load %arg9[%c0_29, %c0_30, %c0_31] : memref<1x16x128xf32, #tpu.memory_space<vmem>>, vector<1x16x128xf32>
    %77 = vector.shape_cast %76 : vector<1x16x128xf32> to vector<16x128xf32>
    %78 = vector.shape_cast %75 : vector<16x128xf32> to vector<1x16x128xf32>
    tpu.vector_store %arg9[%c0_29, %c0_30, %c0_31], %78 {strides = array<i32>} : memref<1x16x128xf32, #tpu.memory_space<vmem>>, vector<1x16x128xf32>,
    return
  }
  func.func @transform_0(%arg0: i32, %arg1: i32) -> (i32, i32, i32) {
    %c1_i32 = arith.constant 1 : i32
    %0 = arith.subi %arg1, %c1_i32 : i32
    %c0_i32 = arith.constant 0 : i32
    %1 = arith.maxsi %0, %c0_i32 : i32
    %c0_i32_0 = arith.constant 0 : i32
    %c0_i32_1 = arith.constant 0 : i32
    return %arg0, %c0_i32_0, %1 : i32, i32, i32
  }
  func.func @transform_1(%arg0: i32, %arg1: i32) -> (i32, i32, i32) {
    %c0_i32 = arith.constant 0 : i32
    %c0_i32_0 = arith.constant 0 : i32
    return %arg0, %c0_i32, %arg1 : i32, i32, i32
  }
  func.func @transform_2(%arg0: i32, %arg1: i32) -> (i32, i32, i32) {
    %c1_i32 = arith.constant 1 : i32
    %0 = arith.addi %arg1, %c1_i32 : i32
    %c1_i32_0 = arith.constant 1 : i32
    %1 = arith.minsi %0, %c1_i32_0 : i32
    %c0_i32 = arith.constant 0 : i32
    %c0_i32_1 = arith.constant 0 : i32
    return %arg0, %c0_i32, %1 : i32, i32, i32
  }
  func.func @transform_3(%arg0: i32, %arg1: i32) -> (i32, i32, i32) {
    %c0_i32 = arith.constant 0 : i32
    %c0_i32_0 = arith.constant 0 : i32
    return %arg0, %c0_i32, %arg1 : i32, i32, i32
  }
  func.func @transform_4(%arg0: i32, %arg1: i32) -> (i32, i32, i32) {
    %c0_i32 = arith.constant 0 : i32
    %c0_i32_0 = arith.constant 0 : i32
    %c0_i32_1 = arith.constant 0 : i32
    %c0_i32_2 = arith.constant 0 : i32
    return %c0_i32, %c0_i32_0, %c0_i32_1 : i32, i32, i32
  }
  func.func @transform_5(%arg0: i32, %arg1: i32) -> (i32, i32) {
    %c0_i32 = arith.constant 0 : i32
    %c0_i32_0 = arith.constant 0 : i32
    %c0_i32_1 = arith.constant 0 : i32
    return %c0_i32, %c0_i32_0 : i32, i32
  }
  func.func @transform_6(%arg0: i32, %arg1: i32) -> (i32, i32) {
    %c0_i32 = arith.constant 0 : i32
    %c0_i32_0 = arith.constant 0 : i32
    %c0_i32_1 = arith.constant 0 : i32
    return %c0_i32, %c0_i32_0 : i32, i32
  }
  func.func @transform_7(%arg0: i32, %arg1: i32) -> (i32, i32, i32) {
    %c0_i32 = arith.constant 0 : i32
    %c0_i32_0 = arith.constant 0 : i32
    return %arg0, %c0_i32, %arg1 : i32, i32, i32
  }
}

</mosaic_0001>

<llo_original>
// kernel: mlp_tcn_unit_pallas.3
$region0: #{mlp_tcn_unit_pallas.3}
  #allocation0 [shape = 'u32[]', space=smem, size = 0x4, offset = 0x4, fixed_abs, tag = 'smem constant byte address 0x4 - core index']
  #allocation1 [shape = 'u32[144,128]{1,0:T(1,128)}', space=vmem, size = 0x12000, scoped, tag = 'internal scratch']
  %s0 = inlined_call_operand.vmem [shape: bf16[2,16,256], index: 0, kind: input, shape index: {}, may-alias: {0,1,2}]
  %s1 = inlined_call_operand.vmem [shape: bf16[2,16,256], index: 1, kind: input, shape index: {}, may-alias: {0,1,2}]
  %s2 = inlined_call_operand.vmem [shape: bf16[2,16,256], index: 2, kind: input, shape index: {}, may-alias: {0,1,2}]
  %s3 = inlined_call_operand.vmem [shape: f32[2,8,256], index: 3, kind: input, shape index: {}]
  %s4 = inlined_call_operand.vmem [shape: bf16[2,4,20], index: 4, kind: input, shape index: {}]
  %s5 = inlined_call_operand.vmem [shape: bf16[16,8], index: 5, kind: input, shape index: {}]
  %s6 = inlined_call_operand.vmem [shape: f32[16,6], index: 6, kind: input, shape index: {}]
  %s7 = inlined_call_operand.vmem [shape: f32[2,16,256], index: 7, kind: output, shape index: {}]
  %s8 = sld [smem:[#allocation0]]
  $region218: #{mlp_tcn_unit_pallas.3} parent=0
    _
  %s10 = ssub.s32 1, %s8
  %s11 = scalar_select 0, %s10, %s8
  $region1: #{mlp_tcn_unit_pallas.3} parent=0
    #allocation2 [shape = 'u8[8192]{0}', space=vmem, size = 0x2000, scoped, tag = 'input window, operand 0']
    #allocation3 [shape = 'u8[8192]{0}', space=vmem, size = 0x2000, scoped, tag = 'input window, operand 1']
    #allocation4 [shape = 'u8[8192]{0}', space=vmem, size = 0x2000, scoped, tag = 'input window, operand 2']
    #allocation5 [shape = 'u8[16384]{0}', space=vmem, size = 0x4000, scoped, tag = 'output window, operand 0']
    loop: start=0, step=1, limit=6
    $region2: #{mlp_tcn_unit_pallas.3} parent=1 // loop_pre_header
      _
    $region3: #{mlp_tcn_unit_pallas.3} parent=1 // loop_header
      %s13 = sphi 0, %s17
      %p14 = scmp.ge.s32.totalorder %s13, 6
      %s20 = sphi 0, %s32
      %s21 = sphi 0, %s28
      %s22 = sphi 0, %s20
      %s23 = sphi 0, %s21
      %s24 = sphi 0, %s22
      %s25 = sphi 0, %s23
      %s43 = sphi 0, %s45
      %s46 = sphi 0, %s43
      %s47 = sphi 0, %s46
      %s63 = sphi 0, %s47
      %s71 = sphi 0, %s73
      %s74 = sphi 0, %s71
      %s75 = sphi 0, %s74
      %s91 = sphi 0, %s75
      %s105 = sphi 0, %s107
      %s108 = sphi 0, %s105
      %s109 = sphi 0, %s108
      %s125 = sphi 0, %s109
      %s133 = sphi 0, %s135
      %s136 = sphi 0, %s133
      %s137 = sphi 0, %s136
      %s153 = sphi 0, %s137
      %s157 = sphi 0, %s157
      %s159 = sphi 0, %s157
      %s160 = sphi 0, %s159
      %s174 = sphi 0, %s160
      %s178 = sphi 0, %s178
      %s180 = sphi 0, %s178
      %s181 = sphi 0, %s180
      %s195 = sphi 0, %s181
      %s199 = sphi 0, %s199
      %s201 = sphi 0, %s199
      %s202 = sphi 0, %s201
      %s216 = sphi 0, %s202
      %s224 = sphi 0, %s226
      %s227 = sphi 0, %s224
      %s228 = sphi 0, %s227
      %s244 = sphi 0, %s228
    $region4: #{mlp_tcn_unit_pallas.3} parent=1 // loop_header_branch
      %16 = sbr.rel (%p14) target = $region8
    $region5: #{mlp_tcn_unit_pallas.3} parent=1 // loop_body
      %s18 = ssub.s32 %s13, 1
      %s19 = ssub.s32 %s13, 2
      %s26 = sadd.s32 1, %s21
      %p27 = scmp.ge.s32.totalorder %s26, 2
      %s28 = scalar_select %p27, 0, %s26
      %s29 = sadd.s32 1, %s20
      %s30 = scalar_select %p27, %s29, %s20
      %p31 = scmp.ge.s32.totalorder %s30, 2
      %s32 = scalar_select %p31, 0, %s30
      %s33 = ssub.s32 %s21, 1
      %p34 = scmp.gt.s32.totalorder %s33, 0
      %s35 = scalar_select %p34, %s33, 0
      %s36 = ssub.s32 %s28, 1
      %p37 = scmp.gt.s32.totalorder %s36, 0
      %s38 = scalar_select %p37, %s36, 0
      %s39 = ssub.s32 %s20, %s32
      %s40 = ssub.s32 %s35, %s38
      %s41 = sor.u32 %s39, %s40
      %p42 = scmp.eq.s32.totalorder %s41, 0
      %s44 = sadd.s32 %s43, 1
      %s45 = scalar_select %p42, %s43, %s44
      %p48 = pneg %p42
      %p49 = scmp.eq.s32.totalorder %s13, 3
      %p50 = por %p48, %p49
      %p51 = scmp.ne.s32.totalorder %s43, %s46
      %p52 = scmp.eq.s32.totalorder %s13, 0
      %p53 = por %p51, %p52
      %p54 = scmp.ne.s32.totalorder %s43, %s46
      %p55 = scmp.eq.s32.totalorder %s18, 3
      %p56 = por %p54, %p55
      %p57 = scmp.ne.s32.totalorder %s46, %s47
      %p58 = scmp.eq.s32.totalorder %s18, 0
      %p59 = por %p57, %p58
      %p60 = scmp.ne.s32.totalorder %s46, %s47
      %p61 = scmp.eq.s32.totalorder %s19, 3
      %p62 = por %p60, %p61
      %p64 = scmp.ne.s32.totalorder %s47, %s63
      %p65 = scmp.eq.s32.totalorder %s19, 0
      %p66 = por %p64, %p65
      %s67 = ssub.s32 %s20, %s32
      %s68 = ssub.s32 %s21, %s28
      %s69 = sor.u32 %s67, %s68
      %p70 = scmp.eq.s32.totalorder %s69, 0
      %s72 = sadd.s32 %s71, 1
      %s73 = scalar_select %p70, %s71, %s72
      %p76 = pneg %p70
      %p77 = scmp.eq.s32.totalorder %s13, 3
      %p78 = por %p76, %p77
      %p79 = scmp.ne.s32.totalorder %s71, %s74
      %p80 = scmp.eq.s32.totalorder %s13, 0
      %p81 = por %p79, %p80
      %p82 = scmp.ne.s32.totalorder %s71, %s74
      %p83 = scmp.eq.s32.totalorder %s18, 3
      %p84 = por %p82, %p83
      %p85 = scmp.ne.s32.totalorder %s74, %s75
      %p86 = scmp.eq.s32.totalorder %s18, 0
      %p87 = por %p85, %p86
      %p88 = scmp.ne.s32.totalorder %s74, %s75
      %p89 = scmp.eq.s32.totalorder %s19, 3
      %p90 = por %p88, %p89
      %p92 = scmp.ne.s32.totalorder %s75, %s91
      %p93 = scmp.eq.s32.totalorder %s19, 0
      %p94 = por %p92, %p93
      %s95 = sadd.s32 %s21, 1
      %p96 = scmp.lt.s32.totalorder %s95, 1
      %s97 = scalar_select %p96, %s95, 1
      %s98 = sadd.s32 %s28, 1
      %p99 = scmp.lt.s32.totalorder %s98, 1
      %s100 = scalar_select %p99, %s98, 1
      %s101 = ssub.s32 %s20, %s32
      %s102 = ssub.s32 %s97, %s100
      %s103 = sor.u32 %s101, %s102
      %p104 = scmp.eq.s32.totalorder %s103, 0
      %s106 = sadd.s32 %s105, 1
      %s107 = scalar_select %p104, %s105, %s106
      %p110 = pneg %p104
      %p111 = scmp.eq.s32.totalorder %s13, 3
      %p112 = por %p110, %p111
      %p113 = scmp.ne.s32.totalorder %s105, %s108
      %p114 = scmp.eq.s32.totalorder %s13, 0
      %p115 = por %p113, %p114
      %p116 = scmp.ne.s32.totalorder %s105, %s108
      %p117 = scmp.eq.s32.totalorder %s18, 3
      %p118 = por %p116, %p117
      %p119 = scmp.ne.s32.totalorder %s108, %s109
      %p120 = scmp.eq.s32.totalorder %s18, 0
      %p121 = por %p119, %p120
      %p122 = scmp.ne.s32.totalorder %s108, %s109
      %p123 = scmp.eq.s32.totalorder %s19, 3
      %p124 = por %p122, %p123
      %p126 = scmp.ne.s32.totalorder %s109, %s125
      %p127 = scmp.eq.s32.totalorder %s19, 0
      %p128 = por %p126, %p127
      %s129 = ssub.s32 %s20, %s32
      %s130 = ssub.s32 %s21, %s28
      %s131 = sor.u32 %s129, %s130
      %p132 = scmp.eq.s32.totalorder %s131, 0
      %s134 = sadd.s32 %s133, 1
      %s135 = scalar_select %p132, %s133, %s134
      %p138 = pneg %p132
      %p139 = scmp.eq.s32.totalorder %s13, 3
      %p140 = por %p138, %p139
      %p141 = scmp.ne.s32.totalorder %s133, %s136
      %p142 = scmp.eq.s32.totalorder %s13, 0
      %p143 = por %p141, %p142
      %p144 = scmp.ne.s32.totalorder %s133, %s136
      %p145 = scmp.eq.s32.totalorder %s18, 3
      %p146 = por %p144, %p145
      %p147 = scmp.ne.s32.totalorder %s136, %s137
      %p148 = scmp.eq.s32.totalorder %s18, 0
      %p149 = por %p147, %p148
      %p150 = scmp.ne.s32.totalorder %s136, %s137
      %p151 = scmp.eq.s32.totalorder %s19, 3
      %p152 = por %p150, %p151
      %p154 = scmp.ne.s32.totalorder %s137, %s153
      %p155 = scmp.eq.s32.totalorder %s19, 0
      %p156 = por %p154, %p155
      %s158 = sadd.s32 %s157, 1
      %p161 = scmp.eq.s32.totalorder %s13, 3
      %p162 = scmp.ne.s32.totalorder %s157, %s159
      %p163 = scmp.eq.s32.totalorder %s13, 0
      %p164 = por %p162, %p163
      %p165 = scmp.ne.s32.totalorder %s157, %s159
      %p166 = scmp.eq.s32.totalorder %s18, 3
      %p167 = por %p165, %p166
      %p168 = scmp.ne.s32.totalorder %s159, %s160
      %p169 = scmp.eq.s32.totalorder %s18, 0
      %p170 = por %p168, %p169
      %p171 = scmp.ne.s32.totalorder %s159, %s160
      %p172 = scmp.eq.s32.totalorder %s19, 3
      %p173 = por %p171, %p172
      %p175 = scmp.ne.s32.totalorder %s160, %s174
      %p176 = scmp.eq.s32.totalorder %s19, 0
      %p177 = por %p175, %p176
      %s179 = sadd.s32 %s178, 1
      %p182 = scmp.eq.s32.totalorder %s13, 3
      %p183 = scmp.ne.s32.totalorder %s178, %s180
      %p184 = scmp.eq.s32.totalorder %s13, 0
      %p185 = por %p183, %p184
      %p186 = scmp.ne.s32.totalorder %s178, %s180
      %p187 = scmp.eq.s32.totalorder %s18, 3
      %p188 = por %p186, %p187
      %p189 = scmp.ne.s32.totalorder %s180, %s181
      %p190 = scmp.eq.s32.totalorder %s18, 0
      %p191 = por %p189, %p190
      %p192 = scmp.ne.s32.totalorder %s180, %s181
      %p193 = scmp.eq.s32.totalorder %s19, 3
      %p194 = por %p192, %p193
      %p196 = scmp.ne.s32.totalorder %s181, %s195
      %p197 = scmp.eq.s32.totalorder %s19, 0
      %p198 = por %p196, %p197
      %s200 = sadd.s32 %s199, 1
      %p203 = scmp.eq.s32.totalorder %s13, 3
      %p204 = scmp.ne.s32.totalorder %s199, %s201
      %p205 = scmp.eq.s32.totalorder %s13, 0
      %p206 = por %p204, %p205
      %p207 = scmp.ne.s32.totalorder %s199, %s201
      %p208 = scmp.eq.s32.totalorder %s18, 3
      %p209 = por %p207, %p208
      %p210 = scmp.ne.s32.totalorder %s201, %s202
      %p211 = scmp.eq.s32.totalorder %s18, 0
      %p212 = por %p210, %p211
      %p213 = scmp.ne.s32.totalorder %s201, %s202
      %p214 = scmp.eq.s32.totalorder %s19, 3
      %p215 = por %p213, %p214
      %p217 = scmp.ne.s32.totalorder %s202, %s216
      %p218 = scmp.eq.s32.totalorder %s19, 0
      %p219 = por %p217, %p218
      %s220 = ssub.s32 %s20, %s32
      %s221 = ssub.s32 %s21, %s28
      %s222 = sor.u32 %s220, %s221
      %p223 = scmp.eq.s32.totalorder %s222, 0
      %s225 = sadd.s32 %s224, 1
      %s226 = scalar_select %p223, %s224, %s225
      %p229 = pneg %p223
      %p230 = scmp.eq.s32.totalorder %s13, 3
      %p231 = por %p229, %p230
      %p232 = scmp.ne.s32.totalorder %s224, %s227
      %p233 = scmp.eq.s32.totalorder %s13, 0
      %p234 = por %p232, %p233
      %p235 = scmp.ne.s32.totalorder %s224, %s227
      %p236 = scmp.eq.s32.totalorder %s18, 3
      %p237 = por %p235, %p236
      %p238 = scmp.ne.s32.totalorder %s227, %s228
      %p239 = scmp.eq.s32.totalorder %s18, 0
      %p240 = por %p238, %p239
      %p241 = scmp.ne.s32.totalorder %s227, %s228
      %p242 = scmp.eq.s32.totalorder %s19, 3
      %p243 = por %p241, %p242
      %p245 = scmp.ne.s32.totalorder %s228, %s244
      %p246 = scmp.eq.s32.totalorder %s19, 0
      %p247 = por %p245, %p246
      %p248 = scmp.le.s32.totalorder 1, %s13
      %p249 = scmp.lt.s32.totalorder %s13, 5
      %p250 = pnand %p248, %p249
      %p251 = pneg %p250
      // Predicated region
      $region9: #{mlp_tcn_unit_pallas.3} parent=5 // pred_check
        _
      $region10: #{mlp_tcn_unit_pallas.3} parent=5 // pred_check_branch
        %253 = sbr.rel (%p250) target = $region12
      $region11: #{mlp_tcn_unit_pallas.3} parent=5 // pred_region
        %s254 = ssub.s32 %s13, 1
        // Predicated region
        $region13: #{mlp_tcn_unit_pallas.3} parent=11 // pred_check
          %p255 = pneg %p170
        $region14: #{mlp_tcn_unit_pallas.3} parent=11 // pred_check_branch
          %257 = sbr.rel (%p255) target = $region16
        $region15: #{mlp_tcn_unit_pallas.3} parent=11 // pred_region
          _
        $region16: #{mlp_tcn_unit_pallas.3} parent=11 // pred_fallthru
          _
        // Predicated region
        $region17: #{mlp_tcn_unit_pallas.3} parent=11 // pred_check
          %p258 = pneg %p191
        $region18: #{mlp_tcn_unit_pallas.3} parent=11 // pred_check_branch
          %260 = sbr.rel (%p258) target = $region20
        $region19: #{mlp_tcn_unit_pallas.3} parent=11 // pred_region
          _
        $region20: #{mlp_tcn_unit_pallas.3} parent=11 // pred_fallthru
          _
        // Predicated region
        $region21: #{mlp_tcn_unit_pallas.3} parent=11 // pred_check
          %p261 = pneg %p212
        $region22: #{mlp_tcn_unit_pallas.3} parent=11 // pred_check_branch
          %263 = sbr.rel (%p261) target = $region24
        $region23: #{mlp_tcn_unit_pallas.3} parent=11 // pred_region
          _
        $region24: #{mlp_tcn_unit_pallas.3} parent=11 // pred_fallthru
          _
      $region12: #{mlp_tcn_unit_pallas.3} parent=5 // pred_fallthru
        _
      %p264 = scmp.lt.s32.totalorder %s13, 4
      // Predicated region
      $region25: #{mlp_tcn_unit_pallas.3} parent=5 // pred_check
        %p265 = pneg %p264
      $region26: #{mlp_tcn_unit_pallas.3} parent=5 // pred_check_branch
        %267 = sbr.rel (%p265) target = $region28
      $region27: #{mlp_tcn_unit_pallas.3} parent=5 // pred_region
        // Predicated region
        $region29: #{mlp_tcn_unit_pallas.3} parent=27 // pred_check
          %p268 = pneg %p53
        $region30: #{mlp_tcn_unit_pallas.3} parent=27 // pred_check_branch
          %270 = sbr.rel (%p268) target = $region32
        $region31: #{mlp_tcn_unit_pallas.3} parent=27 // pred_region
          %s271 = sand.u32 %s43, 1
          %s272 = sand.u32 %s43, 1
          %s273 = smul.addr %s272, 8
          %s274 = scalar_lea.vmem [#allocation2], %s273
          %s275 = ssub.s32 %s21, 1
          %p276 = scmp.gt.s32.totalorder %s275, 0
          %s277 = scalar_select %p276, %s275, 0
          %s278 = smul.addr %s20, 4
          %s279 = sadd.s32 %s277, %s278
          %s280 = smul.addr %s279, 4
          %s281 = scalar_lea.vmem %s0, %s280
          // Predicated region
          $region33: #{mlp_tcn_unit_pallas.3} parent=31 // pred_check
            _
          $region34: #{mlp_tcn_unit_pallas.3} parent=31 // pred_check_branch
            %283 = sbr.rel (0) target = $region36
          $region35: #{mlp_tcn_unit_pallas.3} parent=31 // pred_region
            // Predicated region
            $region37: #{mlp_tcn_unit_pallas.3} parent=35 // pred_check
              _
            $region38: #{mlp_tcn_unit_pallas.3} parent=35 // pred_check_branch
              %285 = sbr.rel target = $region40
            $region39: #{mlp_tcn_unit_pallas.3} parent=35 // pred_region
              // Predicated region
              $region52: #{mlp_tcn_unit_pallas.3} parent=39 // pred_check
                _
              $region53: #{mlp_tcn_unit_pallas.3} parent=39 // pred_check_branch
                %302 = sbr.rel (0) target = $region55
              $region54: #{mlp_tcn_unit_pallas.3} parent=39 // pred_region
                loop: start=0, step=1, limit=1
                $region56: #{mlp_tcn_unit_pallas.3} parent=54 // loop_pre_header
                  _
                $region57: #{mlp_tcn_unit_pallas.3} parent=54 // loop_header
                  %s304 = sphi 0, %s308
                  %p305 = scmp.ge.s32.totalorder %s304, 1
                  %s309 = sphi %s281, %s281
                  %s310 = sphi %s274, %s274
                $region58: #{mlp_tcn_unit_pallas.3} parent=54 // loop_header_branch
                  %307 = sbr.rel (%p305) target = $region62
                $region59: #{mlp_tcn_unit_pallas.3} parent=54 // loop_body
                  _
                $region60: #{mlp_tcn_unit_pallas.3} parent=54 // loop_footer
                  %s308 = sadd.s32 1, %s304
                $region61: #{mlp_tcn_unit_pallas.3} parent=54 // loop_footer_branch
                  %303 = sbr.rel target = $region57
                $region62: #{mlp_tcn_unit_pallas.3} parent=54 // loop_exit
                  _
                loop: start=0, step=1, limit=1
                $region63: #{mlp_tcn_unit_pallas.3} parent=54 // loop_pre_header
                  _
                $region64: #{mlp_tcn_unit_pallas.3} parent=54 // loop_header
                  %s313 = sphi 0, %s317
                  %p314 = scmp.ge.s32.totalorder %s313, 1
                  %s318 = sphi %s281, %s281
                  %s319 = sphi %s274, %s274
                $region65: #{mlp_tcn_unit_pallas.3} parent=54 // loop_header_branch
                  %316 = sbr.rel (%p314) target = $region69
                $region66: #{mlp_tcn_unit_pallas.3} parent=54 // loop_body
                  %v320 = vld [vmem:[%s318] sm:$0xf]
                  %321 = vst [vmem:[%s319] sm:$0xf] %v320
                  %v322 = vld [vmem:[%s318 + $0x8] sm:$0xf]
                  %323 = vst [vmem:[%s319 + $0x4] sm:$0xf] %v322
                $region67: #{mlp_tcn_unit_pallas.3} parent=54 // loop_footer
                  %s317 = sadd.s32 1, %s313
                $region68: #{mlp_tcn_unit_pallas.3} parent=54 // loop_footer_branch
                  %312 = sbr.rel target = $region64
                $region69: #{mlp_tcn_unit_pallas.3} parent=54 // loop_exit
                  _
              $region55: #{mlp_tcn_unit_pallas.3} parent=39 // pred_fallthru
                _
            $region40: #{mlp_tcn_unit_pallas.3} parent=35 // pred_fallthru
              _
            // Predicated region
            $region41: #{mlp_tcn_unit_pallas.3} parent=35 // pred_check
              _
            $region42: #{mlp_tcn_unit_pallas.3} parent=35 // pred_check_branch
              %287 = sbr.rel (0) target = $region44
            $region43: #{mlp_tcn_unit_pallas.3} parent=35 // pred_region
              loop: start=0, step=1, limit=1
              $region45: #{mlp_tcn_unit_pallas.3} parent=43 // loop_pre_header
                _
              $region46: #{mlp_tcn_unit_pallas.3} parent=43 // loop_header
                %s290 = sphi 0, %s294
                %p291 = scmp.ge.s32.totalorder %s290, 1
                %s295 = sphi %s281, %s281
                %s296 = sphi %s274, %s274
              $region47: #{mlp_tcn_unit_pallas.3} parent=43 // loop_header_branch
                %293 = sbr.rel (%p291) target = $region51
              $region48: #{mlp_tcn_unit_pallas.3} parent=43 // loop_body
                %v297 = vld [vmem:[%s295] sm:$0xf]
                %298 = vst [vmem:[%s296] sm:$0xf] %v297
                %v299 = vld [vmem:[%s295 + $0x8] sm:$0xf]
                %300 = vst [vmem:[%s296 + $0x4] sm:$0xf] %v299
              $region49: #{mlp_tcn_unit_pallas.3} parent=43 // loop_footer
                %s294 = sadd.s32 1, %s290
              $region50: #{mlp_tcn_unit_pallas.3} parent=43 // loop_footer_branch
                %289 = sbr.rel target = $region46
              $region51: #{mlp_tcn_unit_pallas.3} parent=43 // loop_exit
                _
            $region44: #{mlp_tcn_unit_pallas.3} parent=35 // pred_fallthru
              _
          $region36: #{mlp_tcn_unit_pallas.3} parent=31 // pred_fallthru
            _
          %324 = vnop
        $region32: #{mlp_tcn_unit_pallas.3} parent=27 // pred_fallthru
          _
        // Predicated region
        $region70: #{mlp_tcn_unit_pallas.3} parent=27 // pred_check
          %p325 = pneg %p81
        $region71: #{mlp_tcn_unit_pallas.3} parent=27 // pred_check_branch
          %327 = sbr.rel (%p325) target = $region73
        $region72: #{mlp_tcn_unit_pallas.3} parent=27 // pred_region
          %s328 = sand.u32 %s71, 1
          %s329 = sand.u32 %s71, 1
          %s330 = smul.addr %s329, 8
          %s331 = scalar_lea.vmem [#allocation3], %s330
          %s332 = smul.addr %s20, 4
          %s333 = sadd.s32 %s21, %s332
          %s334 = smul.addr %s333, 4
          %s335 = scalar_lea.vmem %s1, %s334
          // Predicated region
          $region74: #{mlp_tcn_unit_pallas.3} parent=72 // pred_check
            _
          $region75: #{mlp_tcn_unit_pallas.3} parent=72 // pred_check_branch
            %337 = sbr.rel (0) target = $region77
          $region76: #{mlp_tcn_unit_pallas.3} parent=72 // pred_region
            // Predicated region
            $region78: #{mlp_tcn_unit_pallas.3} parent=76 // pred_check
              _
            $region79: #{mlp_tcn_unit_pallas.3} parent=76 // pred_check_branch
              %339 = sbr.rel target = $region81
            $region80: #{mlp_tcn_unit_pallas.3} parent=76 // pred_region
              // Predicated region
              $region93: #{mlp_tcn_unit_pallas.3} parent=80 // pred_check
                _
              $region94: #{mlp_tcn_unit_pallas.3} parent=80 // pred_check_branch
                %356 = sbr.rel (0) target = $region96
              $region95: #{mlp_tcn_unit_pallas.3} parent=80 // pred_region
                loop: start=0, step=1, limit=1
                $region97: #{mlp_tcn_unit_pallas.3} parent=95 // loop_pre_header
                  _
                $region98: #{mlp_tcn_unit_pallas.3} parent=95 // loop_header
                  %s358 = sphi 0, %s362
                  %p359 = scmp.ge.s32.totalorder %s358, 1
                  %s363 = sphi %s335, %s335
                  %s364 = sphi %s331, %s331
                $region99: #{mlp_tcn_unit_pallas.3} parent=95 // loop_header_branch
                  %361 = sbr.rel (%p359) target = $region103
                $region100: #{mlp_tcn_unit_pallas.3} parent=95 // loop_body
                  _
                $region101: #{mlp_tcn_unit_pallas.3} parent=95 // loop_footer
                  %s362 = sadd.s32 1, %s358
                $region102: #{mlp_tcn_unit_pallas.3} parent=95 // loop_footer_branch
                  %357 = sbr.rel target = $region98
                $region103: #{mlp_tcn_unit_pallas.3} parent=95 // loop_exit
                  _
                loop: start=0, step=1, limit=1
                $region104: #{mlp_tcn_unit_pallas.3} parent=95 // loop_pre_header
                  _
                $region105: #{mlp_tcn_unit_pallas.3} parent=95 // loop_header
                  %s367 = sphi 0, %s371
                  %p368 = scmp.ge.s32.totalorder %s367, 1
                  %s372 = sphi %s335, %s335
                  %s373 = sphi %s331, %s331
                $region106: #{mlp_tcn_unit_pallas.3} parent=95 // loop_header_branch
                  %370 = sbr.rel (%p368) target = $region110
                $region107: #{mlp_tcn_unit_pallas.3} parent=95 // loop_body
                  %v374 = vld [vmem:[%s372] sm:$0xf]
                  %375 = vst [vmem:[%s373] sm:$0xf] %v374
                  %v376 = vld [vmem:[%s372 + $0x8] sm:$0xf]
                  %377 = vst [vmem:[%s373 + $0x4] sm:$0xf] %v376
                $region108: #{mlp_tcn_unit_pallas.3} parent=95 // loop_footer
                  %s371 = sadd.s32 1, %s367
                $region109: #{mlp_tcn_unit_pallas.3} parent=95 // loop_footer_branch
                  %366 = sbr.rel target = $region105
                $region110: #{mlp_tcn_unit_pallas.3} parent=95 // loop_exit
                  _
              $region96: #{mlp_tcn_unit_pallas.3} parent=80 // pred_fallthru
                _
            $region81: #{mlp_tcn_unit_pallas.3} parent=76 // pred_fallthru
              _
            // Predicated region
            $region82: #{mlp_tcn_unit_pallas.3} parent=76 // pred_check
              _
            $region83: #{mlp_tcn_unit_pallas.3} parent=76 // pred_check_branch
              %341 = sbr.rel (0) target = $region85
            $region84: #{mlp_tcn_unit_pallas.3} parent=76 // pred_region
              loop: start=0, step=1, limit=1
              $region86: #{mlp_tcn_unit_pallas.3} parent=84 // loop_pre_header
                _
              $region87: #{mlp_tcn_unit_pallas.3} parent=84 // loop_header
                %s344 = sphi 0, %s348
                %p345 = scmp.ge.s32.totalorder %s344, 1
                %s349 = sphi %s335, %s335
                %s350 = sphi %s331, %s331
              $region88: #{mlp_tcn_unit_pallas.3} parent=84 // loop_header_branch
                %347 = sbr.rel (%p345) target = $region92
              $region89: #{mlp_tcn_unit_pallas.3} parent=84 // loop_body
                %v351 = vld [vmem:[%s349] sm:$0xf]
                %352 = vst [vmem:[%s350] sm:$0xf] %v351
                %v353 = vld [vmem:[%s349 + $0x8] sm:$0xf]
                %354 = vst [vmem:[%s350 + $0x4] sm:$0xf] %v353
              $region90: #{mlp_tcn_unit_pallas.3} parent=84 // loop_footer
                %s348 = sadd.s32 1, %s344
              $region91: #{mlp_tcn_unit_pallas.3} parent=84 // loop_footer_branch
                %343 = sbr.rel target = $region87
              $region92: #{mlp_tcn_unit_pallas.3} parent=84 // loop_exit
                _
            $region85: #{mlp_tcn_unit_pallas.3} parent=76 // pred_fallthru
              _
          $region77: #{mlp_tcn_unit_pallas.3} parent=72 // pred_fallthru
            _
          %378 = vnop
        $region73: #{mlp_tcn_unit_pallas.3} parent=27 // pred_fallthru
          _
        // Predicated region
        $region111: #{mlp_tcn_unit_pallas.3} parent=27 // pred_check
          %p379 = pneg %p115
        $region112: #{mlp_tcn_unit_pallas.3} parent=27 // pred_check_branch
          %381 = sbr.rel (%p379) target = $region114
        $region113: #{mlp_tcn_unit_pallas.3} parent=27 // pred_region
          %s382 = sand.u32 %s105, 1
          %s383 = sand.u32 %s105, 1
          %s384 = smul.addr %s383, 8
          %s385 = scalar_lea.vmem [#allocation4], %s384
          %s386 = sadd.s32 %s21, 1
          %p387 = scmp.lt.s32.totalorder %s386, 1
          %s388 = scalar_select %p387, %s386, 1
          %s389 = smul.addr %s20, 4
          %s390 = sadd.s32 %s388, %s389
          %s391 = smul.addr %s390, 4
          %s392 = scalar_lea.vmem %s2, %s391
          // Predicated region
          $region115: #{mlp_tcn_unit_pallas.3} parent=113 // pred_check
            _
          $region116: #{mlp_tcn_unit_pallas.3} parent=113 // pred_check_branch
            %394 = sbr.rel (0) target = $region118
          $region117: #{mlp_tcn_unit_pallas.3} parent=113 // pred_region
            // Predicated region
            $region119: #{mlp_tcn_unit_pallas.3} parent=117 // pred_check
              _
            $region120: #{mlp_tcn_unit_pallas.3} parent=117 // pred_check_branch
              %396 = sbr.rel target = $region122
            $region121: #{mlp_tcn_unit_pallas.3} parent=117 // pred_region
              // Predicated region
              $region134: #{mlp_tcn_unit_pallas.3} parent=121 // pred_check
                _
              $region135: #{mlp_tcn_unit_pallas.3} parent=121 // pred_check_branch
                %413 = sbr.rel (0) target = $region137
              $region136: #{mlp_tcn_unit_pallas.3} parent=121 // pred_region
                loop: start=0, step=1, limit=1
                $region138: #{mlp_tcn_unit_pallas.3} parent=136 // loop_pre_header
                  _
                $region139: #{mlp_tcn_unit_pallas.3} parent=136 // loop_header
                  %s415 = sphi 0, %s419
                  %p416 = scmp.ge.s32.totalorder %s415, 1
                  %s420 = sphi %s392, %s392
                  %s421 = sphi %s385, %s385
                $region140: #{mlp_tcn_unit_pallas.3} parent=136 // loop_header_branch
                  %418 = sbr.rel (%p416) target = $region144
                $region141: #{mlp_tcn_unit_pallas.3} parent=136 // loop_body
                  _
                $region142: #{mlp_tcn_unit_pallas.3} parent=136 // loop_footer
                  %s419 = sadd.s32 1, %s415
                $region143: #{mlp_tcn_unit_pallas.3} parent=136 // loop_footer_branch
                  %414 = sbr.rel target = $region139
                $region144: #{mlp_tcn_unit_pallas.3} parent=136 // loop_exit
                  _
                loop: start=0, step=1, limit=1
                $region145: #{mlp_tcn_unit_pallas.3} parent=136 // loop_pre_header
                  _
                $region146: #{mlp_tcn_unit_pallas.3} parent=136 // loop_header
                  %s424 = sphi 0, %s428
                  %p425 = scmp.ge.s32.totalorder %s424, 1
                  %s429 = sphi %s392, %s392
                  %s430 = sphi %s385, %s385
                $region147: #{mlp_tcn_unit_pallas.3} parent=136 // loop_header_branch
                  %427 = sbr.rel (%p425) target = $region151
                $region148: #{mlp_tcn_unit_pallas.3} parent=136 // loop_body
                  %v431 = vld [vmem:[%s429] sm:$0xf]
                  %432 = vst [vmem:[%s430] sm:$0xf] %v431
                  %v433 = vld [vmem:[%s429 + $0x8] sm:$0xf]
                  %434 = vst [vmem:[%s430 + $0x4] sm:$0xf] %v433
                $region149: #{mlp_tcn_unit_pallas.3} parent=136 // loop_footer
                  %s428 = sadd.s32 1, %s424
                $region150: #{mlp_tcn_unit_pallas.3} parent=136 // loop_footer_branch
                  %423 = sbr.rel target = $region146
                $region151: #{mlp_tcn_unit_pallas.3} parent=136 // loop_exit
                  _
              $region137: #{mlp_tcn_unit_pallas.3} parent=121 // pred_fallthru
                _
            $region122: #{mlp_tcn_unit_pallas.3} parent=117 // pred_fallthru
              _
            // Predicated region
            $region123: #{mlp_tcn_unit_pallas.3} parent=117 // pred_check
              _
            $region124: #{mlp_tcn_unit_pallas.3} parent=117 // pred_check_branch
              %398 = sbr.rel (0) target = $region126
            $region125: #{mlp_tcn_unit_pallas.3} parent=117 // pred_region
              loop: start=0, step=1, limit=1
              $region127: #{mlp_tcn_unit_pallas.3} parent=125 // loop_pre_header
                _
              $region128: #{mlp_tcn_unit_pallas.3} parent=125 // loop_header
                %s401 = sphi 0, %s405
                %p402 = scmp.ge.s32.totalorder %s401, 1
                %s406 = sphi %s392, %s392
                %s407 = sphi %s385, %s385
              $region129: #{mlp_tcn_unit_pallas.3} parent=125 // loop_header_branch
                %404 = sbr.rel (%p402) target = $region133
              $region130: #{mlp_tcn_unit_pallas.3} parent=125 // loop_body
                %v408 = vld [vmem:[%s406] sm:$0xf]
                %409 = vst [vmem:[%s407] sm:$0xf] %v408
                %v410 = vld [vmem:[%s406 + $0x8] sm:$0xf]
                %411 = vst [vmem:[%s407 + $0x4] sm:$0xf] %v410
              $region131: #{mlp_tcn_unit_pallas.3} parent=125 // loop_footer
                %s405 = sadd.s32 1, %s401
              $region132: #{mlp_tcn_unit_pallas.3} parent=125 // loop_footer_branch
                %400 = sbr.rel target = $region128
              $region133: #{mlp_tcn_unit_pallas.3} parent=125 // loop_exit
                _
            $region126: #{mlp_tcn_unit_pallas.3} parent=117 // pred_fallthru
              _
          $region118: #{mlp_tcn_unit_pallas.3} parent=113 // pred_fallthru
            _
          %435 = vnop
        $region114: #{mlp_tcn_unit_pallas.3} parent=27 // pred_fallthru
          _
        // Predicated region
        $region152: #{mlp_tcn_unit_pallas.3} parent=27 // pred_check
          %p436 = pneg %p143
        $region153: #{mlp_tcn_unit_pallas.3} parent=27 // pred_check_branch
          %438 = sbr.rel (%p436) target = $region155
        $region154: #{mlp_tcn_unit_pallas.3} parent=27 // pred_region
          %p439 = scmp.lt.s32.totalorder %s20, 1
          %s440 = scalar_select %p439, %s20, 1
          %p441 = scmp.lt.s32.totalorder %s21, 1
          %s442 = scalar_select %p441, %s21, 1
          %s443 = smul.addr %s440, 2
          %s444 = sadd.s32 %s442, %s443
          %s445 = smul.addr %s444, 8
          %s446 = scalar_lea.vmem %s3, %s445
        $region155: #{mlp_tcn_unit_pallas.3} parent=27 // pred_fallthru
          _
      $region28: #{mlp_tcn_unit_pallas.3} parent=5 // pred_fallthru
        _
      %p447 = scmp.le.s32.totalorder 1, %s13
      %p448 = scmp.lt.s32.totalorder %s13, 5
      %p449 = pnand %p447, %p448
      %p450 = pneg %p449
      // Predicated region
      $region156: #{mlp_tcn_unit_pallas.3} parent=5 // pred_check
        _
      $region157: #{mlp_tcn_unit_pallas.3} parent=5 // pred_check_branch
        %452 = sbr.rel (%p449) target = $region159
      $region158: #{mlp_tcn_unit_pallas.3} parent=5 // pred_region
        %s453 = ssub.s32 %s13, 1
        %s454 = sand.u32 %s46, 1
        %s455 = sand.u32 %s46, 1
        %s456 = smul.addr %s455, 8
        %s457 = scalar_lea.vmem [#allocation2], %s456
        // Predicated region
        $region160: #{mlp_tcn_unit_pallas.3} parent=158 // pred_check
          %p458 = pneg %p59
        $region161: #{mlp_tcn_unit_pallas.3} parent=158 // pred_check_branch
          %460 = sbr.rel (%p458) target = $region163
        $region162: #{mlp_tcn_unit_pallas.3} parent=158 // pred_region
          _
        $region163: #{mlp_tcn_unit_pallas.3} parent=158 // pred_fallthru
          _
        %s461 = sand.u32 %s74, 1
        %s462 = sand.u32 %s74, 1
        %s463 = smul.addr %s462, 8
        %s464 = scalar_lea.vmem [#allocation3], %s463
        // Predicated region
        $region164: #{mlp_tcn_unit_pallas.3} parent=158 // pred_check
          %p465 = pneg %p87
        $region165: #{mlp_tcn_unit_pallas.3} parent=158 // pred_check_branch
          %467 = sbr.rel (%p465) target = $region167
        $region166: #{mlp_tcn_unit_pallas.3} parent=158 // pred_region
          _
        $region167: #{mlp_tcn_unit_pallas.3} parent=158 // pred_fallthru
          _
        %s468 = sand.u32 %s108, 1
        %s469 = sand.u32 %s108, 1
        %s470 = smul.addr %s469, 8
        %s471 = scalar_lea.vmem [#allocation4], %s470
        // Predicated region
        $region168: #{mlp_tcn_unit_pallas.3} parent=158 // pred_check
          %p472 = pneg %p121
        $region169: #{mlp_tcn_unit_pallas.3} parent=158 // pred_check_branch
          %474 = sbr.rel (%p472) target = $region171
        $region170: #{mlp_tcn_unit_pallas.3} parent=158 // pred_region
          _
        $region171: #{mlp_tcn_unit_pallas.3} parent=158 // pred_fallthru
          _
        %s475 = sand.u32 %s46, 1
        %s476 = sand.u32 %s46, 1
        %s477 = smul.addr %s476, 8
        %s478 = scalar_lea.vmem [#allocation2], %s477
        %p479 = pneg %p59
        %p480 = pneg %p56
        %s481 = sand.u32 %s74, 1
        %s482 = sand.u32 %s74, 1
        %s483 = smul.addr %s482, 8
        %s484 = scalar_lea.vmem [#allocation3], %s483
        %p485 = pneg %p87
        %p486 = pneg %p84
        %s487 = sand.u32 %s108, 1
        %s488 = sand.u32 %s108, 1
        %s489 = smul.addr %s488, 8
        %s490 = scalar_lea.vmem [#allocation4], %s489
        %p491 = pneg %p121
        %p492 = pneg %p118
        %p493 = scmp.lt.s32.totalorder %s22, 1
        %s494 = scalar_select %p493, %s22, 1
        %p495 = scmp.lt.s32.totalorder %s23, 1
        %s496 = scalar_select %p495, %s23, 1
        %s497 = smul.addr %s494, 2
        %s498 = sadd.s32 %s496, %s497
        %s499 = smul.addr %s498, 8
        %s500 = scalar_lea.vmem %s3, %s499
        %p501 = pneg %p149
        %p502 = pneg %p146
        %p503 = pneg %p170
        %p504 = pneg %p167
        %p505 = pneg %p191
        %p506 = pneg %p188
        %p507 = pneg %p212
        %p508 = pneg %p209
        %p509 = pneg %p240
        %p510 = pneg %p237
        %s511 = sand.u32 %s227, 1
        %s512 = sand.u32 %s227, 1
        %s513 = smul.addr %s512, 16
        %s514 = scalar_lea.vmem [#allocation5], %s513
        %s515 = ssub.s32 %s23, 1
        %p516 = scmp.gt.s32.totalorder %s515, 0
        %s517 = scalar_select %p516, %s515, 0
        %s518 = sadd.s32 %s23, 1
        %p519 = scmp.lt.s32.totalorder %s518, 1
        %s520 = scalar_select %p519, %s518, 1
        %p521 = scmp.lt.s32.totalorder %s22, 1
        %s522 = scalar_select %p521, %s22, 1
        %p523 = scmp.lt.s32.totalorder %s23, 1
        %s524 = scalar_select %p523, %s23, 1
        %s525 = smul.addr %s522, 2
        %s526 = sadd.s32 %s524, %s525
        %s527 = smul.addr %s526, 8
        %s528 = scalar_lea.vmem %s3, %s527
        %v530 = vld [vmem:[%s457] sm:$0xf]
        %v531 = vld [vmem:[%s457 + $0x4] sm:$0xf]
        %p532 = scmp.gt.s32.totalorder %s23, 0
        %s533 = scalar_select %p532, 1, 0
        %s534 = scvt.s32.f32 %s533
        %p536 = scmp.ne.f32.partialorder %s534, %s534
        %s537 = sshrl.u32 %s534, 16
        %s538 = sand.u32 %s537, 1
        %s539 = sadd.s32 32767, %s538
        %s540 = sadd.s32 %s534, %s539
        %s541 = sand.u32 %s540, 4294901760
        %s542 = scalar_select %p536, 2143289344, %s541
        %s544 = sshrl.u32 %s542, 16
        %s545 = sshll.u32 %s544, 16
        %s546 = sor.u32 %s544, %s545
        %v547 = vstv %s546
        %v549 = vmul.bf16 %v530, %v547
        %v550 = vmul.bf16 %v531, %v547
        %v551 = vld [vmem:[%s471] sm:$0xf]
        %v552 = vld [vmem:[%s471 + $0x4] sm:$0xf]
        %p553 = scmp.lt.s32.totalorder %s23, 1
        %s554 = scalar_select %p553, 1, 0
        %s555 = scvt.s32.f32 %s554
        %p557 = scmp.ne.f32.partialorder %s555, %s555
        %s558 = sshrl.u32 %s555, 16
        %s559 = sand.u32 %s558, 1
        %s560 = sadd.s32 32767, %s559
        %s561 = sadd.s32 %s555, %s560
        %s562 = sand.u32 %s561, 4294901760
        %s563 = scalar_select %p557, 2143289344, %s562
        %s565 = sshrl.u32 %s563, 16
        %s566 = sshll.u32 %s565, 16
        %s567 = sor.u32 %s565, %s566
        %v568 = vstv %s567
        %v570 = vmul.bf16 %v551, %v568
        %v571 = vmul.bf16 %v552, %v568
        %v572 = vld [vmem:[%s464] sm:$0xf]
        %v573 = vld [vmem:[%s464 + $0x4] sm:$0xf]
        %v576 = vunpack.c.l.b16 %v549
        %v577 = vunpack.c.l.b16 %v550
        %v578 = vpack.c.b16 %v577, %v576
        %v581 = vunpack.c.l.b16 %v572
        %v582 = vunpack.c.l.b16 %v573
        %v583 = vpack.c.b16 %v582, %v581
        %v586 = vunpack.c.l.b16 %v570
        %v587 = vunpack.c.l.b16 %v571
        %v588 = vpack.c.b16 %v587, %v586
        %v589 = vrot.slane %v578, 6
        %v590 = vrot.slane %v583, 6
        %591 = vrot.lane.b32.xlu0 %v589, 112
        %v592 = vpop.permute.xlu0 %591
        %593 = vrot.lane.b32.xlu0 %v590, 112
        %v594 = vpop.permute.xlu0 %593
        %vm595 = vcmask 916480
        %v596 = vsel %vm595, %v592, %v594
        %v597 = vrot.slane %v583, 4
        %598 = vrot.lane.b32.xlu0 %v597, 96
        %v599 = vpop.permute.xlu0 %598
        %v600 = vrot.slane %v583, 2
        %v601 = vrot.slane %v588, 2
        %602 = vrot.lane.b32.xlu0 %v600, 80
        %v603 = vpop.permute.xlu0 %602
        %604 = vrot.lane.b32.xlu0 %v601, 80
        %v605 = vpop.permute.xlu0 %604
        %vm606 = vcmask 654336
        %v607 = vsel %vm606, %v603, %v605
        %608 = vrot.lane.b32.xlu0 %v583, 64
        %v609 = vpop.permute.xlu0 %608
        %610 = vrot.lane.b32.xlu0 %v588, 64
        %v611 = vpop.permute.xlu0 %610
        %vm612 = vcmask 523264
        %v613 = vsel %vm612, %v609, %v611
        %vm614 = vcmask 1041408
        %v617 = vsel %vm614, %v578, %v596
        %v620 = vsel %vm614, %v583, %v594
        %vm621 = vcmask 1043456
        %v623 = vsel %vm621, %v617, %v599
        %v624 = vsel %vm621, %v620, %v599
        %vm625 = vcmask 1045504
        %v627 = vsel %vm625, %v623, %v603
        %v629 = vsel %vm625, %v624, %v607
        %v630 = vld [vmem:[%s4] sm:$0x3]
        %633 = vrot.lane.b32.xlu0 %v627, 32
        %v634 = vpop.permute.xlu0 %633
        %635 = vrot.lane.b32.xlu0 %v629, 32
        %v636 = vpop.permute.xlu0 %635
        %637 = vrot.lane.b32.xlu0 %v609, 32
        %v638 = vpop.permute.xlu0 %637
        %639 = vrot.lane.b32.xlu0 %v613, 32
        %v640 = vpop.permute.xlu0 %639
        %vm641 = vcmask 261120
        %v642 = vsel %vm641, %v634, %v636
        %v643 = vsel %vm641, %v638, %v640
        %vm645 = vcmask 162816
        %v647 = vsel %vm645, %v630, 0
        %v650 = vsel %vm614, %v643, 0
        %652 = vmatprep.subr.bf16.mxu0 0
        %653 = vmatpush1.bf16.msra.mxu0 %v642
        %654 = vmatprep.subr.bf16.mxu0 0
        %655 = vmatpush1.bf16.msra.mxu0 %v650
        %656 = vmatprep.subr.bf16.mxu0 0
        %657 = vmatpush1.bf16.msra.mxu0 0
        %658 = vmatprep.subr.bf16.mxu0 0
        %659 = vmatpush1.bf16.msra.mxu0 0
        %660 = vmatprep.subr.bf16.mxu0 0
        %661 = vmatpush1.bf16.msra.mxu0 0
        %662 = vmatprep.subr.bf16.mxu0 0
        %663 = vmatpush1.bf16.msra.mxu0 0
        %664 = vmatprep.subr.bf16.mxu0 0
        %665 = vmatpush1.bf16.msra.mxu0 0
        %666 = vmatprep.subr.bf16.mxu0 0
        %667 = vmatpush1.bf16.msra.mxu0 0
        %668 = vmatprep.subr.bf16.mxu0 0
        %669 = vmatpush1.bf16.msra.mxu0 0
        %670 = vmatprep.subr.bf16.mxu0 0
        %671 = vmatpush1.bf16.msra.mxu0 0
        %672 = vmatprep.subr.bf16.mxu0 0
        %673 = vmatpush1.bf16.msra.mxu0 0
        %674 = vmatprep.subr.bf16.mxu0 0
        %675 = vmatpush1.bf16.msra.mxu0 0
        %676 = vmatprep.subr.bf16.mxu0 0
        %677 = vmatpush1.bf16.msra.mxu0 0
        %678 = vmatprep.subr.bf16.mxu0 0
        %679 = vmatpush1.bf16.msra.mxu0 0
        %680 = vmatprep.subr.bf16.mxu0 0
        %681 = vmatpush1.bf16.msra.mxu0 0
        %682 = vmatprep.subr.bf16.mxu0 0
        %683 = vmatpush1.bf16.msra.mxu0 0
        %684 = vmatprep.mubr.bf16.mxu0 0
        %685 = vmatmul.mubr.bf16.gmra.mrb[0].mxu0 %v647
        %v686 = vpop.f32.mrb[0].mxu0
        %v687 = vadd.f32 0.0, %v686
        %v688 = vpop.f32.mrb[0].mxu0
        %v689 = vpop.f32.mrb[0].mxu0
        %v690 = vpop.f32.mrb[0].mxu0
        %691 = vdwg.mxu0
        %v692 = vrot.slane %v578, 2
        %693 = vrot.lane.b32.xlu0 %v578, 96
        %v694 = vpop.permute.xlu0 %693
        %695 = vrot.lane.b32.xlu0 %v583, 96
        %v696 = vpop.permute.xlu0 %695
        %vm697 = vcmask 785408
        %v698 = vsel %vm697, %v694, %v696
        %699 = vrot.lane.b32.xlu0 %v590, 64
        %v700 = vpop.permute.xlu0 %699
        %v701 = vrot.slane %v588, 4
        %702 = vrot.lane.b32.xlu0 %v597, 32
        %v703 = vpop.permute.xlu0 %702
        %704 = vrot.lane.b32.xlu0 %v701, 32
        %v705 = vpop.permute.xlu0 %704
        %v706 = vsel %vm641, %v703, %v705
        %v709 = vsel %vm614, %v692, %v698
        %v712 = vsel %vm614, %v600, %v696
        %v714 = vsel %vm621, %v709, %v700
        %v715 = vsel %vm621, %v712, %v700
        %v717 = vsel %vm625, %v714, %v703
        %v719 = vsel %vm625, %v715, %v706
        %s720 = scalar_lea.vmem %s4, 2
        %v721 = vld [vmem:[%s720] sm:$0x3]
        %724 = vrot.lane.b32.xlu0 %v717, 64
        %v725 = vpop.permute.xlu0 %724
        %726 = vrot.lane.b32.xlu0 %v719, 64
        %v727 = vpop.permute.xlu0 %726
        %728 = vrot.lane.b32.xlu0 %v600, 64
        %v729 = vpop.permute.xlu0 %728
        %730 = vrot.lane.b32.xlu0 %v601, 64
        %v731 = vpop.permute.xlu0 %730
        %v732 = vsel %vm612, %v725, %v727
        %v733 = vsel %vm612, %v729, %v731
        %v736 = vsel %vm645, %v721, 0
        %v739 = vsel %vm614, %v733, 0
        %741 = vmatprep.subr.bf16.mxu0 0
        %742 = vmatpush1.bf16.msra.mxu0 %v732
        %743 = vmatprep.subr.bf16.mxu0 0
        %744 = vmatpush1.bf16.msra.mxu0 %v739
        %745 = vmatprep.subr.bf16.mxu0 0
        %746 = vmatpush1.bf16.msra.mxu0 0
        %747 = vmatprep.subr.bf16.mxu0 0
        %748 = vmatpush1.bf16.msra.mxu0 0
        %749 = vmatprep.subr.bf16.mxu0 0
        %750 = vmatpush1.bf16.msra.mxu0 0
        %751 = vmatprep.subr.bf16.mxu0 0
        %752 = vmatpush1.bf16.msra.mxu0 0
        %753 = vmatprep.subr.bf16.mxu0 0
        %754 = vmatpush1.bf16.msra.mxu0 0
        %755 = vmatprep.subr.bf16.mxu0 0
        %756 = vmatpush1.bf16.msra.mxu0 0
        %757 = vmatprep.subr.bf16.mxu0 0
        %758 = vmatpush1.bf16.msra.mxu0 0
        %759 = vmatprep.subr.bf16.mxu0 0
        %760 = vmatpush1.bf16.msra.mxu0 0
        %761 = vmatprep.subr.bf16.mxu0 0
        %762 = vmatpush1.bf16.msra.mxu0 0
        %763 = vmatprep.subr.bf16.mxu0 0
        %764 = vmatpush1.bf16.msra.mxu0 0
        %765 = vmatprep.subr.bf16.mxu0 0
        %766 = vmatpush1.bf16.msra.mxu0 0
        %767 = vmatprep.subr.bf16.mxu0 0
        %768 = vmatpush1.bf16.msra.mxu0 0
        %769 = vmatprep.subr.bf16.mxu0 0
        %770 = vmatpush1.bf16.msra.mxu0 0
        %771 = vmatprep.subr.bf16.mxu0 0
        %772 = vmatpush1.bf16.msra.mxu0 0
        %773 = vmatprep.mubr.bf16.mxu0 0
        %774 = vmatmul.mubr.bf16.gmra.mrb[0].mxu0 %v736
        %v775 = vpop.f32.mrb[0].mxu0
        %v776 = vadd.f32 0.0, %v775
        %v777 = vpop.f32.mrb[0].mxu0
        %v778 = vpop.f32.mrb[0].mxu0
        %v779 = vpop.f32.mrb[0].mxu0
        %780 = vdwg.mxu0
        %v781 = vrot.slane %v578, 4
        %v785 = vunpack.c.l.bf16 %v781
        %v786 = vunpack.c.l.bf16 %v597
        %v787 = vunpack.c.l.bf16 %v701
        %789 = vrot.lane.b32.xlu0 %v786, 112
        %v790 = vpop.permute.xlu0 %789
        %v792 = vmax.f32 %v785, %v790
        %v793 = vmax.f32 %v786, %v790
        %795 = vrot.lane.b32.xlu0 %v786, 96
        %v796 = vpop.permute.xlu0 %795
        %797 = vrot.lane.b32.xlu0 %v787, 96
        %v798 = vpop.permute.xlu0 %797
        %vm799 = vcmask 785408
        %v800 = vsel %vm799, %v796, %v798
        %v803 = vmax.f32 %v792, %v796
        %v804 = vmax.f32 %v793, %v800
        %v806 = vrot.slane %v776, 4
        %810 = vrot.lane.b32.xlu0 %v803, 16
        %v811 = vpop.permute.xlu0 %810
        %812 = vrot.lane.b32.xlu0 %v804, 16
        %v813 = vpop.permute.xlu0 %812
        %vm814 = vcmask 130048
        %v815 = vsel %vm814, %v811, %v813
        %v817 = vsel %vm621, %v687, %v806
        %v818 = vsel %vm621, %v815, %v786
        %v819 = vld [vmem:[%s6] sm:$0xff]
        %v820 = vld [vmem:[%s6 + $0x8] sm:$0xff]
        %822 = vset.pattern.permute.xlu0 0
        %823 = vperm.xlu0 %822, %v819
        %v824 = vpop.permute.xlu0 %823
        %827 = vset.pattern.permute.xlu0 0
        %828 = vperm.xlu0 %827, %v820
        %v829 = vpop.permute.xlu0 %828
        %v831 = vadd.f32 %v817, %v824
        %v832 = vadd.f32 %v818, %v829
        %833 = vset.pattern.permute.xlu0 1
        %834 = vperm.xlu0 %833, %v819
        %v835 = vpop.permute.xlu0 %834
        %837 = vset.pattern.permute.xlu0 1
        %838 = vperm.xlu0 %837, %v820
        %v839 = vpop.permute.xlu0 %838
        %v841 = vmul.f32 %v831, %v835
        %v842 = vmul.f32 %v832, %v839
        %843 = vset.pattern.permute.xlu0 2
        %844 = vperm.xlu0 %843, %v819
        %v845 = vpop.permute.xlu0 %844
        %847 = vset.pattern.permute.xlu0 2
        %848 = vperm.xlu0 %847, %v820
        %v849 = vpop.permute.xlu0 %848
        %v851 = vadd.f32 %v841, %v845
        %v852 = vadd.f32 %v842, %v849
        %v853 = vld [vmem:[%s5] sm:$0xf]
        %v854 = vld [vmem:[%s5 + $0x4] sm:$0xf]
        %v855 = vld [vmem:[%s528] sm:$0xff]
        %v856 = vpack.c.bf16 %v855, %v855
        %857 = vset.pattern.permute.xlu0 3
        %858 = vperm.xlu0 %857, %v819
        %v859 = vpop.permute.xlu0 %858
        %861 = vset.pattern.permute.xlu0 3
        %862 = vperm.xlu0 %861, %v820
        %v863 = vpop.permute.xlu0 %862
        %v867 = vunpack.c.l.b16 %v853
        %v868 = vunpack.c.l.b16 %v854
        %v869 = vpack.c.b16 %v868, %v867
        %vm870 = vcmask 64512
        %v872 = vsel %vm870, %v869, 0
        %v875 = vsel %vm621, %v856, 0
        %877 = vmatprep.subr.bf16.mxu0 0
        %878 = vmatpush1.bf16.msra.mxu0 %v875
        %879 = vmatprep.subr.bf16.mxu0 0
        %880 = vmatpush1.bf16.msra.mxu0 0
        %881 = vmatprep.subr.bf16.mxu0 0
        %882 = vmatpush1.bf16.msra.mxu0 0
        %883 = vmatprep.subr.bf16.mxu0 0
        %884 = vmatpush1.bf16.msra.mxu0 0
        %885 = vmatprep.subr.bf16.mxu0 0
        %886 = vmatpush1.bf16.msra.mxu0 0
        %887 = vmatprep.subr.bf16.mxu0 0
        %888 = vmatpush1.bf16.msra.mxu0 0
        %889 = vmatprep.subr.bf16.mxu0 0
        %890 = vmatpush1.bf16.msra.mxu0 0
        %891 = vmatprep.subr.bf16.mxu0 0
        %892 = vmatpush1.bf16.msra.mxu0 0
        %893 = vmatprep.subr.bf16.mxu0 0
        %894 = vmatpush1.bf16.msra.mxu0 0
        %895 = vmatprep.subr.bf16.mxu0 0
        %896 = vmatpush1.bf16.msra.mxu0 0
        %897 = vmatprep.subr.bf16.mxu0 0
        %898 = vmatpush1.bf16.msra.mxu0 0
        %899 = vmatprep.subr.bf16.mxu0 0
        %900 = vmatpush1.bf16.msra.mxu0 0
        %901 = vmatprep.subr.bf16.mxu0 0
        %902 = vmatpush1.bf16.msra.mxu0 0
        %903 = vmatprep.subr.bf16.mxu0 0
        %904 = vmatpush1.bf16.msra.mxu0 0
        %905 = vmatprep.subr.bf16.mxu0 0
        %906 = vmatpush1.bf16.msra.mxu0 0
        %907 = vmatprep.subr.bf16.mxu0 0
        %908 = vmatpush1.bf16.msra.mxu0 0
        %909 = vmatprep.mubr.bf16.mxu0 0
        %910 = vmatmul.mubr.bf16.gmra.mrb[0].mxu0 %v872
        %v911 = vpop.f32.mrb[0].mxu0
        %v912 = vadd.f32 %v859, %v911
        %v913 = vpop.f32.mrb[0].mxu0
        %v914 = vpop.f32.mrb[0].mxu0
        %v915 = vadd.f32 %v863, %v914
        %v916 = vpop.f32.mrb[0].mxu0
        %917 = vdwg.mxu0
        %918 = vset.pattern.permute.xlu0 4
        %919 = vperm.xlu0 %918, %v819
        %v920 = vpop.permute.xlu0 %919
        %922 = vset.pattern.permute.xlu0 4
        %923 = vperm.xlu0 %922, %v820
        %v924 = vpop.permute.xlu0 %923
        %v926 = vmul.f32 %v912, %v920
        %v927 = vmul.f32 %v915, %v924
        %928 = vset.pattern.permute.xlu0 5
        %929 = vperm.xlu0 %928, %v819
        %v930 = vpop.permute.xlu0 %929
        %932 = vset.pattern.permute.xlu0 5
        %933 = vperm.xlu0 %932, %v820
        %v934 = vpop.permute.xlu0 %933
        %v936 = vadd.f32 %v926, %v930
        %v937 = vadd.f32 %v927, %v934
        %v938 = vadd.f32 %v851, %v936
        %v939 = vadd.f32 %v852, %v937
        %v940 = vmax.f32 %v938, 0.0
        %v941 = vmax.f32 %v939, 0.0
        %942 = vst [vmem:[%s514] sm:$0xff] %v940
        %943 = vst [vmem:[%s514 + $0x8] sm:$0xff] %v941
        %s944 = sand.u32 %s227, 1
        %s945 = sand.u32 %s227, 1
        %s946 = smul.addr %s945, 16
        %s947 = scalar_lea.vmem [#allocation5], %s946
        // Predicated region
        $region172: #{mlp_tcn_unit_pallas.3} parent=158 // pred_check
          %p948 = pneg %p237
        $region173: #{mlp_tcn_unit_pallas.3} parent=158 // pred_check_branch
          %950 = sbr.rel (%p948) target = $region175
        $region174: #{mlp_tcn_unit_pallas.3} parent=158 // pred_region
          %s951 = smul.addr %s22, 4
          %s952 = sadd.s32 %s23, %s951
          %s953 = smul.addr %s952, 8
          %s954 = scalar_lea.vmem %s7, %s953
          // Predicated region
          $region176: #{mlp_tcn_unit_pallas.3} parent=174 // pred_check
            _
          $region177: #{mlp_tcn_unit_pallas.3} parent=174 // pred_check_branch
            %956 = sbr.rel (0) target = $region179
          $region178: #{mlp_tcn_unit_pallas.3} parent=174 // pred_region
            // Predicated region
            $region180: #{mlp_tcn_unit_pallas.3} parent=178 // pred_check
              _
            $region181: #{mlp_tcn_unit_pallas.3} parent=178 // pred_check_branch
              %958 = sbr.rel (0) target = $region183
            $region182: #{mlp_tcn_unit_pallas.3} parent=178 // pred_region
              // Predicated region
              $region195: #{mlp_tcn_unit_pallas.3} parent=182 // pred_check
                _
              $region196: #{mlp_tcn_unit_pallas.3} parent=182 // pred_check_branch
                %975 = sbr.rel (0) target = $region198
              $region197: #{mlp_tcn_unit_pallas.3} parent=182 // pred_region
                loop: start=0, step=1, limit=1
                $region199: #{mlp_tcn_unit_pallas.3} parent=197 // loop_pre_header
                  _
                $region200: #{mlp_tcn_unit_pallas.3} parent=197 // loop_header
                  %s977 = sphi 0, %s981
                  %p978 = scmp.ge.s32.totalorder %s977, 1
                  %s982 = sphi %s947, %s947
                  %s983 = sphi %s954, %s954
                $region201: #{mlp_tcn_unit_pallas.3} parent=197 // loop_header_branch
                  %980 = sbr.rel (%p978) target = $region205
                $region202: #{mlp_tcn_unit_pallas.3} parent=197 // loop_body
                  %v984 = vld [vmem:[%s982] sm:$0xff]
                  %985 = vst [vmem:[%s983] sm:$0xff] %v984
                  %v986 = vld [vmem:[%s982 + $0x8] sm:$0xff]
                  %987 = vst [vmem:[%s983 + $0x10] sm:$0xff] %v986
                $region203: #{mlp_tcn_unit_pallas.3} parent=197 // loop_footer
                  %s981 = sadd.s32 1, %s977
                $region204: #{mlp_tcn_unit_pallas.3} parent=197 // loop_footer_branch
                  %976 = sbr.rel target = $region200
                $region205: #{mlp_tcn_unit_pallas.3} parent=197 // loop_exit
                  _
              $region198: #{mlp_tcn_unit_pallas.3} parent=182 // pred_fallthru
                _
              // Predicated region
              $region206: #{mlp_tcn_unit_pallas.3} parent=182 // pred_check
                _
              $region207: #{mlp_tcn_unit_pallas.3} parent=182 // pred_check_branch
                %989 = sbr.rel target = $region209
              $region208: #{mlp_tcn_unit_pallas.3} parent=182 // pred_region
                _
              $region209: #{mlp_tcn_unit_pallas.3} parent=182 // pred_fallthru
                _
            $region183: #{mlp_tcn_unit_pallas.3} parent=178 // pred_fallthru
              _
            // Predicated region
            $region184: #{mlp_tcn_unit_pallas.3} parent=178 // pred_check
              _
            $region185: #{mlp_tcn_unit_pallas.3} parent=178 // pred_check_branch
              %960 = sbr.rel target = $region187
            $region186: #{mlp_tcn_unit_pallas.3} parent=178 // pred_region
              loop: start=0, step=1, limit=1
              $region188: #{mlp_tcn_unit_pallas.3} parent=186 // loop_pre_header
                _
              $region189: #{mlp_tcn_unit_pallas.3} parent=186 // loop_header
                %s963 = sphi 0, %s967
                %p964 = scmp.ge.s32.totalorder %s963, 1
                %s968 = sphi %s947, %s947
                %s969 = sphi %s954, %s954
              $region190: #{mlp_tcn_unit_pallas.3} parent=186 // loop_header_branch
                %966 = sbr.rel (%p964) target = $region194
              $region191: #{mlp_tcn_unit_pallas.3} parent=186 // loop_body
                %v970 = vld [vmem:[%s968] sm:$0xff]
                %971 = vst [vmem:[%s969] sm:$0xff] %v970
                %v972 = vld [vmem:[%s968 + $0x8] sm:$0xff]
                %973 = vst [vmem:[%s969 + $0x10] sm:$0xff] %v972
              $region192: #{mlp_tcn_unit_pallas.3} parent=186 // loop_footer
                %s967 = sadd.s32 1, %s963
              $region193: #{mlp_tcn_unit_pallas.3} parent=186 // loop_footer_branch
                %962 = sbr.rel target = $region189
              $region194: #{mlp_tcn_unit_pallas.3} parent=186 // loop_exit
                _
            $region187: #{mlp_tcn_unit_pallas.3} parent=178 // pred_fallthru
              _
          $region179: #{mlp_tcn_unit_pallas.3} parent=174 // pred_fallthru
            _
          %990 = vnop
        $region175: #{mlp_tcn_unit_pallas.3} parent=158 // pred_fallthru
          _
      $region159: #{mlp_tcn_unit_pallas.3} parent=5 // pred_fallthru
        _
      %p991 = scmp.le.s32.totalorder 2, %s13
      // Predicated region
      $region210: #{mlp_tcn_unit_pallas.3} parent=5 // pred_check
        %p992 = pneg %p991
      $region211: #{mlp_tcn_unit_pallas.3} parent=5 // pred_check_branch
        %994 = sbr.rel (%p992) target = $region213
      $region212: #{mlp_tcn_unit_pallas.3} parent=5 // pred_region
        %s995 = ssub.s32 %s13, 2
        // Predicated region
        $region214: #{mlp_tcn_unit_pallas.3} parent=212 // pred_check
          %p996 = pneg %p243
        $region215: #{mlp_tcn_unit_pallas.3} parent=212 // pred_check_branch
          %998 = sbr.rel (%p996) target = $region217
        $region216: #{mlp_tcn_unit_pallas.3} parent=212 // pred_region
          %s999 = sand.u32 %s228, 1
          %s1000 = sand.u32 %s228, 1
          %s1001 = smul.addr %s1000, 16
          %s1002 = scalar_lea.vmem [#allocation5], %s1001
        $region217: #{mlp_tcn_unit_pallas.3} parent=212 // pred_fallthru
          _
      $region213: #{mlp_tcn_unit_pallas.3} parent=5 // pred_fallthru
        _
    $region6: #{mlp_tcn_unit_pallas.3} parent=1 // loop_footer
      %s17 = sadd.s32 1, %s13
    $region7: #{mlp_tcn_unit_pallas.3} parent=1 // loop_footer_branch
      %12 = sbr.rel target = $region3
    $region8: #{mlp_tcn_unit_pallas.3} parent=1 // loop_exit
      _

// kernel: mlp_tcn_unit_pallas.2
$region0: #{mlp_tcn_unit_pallas.2}
  #allocation0 [shape = 'u32[]', space=smem, size = 0x4, offset = 0x4, fixed_abs, tag = 'smem constant byte address 0x4 - core index']
  #allocation1 [shape = 'u32[144,128]{1,0:T(1,128)}', space=vmem, size = 0x12000, scoped, tag = 'internal scratch']
  %s0 = inlined_call_operand.vmem [shape: f32[2,8,256], index: 0, kind: input, shape index: {}]
  %s1 = inlined_call_operand.vmem [shape: bf16[16,8], index: 1, kind: input, shape index: {}]
  %s2 = inlined_call_operand.vmem [shape: f32[16,4], index: 2, kind: input, shape index: {}]
  %s3 = inlined_call_operand.vmem [shape: bf16[4,128,128], index: 3, kind: input, shape index: {}]
  %s4 = inlined_call_operand.vmem [shape: bf16[4,128,128], index: 4, kind: input, shape index: {}]
  %s5 = inlined_call_operand.vmem [shape: bf16[8,8], index: 5, kind: input, shape index: {}]
  %s6 = inlined_call_operand.vmem [shape: bf16[16,8], index: 6, kind: input, shape index: {}]
  %s7 = inlined_call_operand.vmem [shape: f32[16,4], index: 7, kind: input, shape index: {}]
  %s8 = inlined_call_operand.vmem [shape: bf16[2,16,256], index: 8, kind: output, shape index: {}]
  %s9 = sld [smem:[#allocation0]]
  $region102: #{mlp_tcn_unit_pallas.2} parent=0
    _
  %s11 = ssub.s32 1, %s9
  %s12 = scalar_select 0, %s11, %s9
  $region1: #{mlp_tcn_unit_pallas.2} parent=0
    #allocation2 [shape = 'u8[8192]{0}', space=vmem, size = 0x2000, scoped, tag = 'output window, operand 0']
    loop: start=0, step=1, limit=6
    $region2: #{mlp_tcn_unit_pallas.2} parent=1 // loop_pre_header
      _
    $region3: #{mlp_tcn_unit_pallas.2} parent=1 // loop_header
      %s14 = sphi 0, %s18
      %p15 = scmp.ge.s32.totalorder %s14, 6
      %s21 = sphi 0, %s33
      %s22 = sphi 0, %s29
      %s23 = sphi 0, %s21
      %s24 = sphi 0, %s22
      %s25 = sphi 0, %s23
      %s26 = sphi 0, %s24
      %s38 = sphi 0, %s40
      %s41 = sphi 0, %s38
      %s42 = sphi 0, %s41
      %s58 = sphi 0, %s42
      %s62 = sphi 0, %s62
      %s64 = sphi 0, %s62
      %s65 = sphi 0, %s64
      %s79 = sphi 0, %s65
      %s83 = sphi 0, %s83
      %s85 = sphi 0, %s83
      %s86 = sphi 0, %s85
      %s100 = sphi 0, %s86
      %s104 = sphi 0, %s104
      %s106 = sphi 0, %s104
      %s107 = sphi 0, %s106
      %s121 = sphi 0, %s107
      %s125 = sphi 0, %s125
      %s127 = sphi 0, %s125
      %s128 = sphi 0, %s127
      %s142 = sphi 0, %s128
      %s146 = sphi 0, %s146
      %s148 = sphi 0, %s146
      %s149 = sphi 0, %s148
      %s163 = sphi 0, %s149
      %s167 = sphi 0, %s167
      %s169 = sphi 0, %s167
      %s170 = sphi 0, %s169
      %s184 = sphi 0, %s170
      %s188 = sphi 0, %s188
      %s190 = sphi 0, %s188
      %s191 = sphi 0, %s190
      %s205 = sphi 0, %s191
      %s213 = sphi 0, %s215
      %s216 = sphi 0, %s213
      %s217 = sphi 0, %s216
      %s233 = sphi 0, %s217
    $region4: #{mlp_tcn_unit_pallas.2} parent=1 // loop_header_branch
      %17 = sbr.rel (%p15) target = $region8
    $region5: #{mlp_tcn_unit_pallas.2} parent=1 // loop_body
      %s19 = ssub.s32 %s14, 1
      %s20 = ssub.s32 %s14, 2
      %s27 = sadd.s32 1, %s22
      %p28 = scmp.ge.s32.totalorder %s27, 2
      %s29 = scalar_select %p28, 0, %s27
      %s30 = sadd.s32 1, %s21
      %s31 = scalar_select %p28, %s30, %s21
      %p32 = scmp.ge.s32.totalorder %s31, 2
      %s33 = scalar_select %p32, 0, %s31
      %s34 = ssub.s32 %s21, %s33
      %s35 = ssub.s32 %s22, %s29
      %s36 = sor.u32 %s34, %s35
      %p37 = scmp.eq.s32.totalorder %s36, 0
      %s39 = sadd.s32 %s38, 1
      %s40 = scalar_select %p37, %s38, %s39
      %p43 = pneg %p37
      %p44 = scmp.eq.s32.totalorder %s14, 3
      %p45 = por %p43, %p44
      %p46 = scmp.ne.s32.totalorder %s38, %s41
      %p47 = scmp.eq.s32.totalorder %s14, 0
      %p48 = por %p46, %p47
      %p49 = scmp.ne.s32.totalorder %s38, %s41
      %p50 = scmp.eq.s32.totalorder %s19, 3
      %p51 = por %p49, %p50
      %p52 = scmp.ne.s32.totalorder %s41, %s42
      %p53 = scmp.eq.s32.totalorder %s19, 0
      %p54 = por %p52, %p53
      %p55 = scmp.ne.s32.totalorder %s41, %s42
      %p56 = scmp.eq.s32.totalorder %s20, 3
      %p57 = por %p55, %p56
      %p59 = scmp.ne.s32.totalorder %s42, %s58
      %p60 = scmp.eq.s32.totalorder %s20, 0
      %p61 = por %p59, %p60
      %s63 = sadd.s32 %s62, 1
      %p66 = scmp.eq.s32.totalorder %s14, 3
      %p67 = scmp.ne.s32.totalorder %s62, %s64
      %p68 = scmp.eq.s32.totalorder %s14, 0
      %p69 = por %p67, %p68
      %p70 = scmp.ne.s32.totalorder %s62, %s64
      %p71 = scmp.eq.s32.totalorder %s19, 3
      %p72 = por %p70, %p71
      %p73 = scmp.ne.s32.totalorder %s64, %s65
      %p74 = scmp.eq.s32.totalorder %s19, 0
      %p75 = por %p73, %p74
      %p76 = scmp.ne.s32.totalorder %s64, %s65
      %p77 = scmp.eq.s32.totalorder %s20, 3
      %p78 = por %p76, %p77
      %p80 = scmp.ne.s32.totalorder %s65, %s79
      %p81 = scmp.eq.s32.totalorder %s20, 0
      %p82 = por %p80, %p81
      %s84 = sadd.s32 %s83, 1
      %p87 = scmp.eq.s32.totalorder %s14, 3
      %p88 = scmp.ne.s32.totalorder %s83, %s85
      %p89 = scmp.eq.s32.totalorder %s14, 0
      %p90 = por %p88, %p89
      %p91 = scmp.ne.s32.totalorder %s83, %s85
      %p92 = scmp.eq.s32.totalorder %s19, 3
      %p93 = por %p91, %p92
      %p94 = scmp.ne.s32.totalorder %s85, %s86
      %p95 = scmp.eq.s32.totalorder %s19, 0
      %p96 = por %p94, %p95
      %p97 = scmp.ne.s32.totalorder %s85, %s86
      %p98 = scmp.eq.s32.totalorder %s20, 3
      %p99 = por %p97, %p98
      %p101 = scmp.ne.s32.totalorder %s86, %s100
      %p102 = scmp.eq.s32.totalorder %s20, 0
      %p103 = por %p101, %p102
      %s105 = sadd.s32 %s104, 1
      %p108 = scmp.eq.s32.totalorder %s14, 3
      %p109 = scmp.ne.s32.totalorder %s104, %s106
      %p110 = scmp.eq.s32.totalorder %s14, 0
      %p111 = por %p109, %p110
      %p112 = scmp.ne.s32.totalorder %s104, %s106
      %p113 = scmp.eq.s32.totalorder %s19, 3
      %p114 = por %p112, %p113
      %p115 = scmp.ne.s32.totalorder %s106, %s107
      %p116 = scmp.eq.s32.totalorder %s19, 0
      %p117 = por %p115, %p116
      %p118 = scmp.ne.s32.totalorder %s106, %s107
      %p119 = scmp.eq.s32.totalorder %s20, 3
      %p120 = por %p118, %p119
      %p122 = scmp.ne.s32.totalorder %s107, %s121
      %p123 = scmp.eq.s32.totalorder %s20, 0
      %p124 = por %p122, %p123
      %s126 = sadd.s32 %s125, 1
      %p129 = scmp.eq.s32.totalorder %s14, 3
      %p130 = scmp.ne.s32.totalorder %s125, %s127
      %p131 = scmp.eq.s32.totalorder %s14, 0
      %p132 = por %p130, %p131
      %p133 = scmp.ne.s32.totalorder %s125, %s127
      %p134 = scmp.eq.s32.totalorder %s19, 3
      %p135 = por %p133, %p134
      %p136 = scmp.ne.s32.totalorder %s127, %s128
      %p137 = scmp.eq.s32.totalorder %s19, 0
      %p138 = por %p136, %p137
      %p139 = scmp.ne.s32.totalorder %s127, %s128
      %p140 = scmp.eq.s32.totalorder %s20, 3
      %p141 = por %p139, %p140
      %p143 = scmp.ne.s32.totalorder %s128, %s142
      %p144 = scmp.eq.s32.totalorder %s20, 0
      %p145 = por %p143, %p144
      %s147 = sadd.s32 %s146, 1
      %p150 = scmp.eq.s32.totalorder %s14, 3
      %p151 = scmp.ne.s32.totalorder %s146, %s148
      %p152 = scmp.eq.s32.totalorder %s14, 0
      %p153 = por %p151, %p152
      %p154 = scmp.ne.s32.totalorder %s146, %s148
      %p155 = scmp.eq.s32.totalorder %s19, 3
      %p156 = por %p154, %p155
      %p157 = scmp.ne.s32.totalorder %s148, %s149
      %p158 = scmp.eq.s32.totalorder %s19, 0
      %p159 = por %p157, %p158
      %p160 = scmp.ne.s32.totalorder %s148, %s149
      %p161 = scmp.eq.s32.totalorder %s20, 3
      %p162 = por %p160, %p161
      %p164 = scmp.ne.s32.totalorder %s149, %s163
      %p165 = scmp.eq.s32.totalorder %s20, 0
      %p166 = por %p164, %p165
      %s168 = sadd.s32 %s167, 1
      %p171 = scmp.eq.s32.totalorder %s14, 3
      %p172 = scmp.ne.s32.totalorder %s167, %s169
      %p173 = scmp.eq.s32.totalorder %s14, 0
      %p174 = por %p172, %p173
      %p175 = scmp.ne.s32.totalorder %s167, %s169
      %p176 = scmp.eq.s32.totalorder %s19, 3
      %p177 = por %p175, %p176
      %p178 = scmp.ne.s32.totalorder %s169, %s170
      %p179 = scmp.eq.s32.totalorder %s19, 0
      %p180 = por %p178, %p179
      %p181 = scmp.ne.s32.totalorder %s169, %s170
      %p182 = scmp.eq.s32.totalorder %s20, 3
      %p183 = por %p181, %p182
      %p185 = scmp.ne.s32.totalorder %s170, %s184
      %p186 = scmp.eq.s32.totalorder %s20, 0
      %p187 = por %p185, %p186
      %s189 = sadd.s32 %s188, 1
      %p192 = scmp.eq.s32.totalorder %s14, 3
      %p193 = scmp.ne.s32.totalorder %s188, %s190
      %p194 = scmp.eq.s32.totalorder %s14, 0
      %p195 = por %p193, %p194
      %p196 = scmp.ne.s32.totalorder %s188, %s190
      %p197 = scmp.eq.s32.totalorder %s19, 3
      %p198 = por %p196, %p197
      %p199 = scmp.ne.s32.totalorder %s190, %s191
      %p200 = scmp.eq.s32.totalorder %s19, 0
      %p201 = por %p199, %p200
      %p202 = scmp.ne.s32.totalorder %s190, %s191
      %p203 = scmp.eq.s32.totalorder %s20, 3
      %p204 = por %p202, %p203
      %p206 = scmp.ne.s32.totalorder %s191, %s205
      %p207 = scmp.eq.s32.totalorder %s20, 0
      %p208 = por %p206, %p207
      %s209 = ssub.s32 %s21, %s33
      %s210 = ssub.s32 %s22, %s29
      %s211 = sor.u32 %s209, %s210
      %p212 = scmp.eq.s32.totalorder %s211, 0
      %s214 = sadd.s32 %s213, 1
      %s215 = scalar_select %p212, %s213, %s214
      %p218 = pneg %p212
      %p219 = scmp.eq.s32.totalorder %s14, 3
      %p220 = por %p218, %p219
      %p221 = scmp.ne.s32.totalorder %s213, %s216
      %p222 = scmp.eq.s32.totalorder %s14, 0
      %p223 = por %p221, %p222
      %p224 = scmp.ne.s32.totalorder %s213, %s216
      %p225 = scmp.eq.s32.totalorder %s19, 3
      %p226 = por %p224, %p225
      %p227 = scmp.ne.s32.totalorder %s216, %s217
      %p228 = scmp.eq.s32.totalorder %s19, 0
      %p229 = por %p227, %p228
      %p230 = scmp.ne.s32.totalorder %s216, %s217
      %p231 = scmp.eq.s32.totalorder %s20, 3
      %p232 = por %p230, %p231
      %p234 = scmp.ne.s32.totalorder %s217, %s233
      %p235 = scmp.eq.s32.totalorder %s20, 0
      %p236 = por %p234, %p235
      %p237 = scmp.le.s32.totalorder 1, %s14
      %p238 = scmp.lt.s32.totalorder %s14, 5
      %p239 = pnand %p237, %p238
      %p240 = pneg %p239
      // Predicated region
      $region9: #{mlp_tcn_unit_pallas.2} parent=5 // pred_check
        _
      $region10: #{mlp_tcn_unit_pallas.2} parent=5 // pred_check_branch
        %242 = sbr.rel (%p239) target = $region12
      $region11: #{mlp_tcn_unit_pallas.2} parent=5 // pred_region
        %s243 = ssub.s32 %s14, 1
        // Predicated region
        $region13: #{mlp_tcn_unit_pallas.2} parent=11 // pred_check
          %p244 = pneg %p75
        $region14: #{mlp_tcn_unit_pallas.2} parent=11 // pred_check_branch
          %246 = sbr.rel (%p244) target = $region16
        $region15: #{mlp_tcn_unit_pallas.2} parent=11 // pred_region
          _
        $region16: #{mlp_tcn_unit_pallas.2} parent=11 // pred_fallthru
          _
        // Predicated region
        $region17: #{mlp_tcn_unit_pallas.2} parent=11 // pred_check
          %p247 = pneg %p96
        $region18: #{mlp_tcn_unit_pallas.2} parent=11 // pred_check_branch
          %249 = sbr.rel (%p247) target = $region20
        $region19: #{mlp_tcn_unit_pallas.2} parent=11 // pred_region
          _
        $region20: #{mlp_tcn_unit_pallas.2} parent=11 // pred_fallthru
          _
        // Predicated region
        $region21: #{mlp_tcn_unit_pallas.2} parent=11 // pred_check
          %p250 = pneg %p117
        $region22: #{mlp_tcn_unit_pallas.2} parent=11 // pred_check_branch
          %252 = sbr.rel (%p250) target = $region24
        $region23: #{mlp_tcn_unit_pallas.2} parent=11 // pred_region
          _
        $region24: #{mlp_tcn_unit_pallas.2} parent=11 // pred_fallthru
          _
        // Predicated region
        $region25: #{mlp_tcn_unit_pallas.2} parent=11 // pred_check
          %p253 = pneg %p138
        $region26: #{mlp_tcn_unit_pallas.2} parent=11 // pred_check_branch
          %255 = sbr.rel (%p253) target = $region28
        $region27: #{mlp_tcn_unit_pallas.2} parent=11 // pred_region
          _
        $region28: #{mlp_tcn_unit_pallas.2} parent=11 // pred_fallthru
          _
        // Predicated region
        $region29: #{mlp_tcn_unit_pallas.2} parent=11 // pred_check
          %p256 = pneg %p159
        $region30: #{mlp_tcn_unit_pallas.2} parent=11 // pred_check_branch
          %258 = sbr.rel (%p256) target = $region32
        $region31: #{mlp_tcn_unit_pallas.2} parent=11 // pred_region
          _
        $region32: #{mlp_tcn_unit_pallas.2} parent=11 // pred_fallthru
          _
        // Predicated region
        $region33: #{mlp_tcn_unit_pallas.2} parent=11 // pred_check
          %p259 = pneg %p180
        $region34: #{mlp_tcn_unit_pallas.2} parent=11 // pred_check_branch
          %261 = sbr.rel (%p259) target = $region36
        $region35: #{mlp_tcn_unit_pallas.2} parent=11 // pred_region
          _
        $region36: #{mlp_tcn_unit_pallas.2} parent=11 // pred_fallthru
          _
        // Predicated region
        $region37: #{mlp_tcn_unit_pallas.2} parent=11 // pred_check
          %p262 = pneg %p201
        $region38: #{mlp_tcn_unit_pallas.2} parent=11 // pred_check_branch
          %264 = sbr.rel (%p262) target = $region40
        $region39: #{mlp_tcn_unit_pallas.2} parent=11 // pred_region
          _
        $region40: #{mlp_tcn_unit_pallas.2} parent=11 // pred_fallthru
          _
      $region12: #{mlp_tcn_unit_pallas.2} parent=5 // pred_fallthru
        _
      %p265 = scmp.lt.s32.totalorder %s14, 4
      // Predicated region
      $region41: #{mlp_tcn_unit_pallas.2} parent=5 // pred_check
        %p266 = pneg %p265
      $region42: #{mlp_tcn_unit_pallas.2} parent=5 // pred_check_branch
        %268 = sbr.rel (%p266) target = $region44
      $region43: #{mlp_tcn_unit_pallas.2} parent=5 // pred_region
        // Predicated region
        $region45: #{mlp_tcn_unit_pallas.2} parent=43 // pred_check
          %p269 = pneg %p48
        $region46: #{mlp_tcn_unit_pallas.2} parent=43 // pred_check_branch
          %271 = sbr.rel (%p269) target = $region48
        $region47: #{mlp_tcn_unit_pallas.2} parent=43 // pred_region
          %p272 = scmp.lt.s32.totalorder %s21, 1
          %s273 = scalar_select %p272, %s21, 1
          %p274 = scmp.lt.s32.totalorder %s22, 1
          %s275 = scalar_select %p274, %s22, 1
          %s276 = smul.addr %s273, 2
          %s277 = sadd.s32 %s275, %s276
          %s278 = smul.addr %s277, 8
          %s279 = scalar_lea.vmem %s0, %s278
        $region48: #{mlp_tcn_unit_pallas.2} parent=43 // pred_fallthru
          _
      $region44: #{mlp_tcn_unit_pallas.2} parent=5 // pred_fallthru
        _
      %p280 = scmp.le.s32.totalorder 1, %s14
      %p281 = scmp.lt.s32.totalorder %s14, 5
      %p282 = pnand %p280, %p281
      %p283 = pneg %p282
      // Predicated region
      $region49: #{mlp_tcn_unit_pallas.2} parent=5 // pred_check
        _
      $region50: #{mlp_tcn_unit_pallas.2} parent=5 // pred_check_branch
        %285 = sbr.rel (%p282) target = $region52
      $region51: #{mlp_tcn_unit_pallas.2} parent=5 // pred_region
        %s286 = ssub.s32 %s14, 1
        %p287 = scmp.lt.s32.totalorder %s23, 1
        %s288 = scalar_select %p287, %s23, 1
        %p289 = scmp.lt.s32.totalorder %s24, 1
        %s290 = scalar_select %p289, %s24, 1
        %s291 = smul.addr %s288, 2
        %s292 = sadd.s32 %s290, %s291
        %s293 = smul.addr %s292, 8
        %s294 = scalar_lea.vmem %s0, %s293
        %p295 = pneg %p54
        %p296 = pneg %p51
        %p297 = pneg %p75
        %p298 = pneg %p72
        %p299 = pneg %p96
        %p300 = pneg %p93
        %p301 = pneg %p117
        %p302 = pneg %p114
        %p303 = pneg %p138
        %p304 = pneg %p135
        %p305 = pneg %p159
        %p306 = pneg %p156
        %p307 = pneg %p180
        %p308 = pneg %p177
        %p309 = pneg %p201
        %p310 = pneg %p198
        %p311 = pneg %p229
        %p312 = pneg %p226
        %s313 = sand.u32 %s216, 1
        %s314 = sand.u32 %s216, 1
        %s315 = smul.addr %s314, 8
        %s316 = scalar_lea.vmem [#allocation2], %s315
        %p317 = scmp.lt.s32.totalorder %s23, 1
        %s318 = scalar_select %p317, %s23, 1
        %p319 = scmp.lt.s32.totalorder %s24, 1
        %s320 = scalar_select %p319, %s24, 1
        %s321 = smul.addr %s318, 2
        %s322 = sadd.s32 %s320, %s321
        %s323 = smul.addr %s322, 8
        %s324 = scalar_lea.vmem %s0, %s323
        %v326 = vld [vmem:[%s324] sm:$0xff]
        %v327 = vpack.c.bf16 %v326, %v326
        %v328 = vld [vmem:[%s1] sm:$0xf]
        %v329 = vld [vmem:[%s1 + $0x4] sm:$0xf]
        %v330 = vld [vmem:[%s2] sm:$0xff]
        %v331 = vld [vmem:[%s2 + $0x8] sm:$0xff]
        %333 = vset.pattern.permute.xlu0 0
        %334 = vperm.xlu0 %333, %v330
        %v335 = vpop.permute.xlu0 %334
        %338 = vset.pattern.permute.xlu0 0
        %339 = vperm.xlu0 %338, %v331
        %v340 = vpop.permute.xlu0 %339
        %v344 = vunpack.c.l.b16 %v328
        %v345 = vunpack.c.l.b16 %v329
        %v346 = vpack.c.b16 %v345, %v344
        %vm347 = vcmask 64512
        %v349 = vsel %vm347, %v346, 0
        %vm351 = vcmask 1043456
        %v353 = vsel %vm351, %v327, 0
        %355 = vmatprep.subr.bf16.mxu0 0
        %356 = vmatpush1.bf16.msra.mxu0 %v353
        %357 = vmatprep.subr.bf16.mxu0 0
        %358 = vmatpush1.bf16.msra.mxu0 0
        %359 = vmatprep.subr.bf16.mxu0 0
        %360 = vmatpush1.bf16.msra.mxu0 0
        %361 = vmatprep.subr.bf16.mxu0 0
        %362 = vmatpush1.bf16.msra.mxu0 0
        %363 = vmatprep.subr.bf16.mxu0 0
        %364 = vmatpush1.bf16.msra.mxu0 0
        %365 = vmatprep.subr.bf16.mxu0 0
        %366 = vmatpush1.bf16.msra.mxu0 0
        %367 = vmatprep.subr.bf16.mxu0 0
        %368 = vmatpush1.bf16.msra.mxu0 0
        %369 = vmatprep.subr.bf16.mxu0 0
        %370 = vmatpush1.bf16.msra.mxu0 0
        %371 = vmatprep.subr.bf16.mxu0 0
        %372 = vmatpush1.bf16.msra.mxu0 0
        %373 = vmatprep.subr.bf16.mxu0 0
        %374 = vmatpush1.bf16.msra.mxu0 0
        %375 = vmatprep.subr.bf16.mxu0 0
        %376 = vmatpush1.bf16.msra.mxu0 0
        %377 = vmatprep.subr.bf16.mxu0 0
        %378 = vmatpush1.bf16.msra.mxu0 0
        %379 = vmatprep.subr.bf16.mxu0 0
        %380 = vmatpush1.bf16.msra.mxu0 0
        %381 = vmatprep.subr.bf16.mxu0 0
        %382 = vmatpush1.bf16.msra.mxu0 0
        %383 = vmatprep.subr.bf16.mxu0 0
        %384 = vmatpush1.bf16.msra.mxu0 0
        %385 = vmatprep.subr.bf16.mxu0 0
        %386 = vmatpush1.bf16.msra.mxu0 0
        %387 = vmatprep.mubr.bf16.mxu0 0
        %388 = vmatmul.mubr.bf16.gmra.mrb[0].mxu0 %v349
        %v389 = vpop.f32.mrb[0].mxu0
        %v390 = vadd.f32 %v335, %v389
        %v391 = vpop.f32.mrb[0].mxu0
        %v392 = vpop.f32.mrb[0].mxu0
        %v393 = vadd.f32 %v340, %v392
        %v394 = vpop.f32.mrb[0].mxu0
        %395 = vdwg.mxu0
        %v396 = vmul.f32 %v390, 0.5
        %v397 = vmul.f32 %v393, 0.5
        %v398 = vmul.f32 %v390, 0.70710677
        %v399 = vmul.f32 %v393, 0.70710677
        %v400 = vand.u32 2147483647, %v398
        %v401 = vand.u32 2147483647, %v399
        %v402 = vmul.f32 %v400, 0.3275911
        %v403 = vmul.f32 %v401, 0.3275911
        %v404 = vadd.f32 %v402, 1.0
        %v405 = vadd.f32 %v403, 1.0
        %v406 = vrcp.pop %v404
        %v407 = vmul.f32 1.0, %v406
        %v408 = vrcp.pop %v405
        %v409 = vmul.f32 1.0, %v408
        %v410 = vmul.f32 %v407, 1.0614054
        %v411 = vmul.f32 %v409, 1.0614054
        %v412 = vsub.f32 %v410, 1.4531521
        %v413 = vsub.f32 %v411, 1.4531521
        %v414 = vmul.f32 %v412, %v407
        %v415 = vmul.f32 %v413, %v409
        %v416 = vadd.f32 %v414, 1.4214138
        %v417 = vadd.f32 %v415, 1.4214138
        %v418 = vmul.f32 %v416, %v407
        %v419 = vmul.f32 %v417, %v409
        %v420 = vsub.f32 %v418, 0.28449672
        %v421 = vsub.f32 %v419, 0.28449672
        %v422 = vmul.f32 %v420, %v407
        %v423 = vmul.f32 %v421, %v409
        %v424 = vadd.f32 %v422, 0.2548296
        %v425 = vadd.f32 %v423, 0.2548296
        %v426 = vmul.f32 %v424, %v407
        %v427 = vmul.f32 %v425, %v409
        %v428 = vsub.f32 0.0, %v400
        %v429 = vsub.f32 0.0, %v401
        %v430 = vmul.f32 %v428, %v400
        %v431 = vmul.f32 %v429, %v401
        %v432 = vmul.f32 %v430, 1.442695
        %v433 = vpow.pop %v432
        %v434 = vmul.f32 %v431, 1.442695
        %v435 = vpow.pop %v434
        %v436 = vmul.f32 %v426, %v433
        %v437 = vmul.f32 %v427, %v435
        %v438 = vsub.f32 1.0, %v436
        %v439 = vsub.f32 1.0, %v437
        %vm440 = vcmp.lt.f32.partialorder %v398, 0.0
        %vm441 = vcmp.lt.f32.partialorder %v399, 0.0
        %v442 = vsub.f32 0.0, %v438
        %v443 = vsub.f32 0.0, %v439
        %v444 = vsel %vm440, %v442, %v438
        %v445 = vsel %vm441, %v443, %v439
        %v446 = vadd.f32 %v444, 1.0
        %v447 = vadd.f32 %v445, 1.0
        %v448 = vmul.f32 %v396, %v446
        %v449 = vmul.f32 %v397, %v447
        %450 = vset.pattern.permute.xlu0 1
        %451 = vperm.xlu0 %450, %v330
        %v452 = vpop.permute.xlu0 %451
        %454 = vset.pattern.permute.xlu0 1
        %455 = vperm.xlu0 %454, %v331
        %v456 = vpop.permute.xlu0 %455
        %v458 = vmul.f32 %v448, %v452
        %v459 = vmul.f32 %v449, %v456
        %460 = vset.pattern.permute.xlu0 2
        %461 = vperm.xlu0 %460, %v330
        %v462 = vpop.permute.xlu0 %461
        %464 = vset.pattern.permute.xlu0 2
        %465 = vperm.xlu0 %464, %v331
        %v466 = vpop.permute.xlu0 %465
        %v468 = vadd.f32 %v458, %v462
        %v469 = vadd.f32 %v459, %v466
        %v470 = vpack.c.bf16 %v469, %v468
        %v471 = vld [vmem:[%s3] sm:$0xf]
        %v472 = vld [vmem:[%s3 + $0x4] sm:$0xf]
        %v473 = vld [vmem:[%s3 + $0x8] sm:$0xf]
        %v474 = vld [vmem:[%s3 + $0xc] sm:$0xf]
        %v475 = vld [vmem:[%s3 + $0x10] sm:$0xf]
        %v476 = vld [vmem:[%s3 + $0x14] sm:$0xf]
        %v477 = vld [vmem:[%s3 + $0x18] sm:$0xf]
        %v478 = vld [vmem:[%s3 + $0x1c] sm:$0xf]
        %v479 = vld [vmem:[%s3 + $0x20] sm:$0xf]
        %v480 = vld [vmem:[%s3 + $0x24] sm:$0xf]
        %v481 = vld [vmem:[%s3 + $0x28] sm:$0xf]
        %v482 = vld [vmem:[%s3 + $0x2c] sm:$0xf]
        %v483 = vld [vmem:[%s3 + $0x30] sm:$0xf]
        %v484 = vld [vmem:[%s3 + $0x34] sm:$0xf]
        %v485 = vld [vmem:[%s3 + $0x38] sm:$0xf]
        %v486 = vld [vmem:[%s3 + $0x3c] sm:$0xf]
        %v487 = vld [vmem:[%s4] sm:$0xf]
        %v488 = vld [vmem:[%s4 + $0x4] sm:$0xf]
        %v489 = vld [vmem:[%s4 + $0x8] sm:$0xf]
        %v490 = vld [vmem:[%s4 + $0xc] sm:$0xf]
        %v491 = vld [vmem:[%s4 + $0x10] sm:$0xf]
        %v492 = vld [vmem:[%s4 + $0x14] sm:$0xf]
        %v493 = vld [vmem:[%s4 + $0x18] sm:$0xf]
        %v494 = vld [vmem:[%s4 + $0x1c] sm:$0xf]
        %v495 = vld [vmem:[%s4 + $0x20] sm:$0xf]
        %v496 = vld [vmem:[%s4 + $0x24] sm:$0xf]
        %v497 = vld [vmem:[%s4 + $0x28] sm:$0xf]
        %v498 = vld [vmem:[%s4 + $0x2c] sm:$0xf]
        %v499 = vld [vmem:[%s4 + $0x30] sm:$0xf]
        %v500 = vld [vmem:[%s4 + $0x34] sm:$0xf]
        %v501 = vld [vmem:[%s4 + $0x38] sm:$0xf]
        %v502 = vld [vmem:[%s4 + $0x3c] sm:$0xf]
        %v504 = vrot.slane %v470, 4
        %v522 = vunpack.c.l.b16 %v487
        %v523 = vunpack.c.l.b16 %v488
        %v524 = vunpack.c.l.b16 %v489
        %v525 = vunpack.c.l.b16 %v490
        %v526 = vunpack.c.l.b16 %v491
        %v527 = vunpack.c.l.b16 %v492
        %v528 = vunpack.c.l.b16 %v493
        %v529 = vunpack.c.l.b16 %v494
        %v530 = vunpack.c.l.b16 %v495
        %v531 = vunpack.c.l.b16 %v496
        %v532 = vunpack.c.l.b16 %v497
        %v533 = vunpack.c.l.b16 %v498
        %v534 = vunpack.c.l.b16 %v499
        %v535 = vunpack.c.l.b16 %v500
        %v536 = vunpack.c.l.b16 %v501
        %v537 = vunpack.c.l.b16 %v502
        %v538 = vpack.c.b16 %v523, %v522
        %v539 = vpack.c.b16 %v525, %v524
        %v540 = vpack.c.b16 %v527, %v526
        %v541 = vpack.c.b16 %v529, %v528
        %v542 = vpack.c.b16 %v531, %v530
        %v543 = vpack.c.b16 %v533, %v532
        %v544 = vpack.c.b16 %v535, %v534
        %v545 = vpack.c.b16 %v537, %v536
        %554 = vmatprep.subr.bf16.mxu0 0
        %555 = vmatpush1.bf16.msra.mxu0 %v538
        %556 = vmatprep.subr.bf16.mxu0 0
        %557 = vmatpush1.bf16.msra.mxu0 %v539
        %558 = vmatprep.subr.bf16.mxu0 0
        %559 = vmatpush1.bf16.msra.mxu0 %v540
        %560 = vmatprep.subr.bf16.mxu0 0
        %561 = vmatpush1.bf16.msra.mxu0 %v541
        %562 = vmatprep.subr.bf16.mxu0 0
        %563 = vmatpush1.bf16.msra.mxu0 %v542
        %564 = vmatprep.subr.bf16.mxu0 0
        %565 = vmatpush1.bf16.msra.mxu0 %v543
        %566 = vmatprep.subr.bf16.mxu0 0
        %567 = vmatpush1.bf16.msra.mxu0 %v544
        %568 = vmatprep.subr.bf16.mxu0 0
        %569 = vmatpush1.bf16.msra.mxu0 %v545
        %570 = vmatprep.subr.bf16.mxu0 0
        %571 = vmatpush1.bf16.msra.mxu0 0
        %572 = vmatprep.subr.bf16.mxu0 0
        %573 = vmatpush1.bf16.msra.mxu0 0
        %574 = vmatprep.subr.bf16.mxu0 0
        %575 = vmatpush1.bf16.msra.mxu0 0
        %576 = vmatprep.subr.bf16.mxu0 0
        %577 = vmatpush1.bf16.msra.mxu0 0
        %578 = vmatprep.subr.bf16.mxu0 0
        %579 = vmatpush1.bf16.msra.mxu0 0
        %580 = vmatprep.subr.bf16.mxu0 0
        %581 = vmatpush1.bf16.msra.mxu0 0
        %582 = vmatprep.subr.bf16.mxu0 0
        %583 = vmatpush1.bf16.msra.mxu0 0
        %584 = vmatprep.subr.bf16.mxu0 0
        %585 = vmatpush1.bf16.msra.mxu0 0
        %586 = vmatprep.mubr.bf16.mxu0 0
        %587 = vmatmul.mubr.bf16.gmra.mrb[0].mxu0 %v504
        %v588 = vpop.f32.mrb[0].mxu0
        %v589 = vadd.f32 0.0, %v588
        %v590 = vpop.f32.mrb[0].mxu0
        %v591 = vpop.f32.mrb[0].mxu0
        %v592 = vpop.f32.mrb[0].mxu0
        %593 = vdwg.mxu0
        %v594 = vmul.f32 %v468, %v589
        %v611 = vunpack.c.l.b16 %v471
        %v612 = vunpack.c.l.b16 %v472
        %v613 = vunpack.c.l.b16 %v473
        %v614 = vunpack.c.l.b16 %v474
        %v615 = vunpack.c.l.b16 %v475
        %v616 = vunpack.c.l.b16 %v476
        %v617 = vunpack.c.l.b16 %v477
        %v618 = vunpack.c.l.b16 %v478
        %v619 = vunpack.c.l.b16 %v479
        %v620 = vunpack.c.l.b16 %v480
        %v621 = vunpack.c.l.b16 %v481
        %v622 = vunpack.c.l.b16 %v482
        %v623 = vunpack.c.l.b16 %v483
        %v624 = vunpack.c.l.b16 %v484
        %v625 = vunpack.c.l.b16 %v485
        %v626 = vunpack.c.l.b16 %v486
        %v627 = vpack.c.b16 %v612, %v611
        %v628 = vpack.c.b16 %v614, %v613
        %v629 = vpack.c.b16 %v616, %v615
        %v630 = vpack.c.b16 %v618, %v617
        %v631 = vpack.c.b16 %v620, %v619
        %v632 = vpack.c.b16 %v622, %v621
        %v633 = vpack.c.b16 %v624, %v623
        %v634 = vpack.c.b16 %v626, %v625
        %643 = vmatprep.subr.bf16.mxu0 0
        %644 = vmatpush1.bf16.msra.mxu0 %v627
        %645 = vmatprep.subr.bf16.mxu0 0
        %646 = vmatpush1.bf16.msra.mxu0 %v628
        %647 = vmatprep.subr.bf16.mxu0 0
        %648 = vmatpush1.bf16.msra.mxu0 %v629
        %649 = vmatprep.subr.bf16.mxu0 0
        %650 = vmatpush1.bf16.msra.mxu0 %v630
        %651 = vmatprep.subr.bf16.mxu0 0
        %652 = vmatpush1.bf16.msra.mxu0 %v631
        %653 = vmatprep.subr.bf16.mxu0 0
        %654 = vmatpush1.bf16.msra.mxu0 %v632
        %655 = vmatprep.subr.bf16.mxu0 0
        %656 = vmatpush1.bf16.msra.mxu0 %v633
        %657 = vmatprep.subr.bf16.mxu0 0
        %658 = vmatpush1.bf16.msra.mxu0 %v634
        %659 = vmatprep.subr.bf16.mxu0 0
        %660 = vmatpush1.bf16.msra.mxu0 0
        %661 = vmatprep.subr.bf16.mxu0 0
        %662 = vmatpush1.bf16.msra.mxu0 0
        %663 = vmatprep.subr.bf16.mxu0 0
        %664 = vmatpush1.bf16.msra.mxu0 0
        %665 = vmatprep.subr.bf16.mxu0 0
        %666 = vmatpush1.bf16.msra.mxu0 0
        %667 = vmatprep.subr.bf16.mxu0 0
        %668 = vmatpush1.bf16.msra.mxu0 0
        %669 = vmatprep.subr.bf16.mxu0 0
        %670 = vmatpush1.bf16.msra.mxu0 0
        %671 = vmatprep.subr.bf16.mxu0 0
        %672 = vmatpush1.bf16.msra.mxu0 0
        %673 = vmatprep.subr.bf16.mxu0 0
        %674 = vmatpush1.bf16.msra.mxu0 0
        %675 = vmatprep.mubr.bf16.mxu0 0
        %676 = vmatmul.mubr.bf16.gmra.mrb[0].mxu0 %v470
        %v677 = vpop.f32.mrb[0].mxu0
        %v678 = vadd.f32 %v594, %v677
        %v679 = vpop.f32.mrb[0].mxu0
        %v680 = vpop.f32.mrb[0].mxu0
        %v681 = vpop.f32.mrb[0].mxu0
        %682 = vdwg.mxu0
        %s683 = scalar_lea.vmem %s3, 64
        %v684 = vld [vmem:[%s683] sm:$0xf]
        %v685 = vld [vmem:[%s683 + $0x4] sm:$0xf]
        %v686 = vld [vmem:[%s683 + $0x8] sm:$0xf]
        %v687 = vld [vmem:[%s683 + $0xc] sm:$0xf]
        %v688 = vld [vmem:[%s683 + $0x10] sm:$0xf]
        %v689 = vld [vmem:[%s683 + $0x14] sm:$0xf]
        %v690 = vld [vmem:[%s683 + $0x18] sm:$0xf]
        %v691 = vld [vmem:[%s683 + $0x1c] sm:$0xf]
        %v692 = vld [vmem:[%s683 + $0x20] sm:$0xf]
        %v693 = vld [vmem:[%s683 + $0x24] sm:$0xf]
        %v694 = vld [vmem:[%s683 + $0x28] sm:$0xf]
        %v695 = vld [vmem:[%s683 + $0x2c] sm:$0xf]
        %v696 = vld [vmem:[%s683 + $0x30] sm:$0xf]
        %v697 = vld [vmem:[%s683 + $0x34] sm:$0xf]
        %v698 = vld [vmem:[%s683 + $0x38] sm:$0xf]
        %v699 = vld [vmem:[%s683 + $0x3c] sm:$0xf]
        %s700 = scalar_lea.vmem %s4, 64
        %v701 = vld [vmem:[%s700] sm:$0xf]
        %v702 = vld [vmem:[%s700 + $0x4] sm:$0xf]
        %v703 = vld [vmem:[%s700 + $0x8] sm:$0xf]
        %v704 = vld [vmem:[%s700 + $0xc] sm:$0xf]
        %v705 = vld [vmem:[%s700 + $0x10] sm:$0xf]
        %v706 = vld [vmem:[%s700 + $0x14] sm:$0xf]
        %v707 = vld [vmem:[%s700 + $0x18] sm:$0xf]
        %v708 = vld [vmem:[%s700 + $0x1c] sm:$0xf]
        %v709 = vld [vmem:[%s700 + $0x20] sm:$0xf]
        %v710 = vld [vmem:[%s700 + $0x24] sm:$0xf]
        %v711 = vld [vmem:[%s700 + $0x28] sm:$0xf]
        %v712 = vld [vmem:[%s700 + $0x2c] sm:$0xf]
        %v713 = vld [vmem:[%s700 + $0x30] sm:$0xf]
        %v714 = vld [vmem:[%s700 + $0x34] sm:$0xf]
        %v715 = vld [vmem:[%s700 + $0x38] sm:$0xf]
        %v716 = vld [vmem:[%s700 + $0x3c] sm:$0xf]
        %v717 = vrot.slane %v470, 5
        %v735 = vunpack.c.l.b16 %v701
        %v736 = vunpack.c.l.b16 %v702
        %v737 = vunpack.c.l.b16 %v703
        %v738 = vunpack.c.l.b16 %v704
        %v739 = vunpack.c.l.b16 %v705
        %v740 = vunpack.c.l.b16 %v706
        %v741 = vunpack.c.l.b16 %v707
        %v742 = vunpack.c.l.b16 %v708
        %v743 = vunpack.c.l.b16 %v709
        %v744 = vunpack.c.l.b16 %v710
        %v745 = vunpack.c.l.b16 %v711
        %v746 = vunpack.c.l.b16 %v712
        %v747 = vunpack.c.l.b16 %v713
        %v748 = vunpack.c.l.b16 %v714
        %v749 = vunpack.c.l.b16 %v715
        %v750 = vunpack.c.l.b16 %v716
        %v751 = vpack.c.b16 %v736, %v735
        %v752 = vpack.c.b16 %v738, %v737
        %v753 = vpack.c.b16 %v740, %v739
        %v754 = vpack.c.b16 %v742, %v741
        %v755 = vpack.c.b16 %v744, %v743
        %v756 = vpack.c.b16 %v746, %v745
        %v757 = vpack.c.b16 %v748, %v747
        %v758 = vpack.c.b16 %v750, %v749
        %767 = vmatprep.subr.bf16.mxu0 0
        %768 = vmatpush1.bf16.msra.mxu0 %v751
        %769 = vmatprep.subr.bf16.mxu0 0
        %770 = vmatpush1.bf16.msra.mxu0 %v752
        %771 = vmatprep.subr.bf16.mxu0 0
        %772 = vmatpush1.bf16.msra.mxu0 %v753
        %773 = vmatprep.subr.bf16.mxu0 0
        %774 = vmatpush1.bf16.msra.mxu0 %v754
        %775 = vmatprep.subr.bf16.mxu0 0
        %776 = vmatpush1.bf16.msra.mxu0 %v755
        %777 = vmatprep.subr.bf16.mxu0 0
        %778 = vmatpush1.bf16.msra.mxu0 %v756
        %779 = vmatprep.subr.bf16.mxu0 0
        %780 = vmatpush1.bf16.msra.mxu0 %v757
        %781 = vmatprep.subr.bf16.mxu0 0
        %782 = vmatpush1.bf16.msra.mxu0 %v758
        %783 = vmatprep.subr.bf16.mxu0 0
        %784 = vmatpush1.bf16.msra.mxu0 0
        %785 = vmatprep.subr.bf16.mxu0 0
        %786 = vmatpush1.bf16.msra.mxu0 0
        %787 = vmatprep.subr.bf16.mxu0 0
        %788 = vmatpush1.bf16.msra.mxu0 0
        %789 = vmatprep.subr.bf16.mxu0 0
        %790 = vmatpush1.bf16.msra.mxu0 0
        %791 = vmatprep.subr.bf16.mxu0 0
        %792 = vmatpush1.bf16.msra.mxu0 0
        %793 = vmatprep.subr.bf16.mxu0 0
        %794 = vmatpush1.bf16.msra.mxu0 0
        %795 = vmatprep.subr.bf16.mxu0 0
        %796 = vmatpush1.bf16.msra.mxu0 0
        %797 = vmatprep.subr.bf16.mxu0 0
        %798 = vmatpush1.bf16.msra.mxu0 0
        %799 = vmatprep.mubr.bf16.mxu0 0
        %800 = vmatmul.mubr.bf16.gmra.mrb[0].mxu0 %v717
        %v801 = vpop.f32.mrb[0].mxu0
        %v802 = vadd.f32 0.0, %v801
        %v803 = vpop.f32.mrb[0].mxu0
        %v804 = vpop.f32.mrb[0].mxu0
        %v805 = vpop.f32.mrb[0].mxu0
        %806 = vdwg.mxu0
        %v808 = vrot.slane %v802, 6
        %v810 = vmul.f32 %v468, %v808
        %v811 = vrot.slane %v470, 1
        %v829 = vunpack.c.l.b16 %v684
        %v830 = vunpack.c.l.b16 %v685
        %v831 = vunpack.c.l.b16 %v686
        %v832 = vunpack.c.l.b16 %v687
        %v833 = vunpack.c.l.b16 %v688
        %v834 = vunpack.c.l.b16 %v689
        %v835 = vunpack.c.l.b16 %v690
        %v836 = vunpack.c.l.b16 %v691
        %v837 = vunpack.c.l.b16 %v692
        %v838 = vunpack.c.l.b16 %v693
        %v839 = vunpack.c.l.b16 %v694
        %v840 = vunpack.c.l.b16 %v695
        %v841 = vunpack.c.l.b16 %v696
        %v842 = vunpack.c.l.b16 %v697
        %v843 = vunpack.c.l.b16 %v698
        %v844 = vunpack.c.l.b16 %v699
        %v845 = vpack.c.b16 %v830, %v829
        %v846 = vpack.c.b16 %v832, %v831
        %v847 = vpack.c.b16 %v834, %v833
        %v848 = vpack.c.b16 %v836, %v835
        %v849 = vpack.c.b16 %v838, %v837
        %v850 = vpack.c.b16 %v840, %v839
        %v851 = vpack.c.b16 %v842, %v841
        %v852 = vpack.c.b16 %v844, %v843
        %v862 = vrot.slane %v810, 2
        %864 = vmatprep.subr.bf16.mxu0 0
        %865 = vmatpush1.bf16.msra.mxu0 %v845
        %866 = vmatprep.subr.bf16.mxu0 0
        %867 = vmatpush1.bf16.msra.mxu0 %v846
        %868 = vmatprep.subr.bf16.mxu0 0
        %869 = vmatpush1.bf16.msra.mxu0 %v847
        %870 = vmatprep.subr.bf16.mxu0 0
        %871 = vmatpush1.bf16.msra.mxu0 %v848
        %872 = vmatprep.subr.bf16.mxu0 0
        %873 = vmatpush1.bf16.msra.mxu0 %v849
        %874 = vmatprep.subr.bf16.mxu0 0
        %875 = vmatpush1.bf16.msra.mxu0 %v850
        %876 = vmatprep.subr.bf16.mxu0 0
        %877 = vmatpush1.bf16.msra.mxu0 %v851
        %878 = vmatprep.subr.bf16.mxu0 0
        %879 = vmatpush1.bf16.msra.mxu0 %v852
        %880 = vmatprep.subr.bf16.mxu0 0
        %881 = vmatpush1.bf16.msra.mxu0 0
        %882 = vmatprep.subr.bf16.mxu0 0
        %883 = vmatpush1.bf16.msra.mxu0 0
        %884 = vmatprep.subr.bf16.mxu0 0
        %885 = vmatpush1.bf16.msra.mxu0 0
        %886 = vmatprep.subr.bf16.mxu0 0
        %887 = vmatpush1.bf16.msra.mxu0 0
        %888 = vmatprep.subr.bf16.mxu0 0
        %889 = vmatpush1.bf16.msra.mxu0 0
        %890 = vmatprep.subr.bf16.mxu0 0
        %891 = vmatpush1.bf16.msra.mxu0 0
        %892 = vmatprep.subr.bf16.mxu0 0
        %893 = vmatpush1.bf16.msra.mxu0 0
        %894 = vmatprep.subr.bf16.mxu0 0
        %895 = vmatpush1.bf16.msra.mxu0 0
        %896 = vmatprep.mubr.bf16.mxu0 0
        %897 = vmatmul.mubr.bf16.gmra.mrb[0].mxu0 %v811
        %v898 = vpop.f32.mrb[0].mxu0
        %v899 = vadd.f32 %v862, %v898
        %v900 = vpop.f32.mrb[0].mxu0
        %v901 = vpop.f32.mrb[0].mxu0
        %v902 = vpop.f32.mrb[0].mxu0
        %903 = vdwg.mxu0
        %s904 = scalar_lea.vmem %s3, 128
        %v905 = vld [vmem:[%s904] sm:$0xf]
        %v906 = vld [vmem:[%s904 + $0x4] sm:$0xf]
        %v907 = vld [vmem:[%s904 + $0x8] sm:$0xf]
        %v908 = vld [vmem:[%s904 + $0xc] sm:$0xf]
        %v909 = vld [vmem:[%s904 + $0x10] sm:$0xf]
        %v910 = vld [vmem:[%s904 + $0x14] sm:$0xf]
        %v911 = vld [vmem:[%s904 + $0x18] sm:$0xf]
        %v912 = vld [vmem:[%s904 + $0x1c] sm:$0xf]
        %v913 = vld [vmem:[%s904 + $0x20] sm:$0xf]
        %v914 = vld [vmem:[%s904 + $0x24] sm:$0xf]
        %v915 = vld [vmem:[%s904 + $0x28] sm:$0xf]
        %v916 = vld [vmem:[%s904 + $0x2c] sm:$0xf]
        %v917 = vld [vmem:[%s904 + $0x30] sm:$0xf]
        %v918 = vld [vmem:[%s904 + $0x34] sm:$0xf]
        %v919 = vld [vmem:[%s904 + $0x38] sm:$0xf]
        %v920 = vld [vmem:[%s904 + $0x3c] sm:$0xf]
        %s921 = scalar_lea.vmem %s4, 128
        %v922 = vld [vmem:[%s921] sm:$0xf]
        %v923 = vld [vmem:[%s921 + $0x4] sm:$0xf]
        %v924 = vld [vmem:[%s921 + $0x8] sm:$0xf]
        %v925 = vld [vmem:[%s921 + $0xc] sm:$0xf]
        %v926 = vld [vmem:[%s921 + $0x10] sm:$0xf]
        %v927 = vld [vmem:[%s921 + $0x14] sm:$0xf]
        %v928 = vld [vmem:[%s921 + $0x18] sm:$0xf]
        %v929 = vld [vmem:[%s921 + $0x1c] sm:$0xf]
        %v930 = vld [vmem:[%s921 + $0x20] sm:$0xf]
        %v931 = vld [vmem:[%s921 + $0x24] sm:$0xf]
        %v932 = vld [vmem:[%s921 + $0x28] sm:$0xf]
        %v933 = vld [vmem:[%s921 + $0x2c] sm:$0xf]
        %v934 = vld [vmem:[%s921 + $0x30] sm:$0xf]
        %v935 = vld [vmem:[%s921 + $0x34] sm:$0xf]
        %v936 = vld [vmem:[%s921 + $0x38] sm:$0xf]
        %v937 = vld [vmem:[%s921 + $0x3c] sm:$0xf]
        %v938 = vrot.slane %v470, 6
        %v956 = vunpack.c.l.b16 %v922
        %v957 = vunpack.c.l.b16 %v923
        %v958 = vunpack.c.l.b16 %v924
        %v959 = vunpack.c.l.b16 %v925
        %v960 = vunpack.c.l.b16 %v926
        %v961 = vunpack.c.l.b16 %v927
        %v962 = vunpack.c.l.b16 %v928
        %v963 = vunpack.c.l.b16 %v929
        %v964 = vunpack.c.l.b16 %v930
        %v965 = vunpack.c.l.b16 %v931
        %v966 = vunpack.c.l.b16 %v932
        %v967 = vunpack.c.l.b16 %v933
        %v968 = vunpack.c.l.b16 %v934
        %v969 = vunpack.c.l.b16 %v935
        %v970 = vunpack.c.l.b16 %v936
        %v971 = vunpack.c.l.b16 %v937
        %v972 = vpack.c.b16 %v957, %v956
        %v973 = vpack.c.b16 %v959, %v958
        %v974 = vpack.c.b16 %v961, %v960
        %v975 = vpack.c.b16 %v963, %v962
        %v976 = vpack.c.b16 %v965, %v964
        %v977 = vpack.c.b16 %v967, %v966
        %v978 = vpack.c.b16 %v969, %v968
        %v979 = vpack.c.b16 %v971, %v970
        %988 = vmatprep.subr.bf16.mxu0 0
        %989 = vmatpush1.bf16.msra.mxu0 %v972
        %990 = vmatprep.subr.bf16.mxu0 0
        %991 = vmatpush1.bf16.msra.mxu0 %v973
        %992 = vmatprep.subr.bf16.mxu0 0
        %993 = vmatpush1.bf16.msra.mxu0 %v974
        %994 = vmatprep.subr.bf16.mxu0 0
        %995 = vmatpush1.bf16.msra.mxu0 %v975
        %996 = vmatprep.subr.bf16.mxu0 0
        %997 = vmatpush1.bf16.msra.mxu0 %v976
        %998 = vmatprep.subr.bf16.mxu0 0
        %999 = vmatpush1.bf16.msra.mxu0 %v977
        %1000 = vmatprep.subr.bf16.mxu0 0
        %1001 = vmatpush1.bf16.msra.mxu0 %v978
        %1002 = vmatprep.subr.bf16.mxu0 0
        %1003 = vmatpush1.bf16.msra.mxu0 %v979
        %1004 = vmatprep.subr.bf16.mxu0 0
        %1005 = vmatpush1.bf16.msra.mxu0 0
        %1006 = vmatprep.subr.bf16.mxu0 0
        %1007 = vmatpush1.bf16.msra.mxu0 0
        %1008 = vmatprep.subr.bf16.mxu0 0
        %1009 = vmatpush1.bf16.msra.mxu0 0
        %1010 = vmatprep.subr.bf16.mxu0 0
        %1011 = vmatpush1.bf16.msra.mxu0 0
        %1012 = vmatprep.subr.bf16.mxu0 0
        %1013 = vmatpush1.bf16.msra.mxu0 0
        %1014 = vmatprep.subr.bf16.mxu0 0
        %1015 = vmatpush1.bf16.msra.mxu0 0
        %1016 = vmatprep.subr.bf16.mxu0 0
        %1017 = vmatpush1.bf16.msra.mxu0 0
        %1018 = vmatprep.subr.bf16.mxu0 0
        %1019 = vmatpush1.bf16.msra.mxu0 0
        %1020 = vmatprep.mubr.bf16.mxu0 0
        %1021 = vmatmul.mubr.bf16.gmra.mrb[0].mxu0 %v938
        %v1022 = vpop.f32.mrb[0].mxu0
        %v1023 = vadd.f32 0.0, %v1022
        %v1024 = vpop.f32.mrb[0].mxu0
        %v1025 = vpop.f32.mrb[0].mxu0
        %v1026 = vpop.f32.mrb[0].mxu0
        %1027 = vdwg.mxu0
        %v1029 = vrot.slane %v1023, 4
        %v1031 = vmul.f32 %v468, %v1029
        %v1032 = vrot.slane %v470, 2
        %v1050 = vunpack.c.l.b16 %v905
        %v1051 = vunpack.c.l.b16 %v906
        %v1052 = vunpack.c.l.b16 %v907
        %v1053 = vunpack.c.l.b16 %v908
        %v1054 = vunpack.c.l.b16 %v909
        %v1055 = vunpack.c.l.b16 %v910
        %v1056 = vunpack.c.l.b16 %v911
        %v1057 = vunpack.c.l.b16 %v912
        %v1058 = vunpack.c.l.b16 %v913
        %v1059 = vunpack.c.l.b16 %v914
        %v1060 = vunpack.c.l.b16 %v915
        %v1061 = vunpack.c.l.b16 %v916
        %v1062 = vunpack.c.l.b16 %v917
        %v1063 = vunpack.c.l.b16 %v918
        %v1064 = vunpack.c.l.b16 %v919
        %v1065 = vunpack.c.l.b16 %v920
        %v1066 = vpack.c.b16 %v1051, %v1050
        %v1067 = vpack.c.b16 %v1053, %v1052
        %v1068 = vpack.c.b16 %v1055, %v1054
        %v1069 = vpack.c.b16 %v1057, %v1056
        %v1070 = vpack.c.b16 %v1059, %v1058
        %v1071 = vpack.c.b16 %v1061, %v1060
        %v1072 = vpack.c.b16 %v1063, %v1062
        %v1073 = vpack.c.b16 %v1065, %v1064
        %v1083 = vrot.slane %v1031, 4
        %1085 = vmatprep.subr.bf16.mxu0 0
        %1086 = vmatpush1.bf16.msra.mxu0 %v1066
        %1087 = vmatprep.subr.bf16.mxu0 0
        %1088 = vmatpush1.bf16.msra.mxu0 %v1067
        %1089 = vmatprep.subr.bf16.mxu0 0
        %1090 = vmatpush1.bf16.msra.mxu0 %v1068
        %1091 = vmatprep.subr.bf16.mxu0 0
        %1092 = vmatpush1.bf16.msra.mxu0 %v1069
        %1093 = vmatprep.subr.bf16.mxu0 0
        %1094 = vmatpush1.bf16.msra.mxu0 %v1070
        %1095 = vmatprep.subr.bf16.mxu0 0
        %1096 = vmatpush1.bf16.msra.mxu0 %v1071
        %1097 = vmatprep.subr.bf16.mxu0 0
        %1098 = vmatpush1.bf16.msra.mxu0 %v1072
        %1099 = vmatprep.subr.bf16.mxu0 0
        %1100 = vmatpush1.bf16.msra.mxu0 %v1073
        %1101 = vmatprep.subr.bf16.mxu0 0
        %1102 = vmatpush1.bf16.msra.mxu0 0
        %1103 = vmatprep.subr.bf16.mxu0 0
        %1104 = vmatpush1.bf16.msra.mxu0 0
        %1105 = vmatprep.subr.bf16.mxu0 0
        %1106 = vmatpush1.bf16.msra.mxu0 0
        %1107 = vmatprep.subr.bf16.mxu0 0
        %1108 = vmatpush1.bf16.msra.mxu0 0
        %1109 = vmatprep.subr.bf16.mxu0 0
        %1110 = vmatpush1.bf16.msra.mxu0 0
        %1111 = vmatprep.subr.bf16.mxu0 0
        %1112 = vmatpush1.bf16.msra.mxu0 0
        %1113 = vmatprep.subr.bf16.mxu0 0
        %1114 = vmatpush1.bf16.msra.mxu0 0
        %1115 = vmatprep.subr.bf16.mxu0 0
        %1116 = vmatpush1.bf16.msra.mxu0 0
        %1117 = vmatprep.mubr.bf16.mxu0 0
        %1118 = vmatmul.mubr.bf16.gmra.mrb[0].mxu0 %v1032
        %v1119 = vpop.f32.mrb[0].mxu0
        %v1120 = vadd.f32 %v1083, %v1119
        %v1121 = vpop.f32.mrb[0].mxu0
        %v1122 = vpop.f32.mrb[0].mxu0
        %v1123 = vpop.f32.mrb[0].mxu0
        %1124 = vdwg.mxu0
        %s1125 = scalar_lea.vmem %s3, 192
        %v1126 = vld [vmem:[%s1125] sm:$0xf]
        %v1127 = vld [vmem:[%s1125 + $0x4] sm:$0xf]
        %v1128 = vld [vmem:[%s1125 + $0x8] sm:$0xf]
        %v1129 = vld [vmem:[%s1125 + $0xc] sm:$0xf]
        %v1130 = vld [vmem:[%s1125 + $0x10] sm:$0xf]
        %v1131 = vld [vmem:[%s1125 + $0x14] sm:$0xf]
        %v1132 = vld [vmem:[%s1125 + $0x18] sm:$0xf]
        %v1133 = vld [vmem:[%s1125 + $0x1c] sm:$0xf]
        %v1134 = vld [vmem:[%s1125 + $0x20] sm:$0xf]
        %v1135 = vld [vmem:[%s1125 + $0x24] sm:$0xf]
        %v1136 = vld [vmem:[%s1125 + $0x28] sm:$0xf]
        %v1137 = vld [vmem:[%s1125 + $0x2c] sm:$0xf]
        %v1138 = vld [vmem:[%s1125 + $0x30] sm:$0xf]
        %v1139 = vld [vmem:[%s1125 + $0x34] sm:$0xf]
        %v1140 = vld [vmem:[%s1125 + $0x38] sm:$0xf]
        %v1141 = vld [vmem:[%s1125 + $0x3c] sm:$0xf]
        %s1142 = scalar_lea.vmem %s4, 192
        %v1143 = vld [vmem:[%s1142] sm:$0xf]
        %v1144 = vld [vmem:[%s1142 + $0x4] sm:$0xf]
        %v1145 = vld [vmem:[%s1142 + $0x8] sm:$0xf]
        %v1146 = vld [vmem:[%s1142 + $0xc] sm:$0xf]
        %v1147 = vld [vmem:[%s1142 + $0x10] sm:$0xf]
        %v1148 = vld [vmem:[%s1142 + $0x14] sm:$0xf]
        %v1149 = vld [vmem:[%s1142 + $0x18] sm:$0xf]
        %v1150 = vld [vmem:[%s1142 + $0x1c] sm:$0xf]
        %v1151 = vld [vmem:[%s1142 + $0x20] sm:$0xf]
        %v1152 = vld [vmem:[%s1142 + $0x24] sm:$0xf]
        %v1153 = vld [vmem:[%s1142 + $0x28] sm:$0xf]
        %v1154 = vld [vmem:[%s1142 + $0x2c] sm:$0xf]
        %v1155 = vld [vmem:[%s1142 + $0x30] sm:$0xf]
        %v1156 = vld [vmem:[%s1142 + $0x34] sm:$0xf]
        %v1157 = vld [vmem:[%s1142 + $0x38] sm:$0xf]
        %v1158 = vld [vmem:[%s1142 + $0x3c] sm:$0xf]
        %v1159 = vrot.slane %v470, 7
        %v1177 = vunpack.c.l.b16 %v1143
        %v1178 = vunpack.c.l.b16 %v1144
        %v1179 = vunpack.c.l.b16 %v1145
        %v1180 = vunpack.c.l.b16 %v1146
        %v1181 = vunpack.c.l.b16 %v1147
        %v1182 = vunpack.c.l.b16 %v1148
        %v1183 = vunpack.c.l.b16 %v1149
        %v1184 = vunpack.c.l.b16 %v1150
        %v1185 = vunpack.c.l.b16 %v1151
        %v1186 = vunpack.c.l.b16 %v1152
        %v1187 = vunpack.c.l.b16 %v1153
        %v1188 = vunpack.c.l.b16 %v1154
        %v1189 = vunpack.c.l.b16 %v1155
        %v1190 = vunpack.c.l.b16 %v1156
        %v1191 = vunpack.c.l.b16 %v1157
        %v1192 = vunpack.c.l.b16 %v1158
        %v1193 = vpack.c.b16 %v1178, %v1177
        %v1194 = vpack.c.b16 %v1180, %v1179
        %v1195 = vpack.c.b16 %v1182, %v1181
        %v1196 = vpack.c.b16 %v1184, %v1183
        %v1197 = vpack.c.b16 %v1186, %v1185
        %v1198 = vpack.c.b16 %v1188, %v1187
        %v1199 = vpack.c.b16 %v1190, %v1189
        %v1200 = vpack.c.b16 %v1192, %v1191
        %1209 = vmatprep.subr.bf16.mxu0 0
        %1210 = vmatpush1.bf16.msra.mxu0 %v1193
        %1211 = vmatprep.subr.bf16.mxu0 0
        %1212 = vmatpush1.bf16.msra.mxu0 %v1194
        %1213 = vmatprep.subr.bf16.mxu0 0
        %1214 = vmatpush1.bf16.msra.mxu0 %v1195
        %1215 = vmatprep.subr.bf16.mxu0 0
        %1216 = vmatpush1.bf16.msra.mxu0 %v1196
        %1217 = vmatprep.subr.bf16.mxu0 0
        %1218 = vmatpush1.bf16.msra.mxu0 %v1197
        %1219 = vmatprep.subr.bf16.mxu0 0
        %1220 = vmatpush1.bf16.msra.mxu0 %v1198
        %1221 = vmatprep.subr.bf16.mxu0 0
        %1222 = vmatpush1.bf16.msra.mxu0 %v1199
        %1223 = vmatprep.subr.bf16.mxu0 0
        %1224 = vmatpush1.bf16.msra.mxu0 %v1200
        %1225 = vmatprep.subr.bf16.mxu0 0
        %1226 = vmatpush1.bf16.msra.mxu0 0
        %1227 = vmatprep.subr.bf16.mxu0 0
        %1228 = vmatpush1.bf16.msra.mxu0 0
        %1229 = vmatprep.subr.bf16.mxu0 0
        %1230 = vmatpush1.bf16.msra.mxu0 0
        %1231 = vmatprep.subr.bf16.mxu0 0
        %1232 = vmatpush1.bf16.msra.mxu0 0
        %1233 = vmatprep.subr.bf16.mxu0 0
        %1234 = vmatpush1.bf16.msra.mxu0 0
        %1235 = vmatprep.subr.bf16.mxu0 0
        %1236 = vmatpush1.bf16.msra.mxu0 0
        %1237 = vmatprep.subr.bf16.mxu0 0
        %1238 = vmatpush1.bf16.msra.mxu0 0
        %1239 = vmatprep.subr.bf16.mxu0 0
        %1240 = vmatpush1.bf16.msra.mxu0 0
        %1241 = vmatprep.mubr.bf16.mxu0 0
        %1242 = vmatmul.mubr.bf16.gmra.mrb[0].mxu0 %v1159
        %v1243 = vpop.f32.mrb[0].mxu0
        %v1244 = vadd.f32 0.0, %v1243
        %v1245 = vpop.f32.mrb[0].mxu0
        %v1246 = vpop.f32.mrb[0].mxu0
        %v1247 = vpop.f32.mrb[0].mxu0
        %1248 = vdwg.mxu0
        %v1250 = vrot.slane %v1244, 2
        %v1252 = vmul.f32 %v468, %v1250
        %v1253 = vrot.slane %v470, 3
        %v1271 = vunpack.c.l.b16 %v1126
        %v1272 = vunpack.c.l.b16 %v1127
        %v1273 = vunpack.c.l.b16 %v1128
        %v1274 = vunpack.c.l.b16 %v1129
        %v1275 = vunpack.c.l.b16 %v1130
        %v1276 = vunpack.c.l.b16 %v1131
        %v1277 = vunpack.c.l.b16 %v1132
        %v1278 = vunpack.c.l.b16 %v1133
        %v1279 = vunpack.c.l.b16 %v1134
        %v1280 = vunpack.c.l.b16 %v1135
        %v1281 = vunpack.c.l.b16 %v1136
        %v1282 = vunpack.c.l.b16 %v1137
        %v1283 = vunpack.c.l.b16 %v1138
        %v1284 = vunpack.c.l.b16 %v1139
        %v1285 = vunpack.c.l.b16 %v1140
        %v1286 = vunpack.c.l.b16 %v1141
        %v1287 = vpack.c.b16 %v1272, %v1271
        %v1288 = vpack.c.b16 %v1274, %v1273
        %v1289 = vpack.c.b16 %v1276, %v1275
        %v1290 = vpack.c.b16 %v1278, %v1277
        %v1291 = vpack.c.b16 %v1280, %v1279
        %v1292 = vpack.c.b16 %v1282, %v1281
        %v1293 = vpack.c.b16 %v1284, %v1283
        %v1294 = vpack.c.b16 %v1286, %v1285
        %v1304 = vrot.slane %v1252, 6
        %1306 = vmatprep.subr.bf16.mxu0 0
        %1307 = vmatpush1.bf16.msra.mxu0 %v1287
        %1308 = vmatprep.subr.bf16.mxu0 0
        %1309 = vmatpush1.bf16.msra.mxu0 %v1288
        %1310 = vmatprep.subr.bf16.mxu0 0
        %1311 = vmatpush1.bf16.msra.mxu0 %v1289
        %1312 = vmatprep.subr.bf16.mxu0 0
        %1313 = vmatpush1.bf16.msra.mxu0 %v1290
        %1314 = vmatprep.subr.bf16.mxu0 0
        %1315 = vmatpush1.bf16.msra.mxu0 %v1291
        %1316 = vmatprep.subr.bf16.mxu0 0
        %1317 = vmatpush1.bf16.msra.mxu0 %v1292
        %1318 = vmatprep.subr.bf16.mxu0 0
        %1319 = vmatpush1.bf16.msra.mxu0 %v1293
        %1320 = vmatprep.subr.bf16.mxu0 0
        %1321 = vmatpush1.bf16.msra.mxu0 %v1294
        %1322 = vmatprep.subr.bf16.mxu0 0
        %1323 = vmatpush1.bf16.msra.mxu0 0
        %1324 = vmatprep.subr.bf16.mxu0 0
        %1325 = vmatpush1.bf16.msra.mxu0 0
        %1326 = vmatprep.subr.bf16.mxu0 0
        %1327 = vmatpush1.bf16.msra.mxu0 0
        %1328 = vmatprep.subr.bf16.mxu0 0
        %1329 = vmatpush1.bf16.msra.mxu0 0
        %1330 = vmatprep.subr.bf16.mxu0 0
        %1331 = vmatpush1.bf16.msra.mxu0 0
        %1332 = vmatprep.subr.bf16.mxu0 0
        %1333 = vmatpush1.bf16.msra.mxu0 0
        %1334 = vmatprep.subr.bf16.mxu0 0
        %1335 = vmatpush1.bf16.msra.mxu0 0
        %1336 = vmatprep.subr.bf16.mxu0 0
        %1337 = vmatpush1.bf16.msra.mxu0 0
        %1338 = vmatprep.mubr.bf16.mxu0 0
        %1339 = vmatmul.mubr.bf16.gmra.mrb[0].mxu0 %v1253
        %v1340 = vpop.f32.mrb[0].mxu0
        %v1341 = vadd.f32 %v1304, %v1340
        %v1342 = vpop.f32.mrb[0].mxu0
        %v1343 = vpop.f32.mrb[0].mxu0
        %v1344 = vpop.f32.mrb[0].mxu0
        %1345 = vdwg.mxu0
        %v1347 = vrot.slane %v899, 6
        %v1350 = vrot.slane %v1120, 4
        %v1353 = vrot.slane %v1341, 2
        %vm1355 = vcmask 1041408
        %v1356 = vsel %vm1355, %v678, %v1347
        %v1357 = vsel %vm351, %v1356, %v1350
        %vm1358 = vcmask 1045504
        %v1359 = vsel %vm1358, %v1357, %v1353
        %v1360 = vpack.c.bf16 %v1359, %v1359
        %v1361 = vld [vmem:[%s5] sm:$0xf]
        %v1362 = vld [vmem:[%s2] sm:$0xff]
        %1364 = vset.pattern.permute.xlu0 3
        %1365 = vperm.xlu0 %1364, %v1362
        %v1366 = vpop.permute.xlu0 %1365
        %v1369 = vsel %vm347, %v1361, 0
        %v1372 = vsel %vm351, %v1360, 0
        %1374 = vmatprep.subr.bf16.mxu0 0
        %1375 = vmatpush1.bf16.msra.mxu0 %v1372
        %1376 = vmatprep.subr.bf16.mxu0 0
        %1377 = vmatpush1.bf16.msra.mxu0 0
        %1378 = vmatprep.subr.bf16.mxu0 0
        %1379 = vmatpush1.bf16.msra.mxu0 0
        %1380 = vmatprep.subr.bf16.mxu0 0
        %1381 = vmatpush1.bf16.msra.mxu0 0
        %1382 = vmatprep.subr.bf16.mxu0 0
        %1383 = vmatpush1.bf16.msra.mxu0 0
        %1384 = vmatprep.subr.bf16.mxu0 0
        %1385 = vmatpush1.bf16.msra.mxu0 0
        %1386 = vmatprep.subr.bf16.mxu0 0
        %1387 = vmatpush1.bf16.msra.mxu0 0
        %1388 = vmatprep.subr.bf16.mxu0 0
        %1389 = vmatpush1.bf16.msra.mxu0 0
        %1390 = vmatprep.subr.bf16.mxu0 0
        %1391 = vmatpush1.bf16.msra.mxu0 0
        %1392 = vmatprep.subr.bf16.mxu0 0
        %1393 = vmatpush1.bf16.msra.mxu0 0
        %1394 = vmatprep.subr.bf16.mxu0 0
        %1395 = vmatpush1.bf16.msra.mxu0 0
        %1396 = vmatprep.subr.bf16.mxu0 0
        %1397 = vmatpush1.bf16.msra.mxu0 0
        %1398 = vmatprep.subr.bf16.mxu0 0
        %1399 = vmatpush1.bf16.msra.mxu0 0
        %1400 = vmatprep.subr.bf16.mxu0 0
        %1401 = vmatpush1.bf16.msra.mxu0 0
        %1402 = vmatprep.subr.bf16.mxu0 0
        %1403 = vmatpush1.bf16.msra.mxu0 0
        %1404 = vmatprep.subr.bf16.mxu0 0
        %1405 = vmatpush1.bf16.msra.mxu0 0
        %1406 = vmatprep.mubr.bf16.mxu0 0
        %1407 = vmatmul.mubr.bf16.gmra.mrb[0].mxu0 %v1369
        %v1408 = vpop.f32.mrb[0].mxu0
        %v1409 = vadd.f32 %v1366, %v1408
        %v1410 = vpop.f32.mrb[0].mxu0
        %v1411 = vpop.f32.mrb[0].mxu0
        %v1412 = vpop.f32.mrb[0].mxu0
        %1413 = vdwg.mxu0
        %v1414 = vadd.f32 %v1409, %v326
        %v1415 = vmax.f32 %v1414, 0.0
        %v1416 = vld [vmem:[%s6] sm:$0xf]
        %v1417 = vld [vmem:[%s6 + $0x4] sm:$0xf]
        %v1418 = vpack.c.bf16 %v1415, %v1415
        %v1419 = vld [vmem:[%s7] sm:$0xff]
        %v1420 = vld [vmem:[%s7 + $0x8] sm:$0xff]
        %1422 = vset.pattern.permute.xlu0 0
        %1423 = vperm.xlu0 %1422, %v1419
        %v1424 = vpop.permute.xlu0 %1423
        %1427 = vset.pattern.permute.xlu0 0
        %1428 = vperm.xlu0 %1427, %v1420
        %v1429 = vpop.permute.xlu0 %1428
        %v1433 = vunpack.c.l.b16 %v1416
        %v1434 = vunpack.c.l.b16 %v1417
        %v1435 = vpack.c.b16 %v1434, %v1433
        %v1437 = vsel %vm347, %v1435, 0
        %v1440 = vsel %vm351, %v1418, 0
        %1442 = vmatprep.subr.bf16.mxu0 0
        %1443 = vmatpush1.bf16.msra.mxu0 %v1440
        %1444 = vmatprep.subr.bf16.mxu0 0
        %1445 = vmatpush1.bf16.msra.mxu0 0
        %1446 = vmatprep.subr.bf16.mxu0 0
        %1447 = vmatpush1.bf16.msra.mxu0 0
        %1448 = vmatprep.subr.bf16.mxu0 0
        %1449 = vmatpush1.bf16.msra.mxu0 0
        %1450 = vmatprep.subr.bf16.mxu0 0
        %1451 = vmatpush1.bf16.msra.mxu0 0
        %1452 = vmatprep.subr.bf16.mxu0 0
        %1453 = vmatpush1.bf16.msra.mxu0 0
        %1454 = vmatprep.subr.bf16.mxu0 0
        %1455 = vmatpush1.bf16.msra.mxu0 0
        %1456 = vmatprep.subr.bf16.mxu0 0
        %1457 = vmatpush1.bf16.msra.mxu0 0
        %1458 = vmatprep.subr.bf16.mxu0 0
        %1459 = vmatpush1.bf16.msra.mxu0 0
        %1460 = vmatprep.subr.bf16.mxu0 0
        %1461 = vmatpush1.bf16.msra.mxu0 0
        %1462 = vmatprep.subr.bf16.mxu0 0
        %1463 = vmatpush1.bf16.msra.mxu0 0
        %1464 = vmatprep.subr.bf16.mxu0 0
        %1465 = vmatpush1.bf16.msra.mxu0 0
        %1466 = vmatprep.subr.bf16.mxu0 0
        %1467 = vmatpush1.bf16.msra.mxu0 0
        %1468 = vmatprep.subr.bf16.mxu0 0
        %1469 = vmatpush1.bf16.msra.mxu0 0
        %1470 = vmatprep.subr.bf16.mxu0 0
        %1471 = vmatpush1.bf16.msra.mxu0 0
        %1472 = vmatprep.subr.bf16.mxu0 0
        %1473 = vmatpush1.bf16.msra.mxu0 0
        %1474 = vmatprep.mubr.bf16.mxu0 0
        %1475 = vmatmul.mubr.bf16.gmra.mrb[0].mxu0 %v1437
        %v1476 = vpop.f32.mrb[0].mxu0
        %v1477 = vadd.f32 %v1424, %v1476
        %v1478 = vpop.f32.mrb[0].mxu0
        %v1479 = vpop.f32.mrb[0].mxu0
        %v1480 = vadd.f32 %v1429, %v1479
        %v1481 = vpop.f32.mrb[0].mxu0
        %1482 = vdwg.mxu0
        %1483 = vset.pattern.permute.xlu0 1
        %1484 = vperm.xlu0 %1483, %v1419
        %v1485 = vpop.permute.xlu0 %1484
        %1487 = vset.pattern.permute.xlu0 1
        %1488 = vperm.xlu0 %1487, %v1420
        %v1489 = vpop.permute.xlu0 %1488
        %v1491 = vmul.f32 %v1477, %v1485
        %v1492 = vmul.f32 %v1480, %v1489
        %1493 = vset.pattern.permute.xlu0 2
        %1494 = vperm.xlu0 %1493, %v1419
        %v1495 = vpop.permute.xlu0 %1494
        %1497 = vset.pattern.permute.xlu0 2
        %1498 = vperm.xlu0 %1497, %v1420
        %v1499 = vpop.permute.xlu0 %1498
        %v1501 = vadd.f32 %v1491, %v1495
        %v1502 = vadd.f32 %v1492, %v1499
        %v1503 = vmax.f32 %v1501, 0.0
        %v1504 = vmax.f32 %v1502, 0.0
        %1505 = vset.pattern.permute.xlu0 3
        %1506 = vperm.xlu0 %1505, %v1419
        %v1507 = vpop.permute.xlu0 %1506
        %1509 = vset.pattern.permute.xlu0 3
        %1510 = vperm.xlu0 %1509, %v1420
        %v1511 = vpop.permute.xlu0 %1510
        %v1513 = vmul.f32 %v1507, %v1503
        %v1514 = vmul.f32 %v1511, %v1504
        %v1515 = vsub.f32 1.0, %v1419
        %v1516 = vsub.f32 1.0, %v1420
        %1518 = vset.pattern.permute.xlu0 3
        %1519 = vperm.xlu0 %1518, %v1515
        %v1520 = vpop.permute.xlu0 %1519
        %1523 = vset.pattern.permute.xlu0 3
        %1524 = vperm.xlu0 %1523, %v1516
        %v1525 = vpop.permute.xlu0 %1524
        %v1527 = vmul.f32 %v1520, %v1501
        %v1528 = vmul.f32 %v1525, %v1502
        %v1529 = vadd.f32 %v1513, %v1527
        %v1530 = vadd.f32 %v1514, %v1528
        %v1531 = vpack.c.bf16 %v1530, %v1529
        %v1533 = vunpack.c.l.b16 %v1531
        %v1534 = vunpack.c.h.b16 %v1531
        %v1535 = vpack.c.b16 %v1533, %v1533
        %v1536 = vpack.c.b16 %v1534, %v1534
        %1539 = vst [vmem:[%s316] sm:$0xf] %v1535
        %1540 = vst [vmem:[%s316 + $0x4] sm:$0xf] %v1536
        %s1541 = sand.u32 %s216, 1
        %s1542 = sand.u32 %s216, 1
        %s1543 = smul.addr %s1542, 8
        %s1544 = scalar_lea.vmem [#allocation2], %s1543
        // Predicated region
        $region53: #{mlp_tcn_unit_pallas.2} parent=51 // pred_check
          %p1545 = pneg %p226
        $region54: #{mlp_tcn_unit_pallas.2} parent=51 // pred_check_branch
          %1547 = sbr.rel (%p1545) target = $region56
        $region55: #{mlp_tcn_unit_pallas.2} parent=51 // pred_region
          %s1548 = smul.addr %s23, 4
          %s1549 = sadd.s32 %s24, %s1548
          %s1550 = smul.addr %s1549, 4
          %s1551 = scalar_lea.vmem %s8, %s1550
          // Predicated region
          $region57: #{mlp_tcn_unit_pallas.2} parent=55 // pred_check
            _
          $region58: #{mlp_tcn_unit_pallas.2} parent=55 // pred_check_branch
            %1553 = sbr.rel (0) target = $region60
          $region59: #{mlp_tcn_unit_pallas.2} parent=55 // pred_region
            // Predicated region
            $region61: #{mlp_tcn_unit_pallas.2} parent=59 // pred_check
              _
            $region62: #{mlp_tcn_unit_pallas.2} parent=59 // pred_check_branch
              %1555 = sbr.rel target = $region64
            $region63: #{mlp_tcn_unit_pallas.2} parent=59 // pred_region
              // Predicated region
              $region76: #{mlp_tcn_unit_pallas.2} parent=63 // pred_check
                _
              $region77: #{mlp_tcn_unit_pallas.2} parent=63 // pred_check_branch
                %1572 = sbr.rel (0) target = $region79
              $region78: #{mlp_tcn_unit_pallas.2} parent=63 // pred_region
                loop: start=0, step=1, limit=1
                $region80: #{mlp_tcn_unit_pallas.2} parent=78 // loop_pre_header
                  _
                $region81: #{mlp_tcn_unit_pallas.2} parent=78 // loop_header
                  %s1574 = sphi 0, %s1578
                  %p1575 = scmp.ge.s32.totalorder %s1574, 1
                  %s1579 = sphi %s1544, %s1544
                  %s1580 = sphi %s1551, %s1551
                $region82: #{mlp_tcn_unit_pallas.2} parent=78 // loop_header_branch
                  %1577 = sbr.rel (%p1575) target = $region86
                $region83: #{mlp_tcn_unit_pallas.2} parent=78 // loop_body
                  _
                $region84: #{mlp_tcn_unit_pallas.2} parent=78 // loop_footer
                  %s1578 = sadd.s32 1, %s1574
                $region85: #{mlp_tcn_unit_pallas.2} parent=78 // loop_footer_branch
                  %1573 = sbr.rel target = $region81
                $region86: #{mlp_tcn_unit_pallas.2} parent=78 // loop_exit
                  _
                loop: start=0, step=1, limit=1
                $region87: #{mlp_tcn_unit_pallas.2} parent=78 // loop_pre_header
                  _
                $region88: #{mlp_tcn_unit_pallas.2} parent=78 // loop_header
                  %s1583 = sphi 0, %s1587
                  %p1584 = scmp.ge.s32.totalorder %s1583, 1
                  %s1588 = sphi %s1544, %s1544
                  %s1589 = sphi %s1551, %s1551
                $region89: #{mlp_tcn_unit_pallas.2} parent=78 // loop_header_branch
                  %1586 = sbr.rel (%p1584) target = $region93
                $region90: #{mlp_tcn_unit_pallas.2} parent=78 // loop_body
                  %v1590 = vld [vmem:[%s1588] sm:$0xf]
                  %1591 = vst [vmem:[%s1589] sm:$0xf] %v1590
                  %v1592 = vld [vmem:[%s1588 + $0x4] sm:$0xf]
                  %1593 = vst [vmem:[%s1589 + $0x8] sm:$0xf] %v1592
                $region91: #{mlp_tcn_unit_pallas.2} parent=78 // loop_footer
                  %s1587 = sadd.s32 1, %s1583
                $region92: #{mlp_tcn_unit_pallas.2} parent=78 // loop_footer_branch
                  %1582 = sbr.rel target = $region88
                $region93: #{mlp_tcn_unit_pallas.2} parent=78 // loop_exit
                  _
              $region79: #{mlp_tcn_unit_pallas.2} parent=63 // pred_fallthru
                _
            $region64: #{mlp_tcn_unit_pallas.2} parent=59 // pred_fallthru
              _
            // Predicated region
            $region65: #{mlp_tcn_unit_pallas.2} parent=59 // pred_check
              _
            $region66: #{mlp_tcn_unit_pallas.2} parent=59 // pred_check_branch
              %1557 = sbr.rel (0) target = $region68
            $region67: #{mlp_tcn_unit_pallas.2} parent=59 // pred_region
              loop: start=0, step=1, limit=1
              $region69: #{mlp_tcn_unit_pallas.2} parent=67 // loop_pre_header
                _
              $region70: #{mlp_tcn_unit_pallas.2} parent=67 // loop_header
                %s1560 = sphi 0, %s1564
                %p1561 = scmp.ge.s32.totalorder %s1560, 1
                %s1565 = sphi %s1544, %s1544
                %s1566 = sphi %s1551, %s1551
              $region71: #{mlp_tcn_unit_pallas.2} parent=67 // loop_header_branch
                %1563 = sbr.rel (%p1561) target = $region75
              $region72: #{mlp_tcn_unit_pallas.2} parent=67 // loop_body
                %v1567 = vld [vmem:[%s1565] sm:$0xf]
                %1568 = vst [vmem:[%s1566] sm:$0xf] %v1567
                %v1569 = vld [vmem:[%s1565 + $0x4] sm:$0xf]
                %1570 = vst [vmem:[%s1566 + $0x8] sm:$0xf] %v1569
              $region73: #{mlp_tcn_unit_pallas.2} parent=67 // loop_footer
                %s1564 = sadd.s32 1, %s1560
              $region74: #{mlp_tcn_unit_pallas.2} parent=67 // loop_footer_branch
                %1559 = sbr.rel target = $region70
              $region75: #{mlp_tcn_unit_pallas.2} parent=67 // loop_exit
                _
            $region68: #{mlp_tcn_unit_pallas.2} parent=59 // pred_fallthru
              _
          $region60: #{mlp_tcn_unit_pallas.2} parent=55 // pred_fallthru
            _
          %1594 = vnop
        $region56: #{mlp_tcn_unit_pallas.2} parent=51 // pred_fallthru
          _
      $region52: #{mlp_tcn_unit_pallas.2} parent=5 // pred_fallthru
        _
      %p1595 = scmp.le.s32.totalorder 2, %s14
      // Predicated region
      $region94: #{mlp_tcn_unit_pallas.2} parent=5 // pred_check
        %p1596 = pneg %p1595
      $region95: #{mlp_tcn_unit_pallas.2} parent=5 // pred_check_branch
        %1598 = sbr.rel (%p1596) target = $region97
      $region96: #{mlp_tcn_unit_pallas.2} parent=5 // pred_region
        %s1599 = ssub.s32 %s14, 2
        // Predicated region
        $region98: #{mlp_tcn_unit_pallas.2} parent=96 // pred_check
          %p1600 = pneg %p232
        $region99: #{mlp_tcn_unit_pallas.2} parent=96 // pred_check_branch
          %1602 = sbr.rel (%p1600) target = $region101
        $region100: #{mlp_tcn_unit_pallas.2} parent=96 // pred_region
          %s1603 = sand.u32 %s217, 1
          %s1604 = sand.u32 %s217, 1
          %s1605 = smul.addr %s1604, 8
          %s1606 = scalar_lea.vmem [#allocation2], %s1605
        $region101: #{mlp_tcn_unit_pallas.2} parent=96 // pred_fallthru
          _
      $region97: #{mlp_tcn_unit_pallas.2} parent=5 // pred_fallthru
        _
    $region6: #{mlp_tcn_unit_pallas.2} parent=1 // loop_footer
      %s18 = sadd.s32 1, %s14
    $region7: #{mlp_tcn_unit_pallas.2} parent=1 // loop_footer_branch
      %13 = sbr.rel target = $region3
    $region8: #{mlp_tcn_unit_pallas.2} parent=1 // loop_exit
      _

</llo_original>
